<compile_context>
chip_gen: v7x
topology: tpu7x:2x2x1
jax: 0.10.0
libtpu: 0.0.40
codegen_flags: <defaults>
</compile_context>

<pallas_src>
import numpy as np
import jax
import jax.numpy as jnp
from jax.experimental import pallas as pl
from jax.experimental.pallas import tpu as pltpu
from jax.scipy.linalg import block_diag

# ----------------------------- configuration ------------------------------
NINP = 32          # ninp
NHID = 128         # nhid
NBO = 4            # num_blocks_out
NBI = 1            # num_blocks_in
BSO = NHID // NBO  # block_size_out = 32
TOPKVAL = 2        # topkval
ATT_OUT = 32       # attention_out (version 0)
DK_I = 64          # inp_att d_k
NH_C = 4           # communication MHA heads
DK_C = 32          # communication MHA d_k
DV_C = 32          # communication MHA d_v
GRU_IN = ATT_OUT * NBO   # 128, BlockGRU input size
B = 16             # batch

CH = NH_C * DK_C   # 128  per-block comm q/k/v width
CQKV = NBO * CH    # 512  all-block comm q/k/v width
NL = NH_C * NBO    # 16   (head, key-block) logits per query block
K_DROP = NBO - TOPKVAL


# ------------------------------- the kernel -------------------------------
def blocks_core_kernel(inp_ref, hx_ref, cx_ref,
                       wq_i_ref, wk_i1_ref, wv_i1_ref,
                       tile_k_ref, tile_v_ref, seg_i_ref, e32_ref,
                       cmp_rep_ref, cmp_exp_ref, wlow_ref, wup_ref, seg_rank_ref,
                       w_gru_ref, b_gru_ref,
                       w_qkv_ref, seg_logit_ref, exp_e_ref, seg_den_ref,
                       w_fcg_ref, b_fcg_ref,
                       hx_out_ref, cx_out_ref, mask_out_ref):
    f32 = jnp.float32
    dot = lambda a, b: jnp.dot(a, b, preferred_element_type=f32)

    inp = inp_ref[...]          # (TB, NINP)
    hx = hx_ref[...]            # (TB, NHID)
    cx = cx_ref[...]            # (TB, NHID)

    # -------- input attention (keys/values = [zero row, inp]) --------------
    # q: one block-diagonal matmul for all 4 GroupLinear query projections.
    q = dot(hx, wq_i_ref[...])                            # (TB, NBO*DK_I)
    k1 = dot(inp, wk_i1_ref[...])                         # (TB, DK_I)
    v1 = dot(inp, wv_i1_ref[...])                         # (TB, ATT_OUT)
    k_t = dot(k1, tile_k_ref[...])                        # (TB, NBO*DK_I)  k1 tiled per block
    v_t = dot(v1, tile_v_ref[...])                        # (TB, NHID)      v1 tiled per block
    # per-block logit vs the real input row, reduced on the MXU (segment matmul)
    logits_i = dot(q * k_t, seg_i_ref[...]) * (1.0 / (DK_I ** 0.5))   # (TB, NBO)
    # softmax over [0, l] == sigmoid(l) on the real slot (null key/value are exactly 0)
    a1 = jax.nn.sigmoid(dot(logits_i, e32_ref[...]))      # (TB, NHID)  block-expanded weights
    inp_use = a1 * v_t                                    # (TB, NHID)

    # -------- bottom-k block mask on the lane-packed logits -----------------
    # null attention a0 = sigmoid(-l) is monotone decreasing in l, so the blocks
    # with the largest null attention are those with the smallest logit.
    l_rep = dot(logits_i, cmp_rep_ref[...])               # (TB, NBO*NBO): col i*NBO+j = l_j
    l_exp = dot(logits_i, cmp_exp_ref[...])               # (TB, NBO*NBO): col i*NBO+j = l_i
    contrib = ((l_rep <= l_exp).astype(f32) * wlow_ref[...]      # ties -> smaller index wins
               + (l_rep < l_exp).astype(f32) * wup_ref[...])
    rank = dot(contrib, seg_rank_ref[...])                # (TB, NHID)  per-block rank, expanded
    mask = (rank >= float(K_DROP)).astype(f32)            # keep iff >= K_DROP blocks beat it

    # -------- BlockGRU (nn.GRUCell), one fused matmul ------------------------
    xg = jnp.concatenate([inp_use, hx], axis=-1)          # (TB, 2*NHID), 128-aligned concat
    g = dot(xg, w_gru_ref[...]) + b_gru_ref[...]          # (TB, 4*NHID): [r | z | i_n | h_n]
    r = jax.nn.sigmoid(g[:, 0:NHID])
    z = jax.nn.sigmoid(g[:, NHID:2 * NHID])
    ncand = jnp.tanh(g[:, 2 * NHID:3 * NHID] + r * g[:, 3 * NHID:4 * NHID])
    hx_gru = (1.0 - z) * ncand + z * hx
    cx_new = hx_gru                                       # do_gru=True -> cx_new = hx_new

    # -------- communication MHA over blocks (4 heads), residual -------------
    qkv = dot(hx_gru, w_qkv_ref[...])                     # (TB, 3*CQKV), block-diag Q|K|V
    qc = qkv[:, 0:CQKV]
    kc = qkv[:, CQKV:2 * CQKV]
    vc = qkv[:, 2 * CQKV:3 * CQKV]
    inv_tmp_c = 1.0 / (DK_C ** 0.5)
    out_blocks = []
    for n in range(NBO):                                  # static, unrolled
        qn = qc[:, n * CH:(n + 1) * CH]                   # 128-aligned slice
        qn_rep = jnp.concatenate([qn] * NBO, axis=-1)     # (TB, CQKV), aligned vreg copies
        # all (head, key-block) logits at once via segment-sum matmul
        ln = dot(qn_rep * kc, seg_logit_ref[...]) * inv_tmp_c   # (TB, NL) [head, key-block]
        mx = jnp.max(ln, axis=-1, keepdims=True)          # shared max (softmax-invariant)
        e = jnp.exp(ln - mx)                              # (TB, NL)
        w_e = dot(e, exp_e_ref[...])                      # (TB, CQKV) weights expanded to v lanes
        pv = w_e * vc                                     # (TB, CQKV)
        num = (pv[:, 0 * CH:1 * CH] + pv[:, 1 * CH:2 * CH]
               + pv[:, 2 * CH:3 * CH] + pv[:, 3 * CH:4 * CH])   # sum over key blocks
        den = dot(e, seg_den_ref[...])                    # (TB, CH) per-head softmax denominator
        out_blocks.append(num / den)                      # (TB, CH)  [head, d_v]
    out_all = jnp.concatenate(out_blocks, axis=-1)        # (TB, CQKV), 128-aligned pieces

    # fc and gate for all 4 blocks in one block-diagonal matmul -> lane-dense
    fcg = dot(out_all, w_fcg_ref[...]) + b_fcg_ref[...]   # (TB, 2*NHID): [fc | gate]
    att = jax.nn.sigmoid(fcg[:, NHID:2 * NHID]) * jnp.tanh(fcg[:, 0:NHID])
    hx_new = hx_gru + att

    # ------------------------------ masked update ---------------------------
    hx_out_ref[...] = mask * hx_new + (1.0 - mask) * hx
    cx_out_ref[...] = mask * cx_new + (1.0 - mask) * cx
    mask_out_ref[...] = mask


# ---------------------- structural 0/1 constant matrices --------------------
def _structural_constants():
    """Constant matrices that move segment reductions / broadcasts onto the MXU."""
    c = {}
    tile_k = np.zeros((DK_I, NBO * DK_I), np.float32)
    tile_v = np.zeros((ATT_OUT, NHID), np.float32)
    seg_i = np.zeros((NBO * DK_I, NBO), np.float32)
    e32 = np.zeros((NBO, NHID), np.float32)
    for n in range(NBO):
        tile_k[np.arange(DK_I), n * DK_I + np.arange(DK_I)] = 1.0
        tile_v[np.arange(ATT_OUT), n * BSO + np.arange(ATT_OUT)] = 1.0
        seg_i[n * DK_I:(n + 1) * DK_I, n] = 1.0
        e32[n, n * BSO:(n + 1) * BSO] = 1.0

    cmp_rep = np.zeros((NBO, NBO * NBO), np.float32)
    cmp_exp = np.zeros((NBO, NBO * NBO), np.float32)
    wlow = np.zeros((1, NBO * NBO), np.float32)
    wup = np.zeros((1, NBO * NBO), np.float32)
    seg_rank = np.zeros((NBO * NBO, NHID), np.float32)
    for i in range(NBO):
        for j in range(NBO):
            col = i * NBO + j
            cmp_rep[j, col] = 1.0          # column holds l_j
            cmp_exp[i, col] = 1.0          # column holds l_i
            if j < i:
                wlow[0, col] = 1.0
            elif j > i:
                wup[0, col] = 1.0
            seg_rank[col, i * BSO:(i + 1) * BSO] = 1.0

    seg_logit = np.zeros((CQKV, NL), np.float32)
    exp_e = np.zeros((NL, CQKV), np.float32)
    seg_den = np.zeros((NL, CH), np.float32)
    for h in range(NH_C):
        for m in range(NBO):
            col = h * NBO + m
            seg_logit[m * CH + h * DK_C + np.arange(DK_C), col] = 1.0
            exp_e[col, m * CH + h * DV_C:m * CH + (h + 1) * DV_C] = 1.0
            seg_den[col, h * DV_C:(h + 1) * DV_C] = 1.0

    c['tile_k'], c['tile_v'], c['seg_i'], c['e32'] = tile_k, tile_v, seg_i, e32
    c['cmp_rep'], c['cmp_exp'], c['wlow'], c['wup'] = cmp_rep, cmp_exp, wlow, wup
    c['seg_rank'] = seg_rank
    c['seg_logit'], c['exp_e'], c['seg_den'] = seg_logit, exp_e, seg_den
    return {k: jnp.asarray(v) for k, v in c.items()}


# --------------------- one-time host-side weight fusion ---------------------
def prepare_params(p):
    """Fuse raw BlocksCore parameters into block-diagonal / lane-dense operands."""
    f = {}
    # input-attention GroupLinear query projection -> one (NHID, NBO*DK_I) block-diag
    f['wq_i_bd'] = block_diag(*[p['wq_i'][n] for n in range(NBO)])
    f['wk_i1'] = p['wk_i'][1]
    f['wv_i1'] = p['wv_i'][1]
    # BlockGRU: [inp_use | hx] @ W -> [i_r+h_r | i_z+h_z | i_n | h_n]
    wih, whh = p['wih_t'], p['whh_t']
    top = jnp.concatenate([wih[:, :2 * NHID], wih[:, 2 * NHID:],
                           jnp.zeros((GRU_IN, NHID), jnp.float32)], axis=1)
    bot = jnp.concatenate([whh[:, :2 * NHID],
                           jnp.zeros((NHID, NHID), jnp.float32),
                           whh[:, 2 * NHID:]], axis=1)
    f['w_gru'] = jnp.concatenate([top, bot], axis=0)                       # (2*NHID, 4*NHID)
    f['b_gru'] = jnp.concatenate([p['bih'][:, :2 * NHID] + p['bhh'][:, :2 * NHID],
                                  p['bih'][:, 2 * NHID:], p['bhh'][:, 2 * NHID:]], axis=1)
    # communication MHA: Q|K|V as one (NHID, 3*CQKV) block-diagonal matmul
    wq_bd = block_diag(*[p['wq_c'][n] for n in range(NBO)])
    wk_bd = block_diag(*[p['wk_c'][n] for n in range(NBO)])
    wv_bd = block_diag(*[p['wv_c'][n] for n in range(NBO)])
    f['w_qkv'] = jnp.concatenate([wq_bd, wk_bd, wv_bd], axis=1)
    # shared fc / gate applied per block via block-diagonal replication
    wfc_bd = block_diag(*([p['wfc']] * NBO))                               # (CQKV, NHID)
    wg_bd = block_diag(*([p['wg']] * NBO))
    f['w_fcg'] = jnp.concatenate([wfc_bd, wg_bd], axis=1)                  # (CQKV, 2*NHID)
    f['b_fcg'] = jnp.concatenate([jnp.tile(p['bfc'], (1, NBO)),
                                  jnp.tile(p['bg'], (1, NBO))], axis=1)
    f.update(_structural_constants())
    return f


FUSED_ORDER = ['wq_i_bd', 'wk_i1', 'wv_i1',
               'tile_k', 'tile_v', 'seg_i', 'e32',
               'cmp_rep', 'cmp_exp', 'wlow', 'wup', 'seg_rank',
               'w_gru', 'b_gru',
               'w_qkv', 'seg_logit', 'exp_e', 'seg_den',
               'w_fcg', 'b_fcg']


# ------------------------------ wrapper -----------------------------------
@jax.jit
def blocks_core_forward(inp, hx, cx, fused):
    bfull = inp.shape[0]
    # One grid step for small batches (review item 1); cap the row tile at 256 so a
    # large batch would still pipeline with MXU-filling M-dim tiles.
    tb = bfull if bfull <= 256 else 256
    assert bfull % tb == 0
    grid = (bfull // tb,)
    weights = [fused[k] for k in FUSED_ORDER]

    def w_spec(x):
        return pl.BlockSpec(x.shape, lambda b: (0, 0))   # full-extent weight block

    in_specs = ([pl.BlockSpec((tb, NINP * NBI), lambda b: (b, 0)),
                 pl.BlockSpec((tb, NHID), lambda b: (b, 0)),
                 pl.BlockSpec((tb, NHID), lambda b: (b, 0))]
                + [w_spec(x) for x in weights])
    out_specs = [pl.BlockSpec((tb, NHID), lambda b: (b, 0)) for _ in range(3)]
    out_shape = [jax.ShapeDtypeStruct((bfull, NHID), jnp.float32) for _ in range(3)]

    hx_out, cx_out, mask = pl.pallas_call(
        blocks_core_kernel,
        grid=grid,
        in_specs=in_specs,
        out_specs=out_specs,
        out_shape=out_shape,
        compiler_params=pltpu.CompilerParams(
            dimension_semantics=("arbitrary",)),   # single tiny step: no megacore split
    )(inp, hx, cx, *weights)
    entropy = 0.0   # num_rules=0 -> RuleNetwork branch inactive
    return hx_out, cx_out, mask, entropy


# ------------------------- deterministic parameters ------------------------
def init_params(key):
    ks = jax.random.split(key, 12)
    p = {}
    # inp_att GroupLinearLayers (0.01 * randn like RIMs GroupLinearLayer init)
    p['wq_i'] = 0.01 * jax.random.normal(ks[0], (NBO, BSO, DK_I), jnp.float32)
    p['wk_i'] = 0.01 * jax.random.normal(ks[1], (2, NINP, DK_I), jnp.float32)
    p['wv_i'] = 0.01 * jax.random.normal(ks[2], (2, NINP, ATT_OUT), jnp.float32)
    # BlockGRU / nn.GRUCell (gate order r, z, n); weights stored transposed.
    std = 1.0 / (NHID ** 0.5)
    p['wih_t'] = jax.random.uniform(ks[3], (GRU_IN, 3 * NHID), jnp.float32, -std, std)
    p['whh_t'] = jax.random.uniform(ks[4], (NHID, 3 * NHID), jnp.float32, -std, std)
    p['bih'] = jax.random.uniform(ks[5], (1, 3 * NHID), jnp.float32, -std, std)
    p['bhh'] = jax.random.uniform(ks[6], (1, 3 * NHID), jnp.float32, -std, std)
    # communication MHA
    p['wq_c'] = 0.01 * jax.random.normal(ks[7], (NBO, BSO, NH_C * DK_C), jnp.float32)
    p['wk_c'] = 0.01 * jax.random.normal(ks[8], (NBO, BSO, NH_C * DK_C), jnp.float32)
    p['wv_c'] = 0.01 * jax.random.normal(ks[9], (NBO, BSO, NH_C * DV_C), jnp.float32)
    fstd = 1.0 / ((NH_C * DV_C) ** 0.5)
    p['wfc'] = jax.random.uniform(ks[10], (NH_C * DV_C, BSO), jnp.float32, -fstd, fstd)
    p['bfc'] = jnp.zeros((1, BSO), jnp.float32)
    p['wg'] = jax.random.uniform(ks[11], (NH_C * DV_C, BSO), jnp.float32, -fstd, fstd)
    p['bg'] = jnp.zeros((1, BSO), jnp.float32)
    return p


# -------------------------- pure-JAX reference -----------------------------
def reference_forward(inp, hx, cx, p):
    bs = inp.shape[0]
    inp_use = inp.reshape(bs, NBI, NINP)
    inp_use = jnp.concatenate([jnp.zeros_like(inp_use[:, :1]), inp_use], axis=1)
    q_in = hx.reshape(bs, NBO, BSO)
    q = jnp.einsum('bnd,ndk->bnk', q_in, p['wq_i'])
    k = jnp.einsum('bmd,mdk->bmk', inp_use, p['wk_i'])
    v = jnp.einsum('bmd,mdk->bmk', inp_use, p['wv_i'])
    iatt = jax.nn.softmax(jnp.einsum('bnk,bmk->bnm', q, k) / (DK_I ** 0.5), axis=-1)
    inp_flat = jnp.einsum('bnm,bmv->bnv', iatt, v).reshape(bs, NBO * ATT_OUT)
    null_att = iatt[:, :, 0]
    _, idx = jax.lax.top_k(null_att, NBO - TOPKVAL)
    block_mask = jnp.ones((bs, NBO), jnp.float32)
    block_mask = block_mask.at[jnp.arange(bs)[:, None], idx].set(0.0)
    mask = jnp.repeat(block_mask[:, :, None], BSO, axis=-1).reshape(bs, NHID)
    gi = inp_flat @ p['wih_t'] + p['bih']
    gh = hx @ p['whh_t'] + p['bhh']
    i_r, i_z, i_n = jnp.split(gi, 3, axis=-1)
    h_r, h_z, h_n = jnp.split(gh, 3, axis=-1)
    r = jax.nn.sigmoid(i_r + h_r)
    z = jax.nn.sigmoid(i_z + h_z)
    ncand = jnp.tanh(i_n + r * h_n)
    hx_gru = (1 - z) * ncand + z * hx
    cx_new = hx_gru
    hb = hx_gru.reshape(bs, NBO, BSO)
    qc = jnp.einsum('bnd,ndk->bnk', hb, p['wq_c']).reshape(bs, NBO, NH_C, DK_C)
    kc = jnp.einsum('bnd,ndk->bnk', hb, p['wk_c']).reshape(bs, NBO, NH_C, DK_C)
    vc = jnp.einsum('bnd,ndk->bnk', hb, p['wv_c']).reshape(bs, NBO, NH_C, DV_C)
    a = jax.nn.softmax(jnp.einsum('bnhk,bmhk->bhnm', qc, kc) / (DK_C ** 0.5), axis=-1)
    out = jnp.einsum('bhnm,bmhv->bnhv', a, vc).reshape(bs, NBO, NH_C * DV_C)
    fc = out @ p['wfc'] + p['bfc']
    gate = jax.nn.sigmoid(out @ p['wg'] + p['bg'])
    hx_new = hx_gru + (gate * jnp.tanh(fc)).reshape(bs, NHID)
    hx_out = mask * hx_new + (1 - mask) * hx
    cx_out = mask * cx_new + (1 - mask) * cx
    return hx_out, cx_out, mask


# ---------------------------------- main -----------------------------------
if __name__ == "__main__":
    key = jax.random.PRNGKey(0)
    kp, ki, kh, kc = jax.random.split(key, 4)
    params = init_params(kp)
    fused = prepare_params(params)      # one-time weight fusion (outside the hot path)
    inp = jax.random.normal(ki, (B, NINP * NBI), jnp.float32)
    hx = jax.random.normal(kh, (B, NHID), jnp.float32)
    cx = jax.random.normal(kc, (B, NHID), jnp.float32)

    hx_out, cx_out, mask, entropy = blocks_core_forward(inp, hx, cx, fused)
    jax.block_until_ready((hx_out, cx_out, mask))

    hx_ref, cx_ref, mask_ref = reference_forward(inp, hx, cx, params)
    assert hx_out.shape == (B, NHID) and cx_out.shape == (B, NHID) and mask.shape == (B, NHID)
    assert jnp.allclose(mask, mask_ref, atol=1e-5)
    assert jnp.allclose(hx_out, hx_ref, atol=1e-4, rtol=1e-4)
    assert jnp.allclose(cx_out, cx_ref, atol=1e-4, rtol=1e-4)

    print("KERNEL_OK")
</pallas_src>

<mosaic_0001>
module attributes {stable_mosaic.version = 11 : i64} {
  func.func @blocks_core_kernel(%arg0: i32, %arg1: memref<16x32xf32, #tpu.memory_space<vmem>>, %arg2: memref<16x128xf32, #tpu.memory_space<vmem>>, %arg3: memref<16x128xf32, #tpu.memory_space<vmem>>, %arg4: memref<128x256xf32, #tpu.memory_space<vmem>>, %arg5: memref<32x64xf32, #tpu.memory_space<vmem>>, %arg6: memref<32x32xf32, #tpu.memory_space<vmem>>, %arg7: memref<64x256xf32, #tpu.memory_space<vmem>>, %arg8: memref<32x128xf32, #tpu.memory_space<vmem>>, %arg9: memref<256x4xf32, #tpu.memory_space<vmem>>, %arg10: memref<4x128xf32, #tpu.memory_space<vmem>>, %arg11: memref<4x16xf32, #tpu.memory_space<vmem>>, %arg12: memref<4x16xf32, #tpu.memory_space<vmem>>, %arg13: memref<1x16xf32, #tpu.memory_space<vmem>>, %arg14: memref<1x16xf32, #tpu.memory_space<vmem>>, %arg15: memref<16x128xf32, #tpu.memory_space<vmem>>, %arg16: memref<256x512xf32, #tpu.memory_space<vmem>>, %arg17: memref<1x512xf32, #tpu.memory_space<vmem>>, %arg18: memref<128x1536xf32, #tpu.memory_space<vmem>>, %arg19: memref<512x16xf32, #tpu.memory_space<vmem>>, %arg20: memref<16x512xf32, #tpu.memory_space<vmem>>, %arg21: memref<16x128xf32, #tpu.memory_space<vmem>>, %arg22: memref<512x256xf32, #tpu.memory_space<vmem>>, %arg23: memref<1x256xf32, #tpu.memory_space<vmem>>, %arg24: memref<16x128xf32, #tpu.memory_space<vmem>>, %arg25: memref<16x128xf32, #tpu.memory_space<vmem>>, %arg26: memref<16x128xf32, #tpu.memory_space<vmem>>) attributes {dimension_semantics = [#tpu.dimension_semantics<arbitrary>], iteration_bounds = array<i64: 1>, scalar_prefetch = 0 : i64, scratch_operands = 0 : i64, tpu.core_type = #tpu.core_type<tc>, window_params = [{transform_indices = @transform_0, window_bounds = array<i64: 16, 32>}, {transform_indices = @transform_1, window_bounds = array<i64: 16, 128>}, {transform_indices = @transform_2, window_bounds = array<i64: 16, 128>}, {pipeline_mode = #tpu.pipeline_mode<synchronous>, transform_indices = @transform_3, window_bounds = array<i64: 128, 256>}, {pipeline_mode = #tpu.pipeline_mode<synchronous>, transform_indices = @transform_4, window_bounds = array<i64: 32, 64>}, {pipeline_mode = #tpu.pipeline_mode<synchronous>, transform_indices = @transform_5, window_bounds = array<i64: 32, 32>}, {pipeline_mode = #tpu.pipeline_mode<synchronous>, transform_indices = @transform_6, window_bounds = array<i64: 64, 256>}, {pipeline_mode = #tpu.pipeline_mode<synchronous>, transform_indices = @transform_7, window_bounds = array<i64: 32, 128>}, {pipeline_mode = #tpu.pipeline_mode<synchronous>, transform_indices = @transform_8, window_bounds = array<i64: 256, 4>}, {pipeline_mode = #tpu.pipeline_mode<synchronous>, transform_indices = @transform_9, window_bounds = array<i64: 4, 128>}, {pipeline_mode = #tpu.pipeline_mode<synchronous>, transform_indices = @transform_10, window_bounds = array<i64: 4, 16>}, {pipeline_mode = #tpu.pipeline_mode<synchronous>, transform_indices = @transform_11, window_bounds = array<i64: 4, 16>}, {pipeline_mode = #tpu.pipeline_mode<synchronous>, transform_indices = @transform_12, window_bounds = array<i64: 1, 16>}, {pipeline_mode = #tpu.pipeline_mode<synchronous>, transform_indices = @transform_13, window_bounds = array<i64: 1, 16>}, {pipeline_mode = #tpu.pipeline_mode<synchronous>, transform_indices = @transform_14, window_bounds = array<i64: 16, 128>}, {pipeline_mode = #tpu.pipeline_mode<synchronous>, transform_indices = @transform_15, window_bounds = array<i64: 256, 512>}, {pipeline_mode = #tpu.pipeline_mode<synchronous>, transform_indices = @transform_16, window_bounds = array<i64: 1, 512>}, {pipeline_mode = #tpu.pipeline_mode<synchronous>, transform_indices = @transform_17, window_bounds = array<i64: 128, 1536>}, {pipeline_mode = #tpu.pipeline_mode<synchronous>, transform_indices = @transform_18, window_bounds = array<i64: 512, 16>}, {pipeline_mode = #tpu.pipeline_mode<synchronous>, transform_indices = @transform_19, window_bounds = array<i64: 16, 512>}, {pipeline_mode = #tpu.pipeline_mode<synchronous>, transform_indices = @transform_20, window_bounds = array<i64: 16, 128>}, {pipeline_mode = #tpu.pipeline_mode<synchronous>, transform_indices = @transform_21, window_bounds = array<i64: 512, 256>}, {pipeline_mode = #tpu.pipeline_mode<synchronous>, transform_indices = @transform_22, window_bounds = array<i64: 1, 256>}, {transform_indices = @transform_23, window_bounds = array<i64: 16, 128>}, {transform_indices = @transform_24, window_bounds = array<i64: 16, 128>}, {transform_indices = @transform_25, window_bounds = array<i64: 16, 128>}]} {
    %c0 = arith.constant 0 : index
    %c0_0 = arith.constant 0 : index
    %0 = vector.load %arg1[%c0, %c0_0] : memref<16x32xf32, #tpu.memory_space<vmem>>, vector<16x32xf32>
    %c0_1 = arith.constant 0 : index
    %c0_2 = arith.constant 0 : index
    %1 = vector.load %arg2[%c0_1, %c0_2] : memref<16x128xf32, #tpu.memory_space<vmem>>, vector<16x128xf32>
    %c0_3 = arith.constant 0 : index
    %c0_4 = arith.constant 0 : index
    %2 = vector.load %arg3[%c0_3, %c0_4] : memref<16x128xf32, #tpu.memory_space<vmem>>, vector<16x128xf32>
    %c0_5 = arith.constant 0 : index
    %c0_6 = arith.constant 0 : index
    %3 = vector.load %arg4[%c0_5, %c0_6] : memref<128x256xf32, #tpu.memory_space<vmem>>, vector<128x256xf32>
    %cst = arith.constant dense<0.000000e+00> : vector<16x256xf32>
    %4 = tpu.matmul %1, %3, %cst {dimension_numbers = #tpu.dot_dimension_numbers<[1], [0], [0], [1], [0, 0, 1, 1], [], []>} : vector<16x128xf32>, vector<128x256xf32>, vector<16x256xf32> -> vector<16x256xf32>
    %c0_7 = arith.constant 0 : index
    %c0_8 = arith.constant 0 : index
    %5 = vector.load %arg5[%c0_7, %c0_8] : memref<32x64xf32, #tpu.memory_space<vmem>>, vector<32x64xf32>
    %cst_9 = arith.constant dense<0.000000e+00> : vector<16x64xf32>
    %6 = tpu.matmul %0, %5, %cst_9 {dimension_numbers = #tpu.dot_dimension_numbers<[1], [0], [0], [1], [0, 0, 1, 1], [], []>} : vector<16x32xf32>, vector<32x64xf32>, vector<16x64xf32> -> vector<16x64xf32>
    %c0_10 = arith.constant 0 : index
    %c0_11 = arith.constant 0 : index
    %7 = vector.load %arg6[%c0_10, %c0_11] : memref<32x32xf32, #tpu.memory_space<vmem>>, vector<32x32xf32>
    %cst_12 = arith.constant dense<0.000000e+00> : vector<16x32xf32>
    %8 = tpu.matmul %0, %7, %cst_12 {dimension_numbers = #tpu.dot_dimension_numbers<[1], [0], [0], [1], [0, 0, 1, 1], [], []>} : vector<16x32xf32>, vector<32x32xf32>, vector<16x32xf32> -> vector<16x32xf32>
    %c0_13 = arith.constant 0 : index
    %c0_14 = arith.constant 0 : index
    %9 = vector.load %arg7[%c0_13, %c0_14] : memref<64x256xf32, #tpu.memory_space<vmem>>, vector<64x256xf32>
    %cst_15 = arith.constant dense<0.000000e+00> : vector<16x256xf32>
    %10 = tpu.matmul %6, %9, %cst_15 {dimension_numbers = #tpu.dot_dimension_numbers<[1], [0], [0], [1], [0, 0, 1, 1], [], []>} : vector<16x64xf32>, vector<64x256xf32>, vector<16x256xf32> -> vector<16x256xf32>
    %c0_16 = arith.constant 0 : index
    %c0_17 = arith.constant 0 : index
    %11 = vector.load %arg8[%c0_16, %c0_17] : memref<32x128xf32, #tpu.memory_space<vmem>>, vector<32x128xf32>
    %cst_18 = arith.constant dense<0.000000e+00> : vector<16x128xf32>
    %12 = tpu.matmul %8, %11, %cst_18 {dimension_numbers = #tpu.dot_dimension_numbers<[1], [0], [0], [1], [0, 0, 1, 1], [], []>} : vector<16x32xf32>, vector<32x128xf32>, vector<16x128xf32> -> vector<16x128xf32>
    %13 = arith.mulf %4, %10 : vector<16x256xf32>
    %c0_19 = arith.constant 0 : index
    %c0_20 = arith.constant 0 : index
    %14 = vector.load %arg9[%c0_19, %c0_20] : memref<256x4xf32, #tpu.memory_space<vmem>>, vector<256x4xf32>
    %cst_21 = arith.constant dense<0.000000e+00> : vector<16x4xf32>
    %15 = tpu.matmul %13, %14, %cst_21 {dimension_numbers = #tpu.dot_dimension_numbers<[1], [0], [0], [1], [0, 0, 1, 1], [], []>} : vector<16x256xf32>, vector<256x4xf32>, vector<16x4xf32> -> vector<16x4xf32>
    %cst_22 = arith.constant 1.250000e-01 : f32
    %16 = vector.broadcast %cst_22 : f32 to vector<16x4xf32>
    %17 = arith.mulf %15, %16 : vector<16x4xf32>
    %c0_23 = arith.constant 0 : index
    %c0_24 = arith.constant 0 : index
    %18 = vector.load %arg10[%c0_23, %c0_24] : memref<4x128xf32, #tpu.memory_space<vmem>>, vector<4x128xf32>
    %cst_25 = arith.constant dense<0.000000e+00> : vector<16x128xf32>
    %19 = tpu.matmul %17, %18, %cst_25 {dimension_numbers = #tpu.dot_dimension_numbers<[1], [0], [0], [1], [0, 0, 1, 1], [], []>} : vector<16x4xf32>, vector<4x128xf32>, vector<16x128xf32> -> vector<16x128xf32>
    %20 = arith.negf %19 : vector<16x128xf32>
    %21 = math.exp %20 : vector<16x128xf32>
    %cst_26 = arith.constant 1.000000e+00 : f32
    %22 = vector.broadcast %cst_26 : f32 to vector<16x128xf32>
    %23 = arith.addf %22, %21 : vector<16x128xf32>
    %24 = arith.divf %22, %23 : vector<16x128xf32>
    %25 = arith.mulf %24, %12 : vector<16x128xf32>
    %c0_27 = arith.constant 0 : index
    %c0_28 = arith.constant 0 : index
    %26 = vector.load %arg11[%c0_27, %c0_28] : memref<4x16xf32, #tpu.memory_space<vmem>>, vector<4x16xf32>
    %cst_29 = arith.constant dense<0.000000e+00> : vector<16x16xf32>
    %27 = tpu.matmul %17, %26, %cst_29 {dimension_numbers = #tpu.dot_dimension_numbers<[1], [0], [0], [1], [0, 0, 1, 1], [], []>} : vector<16x4xf32>, vector<4x16xf32>, vector<16x16xf32> -> vector<16x16xf32>
    %c0_30 = arith.constant 0 : index
    %c0_31 = arith.constant 0 : index
    %28 = vector.load %arg12[%c0_30, %c0_31] : memref<4x16xf32, #tpu.memory_space<vmem>>, vector<4x16xf32>
    %cst_32 = arith.constant dense<0.000000e+00> : vector<16x16xf32>
    %29 = tpu.matmul %17, %28, %cst_32 {dimension_numbers = #tpu.dot_dimension_numbers<[1], [0], [0], [1], [0, 0, 1, 1], [], []>} : vector<16x4xf32>, vector<4x16xf32>, vector<16x16xf32> -> vector<16x16xf32>
    %30 = arith.cmpf ole, %27, %29 : vector<16x16xf32>
    %31 = arith.extui %30 : vector<16x16xi1> to vector<16x16xi32>
    %32 = arith.sitofp %31 : vector<16x16xi32> to vector<16x16xf32>
    %c0_33 = arith.constant 0 : index
    %c0_34 = arith.constant 0 : index
    %33 = vector.load %arg13[%c0_33, %c0_34] : memref<1x16xf32, #tpu.memory_space<vmem>>, vector<1x16xf32>
    %34 = vector.broadcast %33 : vector<1x16xf32> to vector<16x16xf32>
    %35 = arith.mulf %32, %34 : vector<16x16xf32>
    %36 = arith.cmpf olt, %27, %29 : vector<16x16xf32>
    %37 = arith.extui %36 : vector<16x16xi1> to vector<16x16xi32>
    %38 = arith.sitofp %37 : vector<16x16xi32> to vector<16x16xf32>
    %c0_35 = arith.constant 0 : index
    %c0_36 = arith.constant 0 : index
    %39 = vector.load %arg14[%c0_35, %c0_36] : memref<1x16xf32, #tpu.memory_space<vmem>>, vector<1x16xf32>
    %40 = vector.broadcast %39 : vector<1x16xf32> to vector<16x16xf32>
    %41 = arith.mulf %38, %40 : vector<16x16xf32>
    %42 = arith.addf %35, %41 : vector<16x16xf32>
    %c0_37 = arith.constant 0 : index
    %c0_38 = arith.constant 0 : index
    %43 = vector.load %arg15[%c0_37, %c0_38] : memref<16x128xf32, #tpu.memory_space<vmem>>, vector<16x128xf32>
    %cst_39 = arith.constant dense<0.000000e+00> : vector<16x128xf32>
    %44 = tpu.matmul %42, %43, %cst_39 {dimension_numbers = #tpu.dot_dimension_numbers<[1], [0], [0], [1], [0, 0, 1, 1], [], []>} : vector<16x16xf32>, vector<16x128xf32>, vector<16x128xf32> -> vector<16x128xf32>
    %cst_40 = arith.constant 2.000000e+00 : f32
    %45 = vector.broadcast %cst_40 : f32 to vector<16x128xf32>
    %46 = arith.cmpf oge, %44, %45 : vector<16x128xf32>
    %47 = arith.extui %46 : vector<16x128xi1> to vector<16x128xi32>
    %48 = arith.sitofp %47 : vector<16x128xi32> to vector<16x128xf32>
    %49 = tpu.concatenate %25, %1 in 1 : vector<16x128xf32>, vector<16x128xf32> -> vector<16x256xf32>
    %c0_41 = arith.constant 0 : index
    %c0_42 = arith.constant 0 : index
    %50 = vector.load %arg16[%c0_41, %c0_42] : memref<256x512xf32, #tpu.memory_space<vmem>>, vector<256x512xf32>
    %cst_43 = arith.constant dense<0.000000e+00> : vector<16x512xf32>
    %51 = tpu.matmul %49, %50, %cst_43 {dimension_numbers = #tpu.dot_dimension_numbers<[1], [0], [0], [1], [0, 0, 1, 1], [], []>} : vector<16x256xf32>, vector<256x512xf32>, vector<16x512xf32> -> vector<16x512xf32>
    %c0_44 = arith.constant 0 : index
    %c0_45 = arith.constant 0 : index
    %52 = vector.load %arg17[%c0_44, %c0_45] : memref<1x512xf32, #tpu.memory_space<vmem>>, vector<1x512xf32>
    %53 = vector.broadcast %52 : vector<1x512xf32> to vector<16x512xf32>
    %54 = arith.addf %51, %53 : vector<16x512xf32>
    %55 = vector.extract_strided_slice %54 {offsets = [0, 0], sizes = [16, 128], strides = [1, 1]} : vector<16x512xf32> to vector<16x128xf32>
    %56 = arith.negf %55 : vector<16x128xf32>
    %57 = math.exp %56 : vector<16x128xf32>
    %cst_46 = arith.constant 1.000000e+00 : f32
    %58 = vector.broadcast %cst_46 : f32 to vector<16x128xf32>
    %59 = arith.addf %58, %57 : vector<16x128xf32>
    %60 = arith.divf %58, %59 : vector<16x128xf32>
    %61 = vector.extract_strided_slice %54 {offsets = [0, 128], sizes = [16, 128], strides = [1, 1]} : vector<16x512xf32> to vector<16x128xf32>
    %62 = arith.negf %61 : vector<16x128xf32>
    %63 = math.exp %62 : vector<16x128xf32>
    %cst_47 = arith.constant 1.000000e+00 : f32
    %64 = vector.broadcast %cst_47 : f32 to vector<16x128xf32>
    %65 = arith.addf %64, %63 : vector<16x128xf32>
    %66 = arith.divf %64, %65 : vector<16x128xf32>
    %67 = vector.extract_strided_slice %54 {offsets = [0, 256], sizes = [16, 128], strides = [1, 1]} : vector<16x512xf32> to vector<16x128xf32>
    %68 = vector.extract_strided_slice %54 {offsets = [0, 384], sizes = [16, 128], strides = [1, 1]} : vector<16x512xf32> to vector<16x128xf32>
    %69 = arith.mulf %60, %68 : vector<16x128xf32>
    %70 = arith.addf %67, %69 : vector<16x128xf32>
    %71 = math.tanh %70 : vector<16x128xf32>
    %cst_48 = arith.constant 1.000000e+00 : f32
    %72 = vector.broadcast %cst_48 : f32 to vector<16x128xf32>
    %73 = arith.subf %72, %66 : vector<16x128xf32>
    %74 = arith.mulf %73, %71 : vector<16x128xf32>
    %75 = arith.mulf %66, %1 : vector<16x128xf32>
    %76 = arith.addf %74, %75 : vector<16x128xf32>
    %c0_49 = arith.constant 0 : index
    %c0_50 = arith.constant 0 : index
    %77 = vector.load %arg18[%c0_49, %c0_50] : memref<128x1536xf32, #tpu.memory_space<vmem>>, vector<128x1536xf32>
    %cst_51 = arith.constant dense<0.000000e+00> : vector<16x1536xf32>
    %78 = tpu.matmul %76, %77, %cst_51 {dimension_numbers = #tpu.dot_dimension_numbers<[1], [0], [0], [1], [0, 0, 1, 1], [], []>} : vector<16x128xf32>, vector<128x1536xf32>, vector<16x1536xf32> -> vector<16x1536xf32>
    %79 = vector.extract_strided_slice %78 {offsets = [0, 0], sizes = [16, 512], strides = [1, 1]} : vector<16x1536xf32> to vector<16x512xf32>
    %80 = vector.extract_strided_slice %78 {offsets = [0, 512], sizes = [16, 512], strides = [1, 1]} : vector<16x1536xf32> to vector<16x512xf32>
    %81 = vector.extract_strided_slice %78 {offsets = [0, 1024], sizes = [16, 512], strides = [1, 1]} : vector<16x1536xf32> to vector<16x512xf32>
    %82 = vector.extract_strided_slice %79 {offsets = [0, 0], sizes = [16, 128], strides = [1, 1]} : vector<16x512xf32> to vector<16x128xf32>
    %83 = tpu.concatenate %82, %82, %82, %82 in 1 : vector<16x128xf32>, vector<16x128xf32>, vector<16x128xf32>, vector<16x128xf32> -> vector<16x512xf32>
    %84 = arith.mulf %83, %80 : vector<16x512xf32>
    %c0_52 = arith.constant 0 : index
    %c0_53 = arith.constant 0 : index
    %85 = vector.load %arg19[%c0_52, %c0_53] : memref<512x16xf32, #tpu.memory_space<vmem>>, vector<512x16xf32>
    %cst_54 = arith.constant dense<0.000000e+00> : vector<16x16xf32>
    %86 = tpu.matmul %84, %85, %cst_54 {dimension_numbers = #tpu.dot_dimension_numbers<[1], [0], [0], [1], [0, 0, 1, 1], [], []>} : vector<16x512xf32>, vector<512x16xf32>, vector<16x16xf32> -> vector<16x16xf32>
    %cst_55 = arith.constant 0.176776692 : f32
    %87 = vector.broadcast %cst_55 : f32 to vector<16x16xf32>
    %88 = arith.mulf %86, %87 : vector<16x16xf32>
    %cst_56 = arith.constant dense<0xFF800000> : vector<16xf32>
    %89 = vector.multi_reduction <maximumf>, %88, %cst_56 [1] : vector<16x16xf32> to vector<16xf32>
    %90 = vector.shape_cast %89 : vector<16xf32> to vector<16x1xf32>
    %91 = vector.broadcast %90 : vector<16x1xf32> to vector<16x16xf32>
    %92 = arith.subf %88, %91 : vector<16x16xf32>
    %93 = math.exp %92 : vector<16x16xf32>
    %c0_57 = arith.constant 0 : index
    %c0_58 = arith.constant 0 : index
    %94 = vector.load %arg20[%c0_57, %c0_58] : memref<16x512xf32, #tpu.memory_space<vmem>>, vector<16x512xf32>
    %cst_59 = arith.constant dense<0.000000e+00> : vector<16x512xf32>
    %95 = tpu.matmul %93, %94, %cst_59 {dimension_numbers = #tpu.dot_dimension_numbers<[1], [0], [0], [1], [0, 0, 1, 1], [], []>} : vector<16x16xf32>, vector<16x512xf32>, vector<16x512xf32> -> vector<16x512xf32>
    %96 = arith.mulf %95, %81 : vector<16x512xf32>
    %97 = vector.extract_strided_slice %96 {offsets = [0, 0], sizes = [16, 128], strides = [1, 1]} : vector<16x512xf32> to vector<16x128xf32>
    %98 = vector.extract_strided_slice %96 {offsets = [0, 128], sizes = [16, 128], strides = [1, 1]} : vector<16x512xf32> to vector<16x128xf32>
    %99 = arith.addf %97, %98 : vector<16x128xf32>
    %100 = vector.extract_strided_slice %96 {offsets = [0, 256], sizes = [16, 128], strides = [1, 1]} : vector<16x512xf32> to vector<16x128xf32>
    %101 = arith.addf %99, %100 : vector<16x128xf32>
    %102 = vector.extract_strided_slice %96 {offsets = [0, 384], sizes = [16, 128], strides = [1, 1]} : vector<16x512xf32> to vector<16x128xf32>
    %103 = arith.addf %101, %102 : vector<16x128xf32>
    %c0_60 = arith.constant 0 : index
    %c0_61 = arith.constant 0 : index
    %104 = vector.load %arg21[%c0_60, %c0_61] : memref<16x128xf32, #tpu.memory_space<vmem>>, vector<16x128xf32>
    %cst_62 = arith.constant dense<0.000000e+00> : vector<16x128xf32>
    %105 = tpu.matmul %93, %104, %cst_62 {dimension_numbers = #tpu.dot_dimension_numbers<[1], [0], [0], [1], [0, 0, 1, 1], [], []>} : vector<16x16xf32>, vector<16x128xf32>, vector<16x128xf32> -> vector<16x128xf32>
    %106 = arith.divf %103, %105 : vector<16x128xf32>
    %107 = vector.extract_strided_slice %79 {offsets = [0, 128], sizes = [16, 128], strides = [1, 1]} : vector<16x512xf32> to vector<16x128xf32>
    %108 = tpu.concatenate %107, %107, %107, %107 in 1 : vector<16x128xf32>, vector<16x128xf32>, vector<16x128xf32>, vector<16x128xf32> -> vector<16x512xf32>
    %109 = arith.mulf %108, %80 : vector<16x512xf32>
    %c0_63 = arith.constant 0 : index
    %c0_64 = arith.constant 0 : index
    %110 = vector.load %arg19[%c0_63, %c0_64] : memref<512x16xf32, #tpu.memory_space<vmem>>, vector<512x16xf32>
    %cst_65 = arith.constant dense<0.000000e+00> : vector<16x16xf32>
    %111 = tpu.matmul %109, %110, %cst_65 {dimension_numbers = #tpu.dot_dimension_numbers<[1], [0], [0], [1], [0, 0, 1, 1], [], []>} : vector<16x512xf32>, vector<512x16xf32>, vector<16x16xf32> -> vector<16x16xf32>
    %cst_66 = arith.constant 0.176776692 : f32
    %112 = vector.broadcast %cst_66 : f32 to vector<16x16xf32>
    %113 = arith.mulf %111, %112 : vector<16x16xf32>
    %cst_67 = arith.constant dense<0xFF800000> : vector<16xf32>
    %114 = vector.multi_reduction <maximumf>, %113, %cst_67 [1] : vector<16x16xf32> to vector<16xf32>
    %115 = vector.shape_cast %114 : vector<16xf32> to vector<16x1xf32>
    %116 = vector.broadcast %115 : vector<16x1xf32> to vector<16x16xf32>
    %117 = arith.subf %113, %116 : vector<16x16xf32>
    %118 = math.exp %117 : vector<16x16xf32>
    %c0_68 = arith.constant 0 : index
    %c0_69 = arith.constant 0 : index
    %119 = vector.load %arg20[%c0_68, %c0_69] : memref<16x512xf32, #tpu.memory_space<vmem>>, vector<16x512xf32>
    %cst_70 = arith.constant dense<0.000000e+00> : vector<16x512xf32>
    %120 = tpu.matmul %118, %119, %cst_70 {dimension_numbers = #tpu.dot_dimension_numbers<[1], [0], [0], [1], [0, 0, 1, 1], [], []>} : vector<16x16xf32>, vector<16x512xf32>, vector<16x512xf32> -> vector<16x512xf32>
    %121 = arith.mulf %120, %81 : vector<16x512xf32>
    %122 = vector.extract_strided_slice %121 {offsets = [0, 0], sizes = [16, 128], strides = [1, 1]} : vector<16x512xf32> to vector<16x128xf32>
    %123 = vector.extract_strided_slice %121 {offsets = [0, 128], sizes = [16, 128], strides = [1, 1]} : vector<16x512xf32> to vector<16x128xf32>
    %124 = arith.addf %122, %123 : vector<16x128xf32>
    %125 = vector.extract_strided_slice %121 {offsets = [0, 256], sizes = [16, 128], strides = [1, 1]} : vector<16x512xf32> to vector<16x128xf32>
    %126 = arith.addf %124, %125 : vector<16x128xf32>
    %127 = vector.extract_strided_slice %121 {offsets = [0, 384], sizes = [16, 128], strides = [1, 1]} : vector<16x512xf32> to vector<16x128xf32>
    %128 = arith.addf %126, %127 : vector<16x128xf32>
    %c0_71 = arith.constant 0 : index
    %c0_72 = arith.constant 0 : index
    %129 = vector.load %arg21[%c0_71, %c0_72] : memref<16x128xf32, #tpu.memory_space<vmem>>, vector<16x128xf32>
    %cst_73 = arith.constant dense<0.000000e+00> : vector<16x128xf32>
    %130 = tpu.matmul %118, %129, %cst_73 {dimension_numbers = #tpu.dot_dimension_numbers<[1], [0], [0], [1], [0, 0, 1, 1], [], []>} : vector<16x16xf32>, vector<16x128xf32>, vector<16x128xf32> -> vector<16x128xf32>
    %131 = arith.divf %128, %130 : vector<16x128xf32>
    %132 = vector.extract_strided_slice %79 {offsets = [0, 256], sizes = [16, 128], strides = [1, 1]} : vector<16x512xf32> to vector<16x128xf32>
    %133 = tpu.concatenate %132, %132, %132, %132 in 1 : vector<16x128xf32>, vector<16x128xf32>, vector<16x128xf32>, vector<16x128xf32> -> vector<16x512xf32>
    %134 = arith.mulf %133, %80 : vector<16x512xf32>
    %c0_74 = arith.constant 0 : index
    %c0_75 = arith.constant 0 : index
    %135 = vector.load %arg19[%c0_74, %c0_75] : memref<512x16xf32, #tpu.memory_space<vmem>>, vector<512x16xf32>
    %cst_76 = arith.constant dense<0.000000e+00> : vector<16x16xf32>
    %136 = tpu.matmul %134, %135, %cst_76 {dimension_numbers = #tpu.dot_dimension_numbers<[1], [0], [0], [1], [0, 0, 1, 1], [], []>} : vector<16x512xf32>, vector<512x16xf32>, vector<16x16xf32> -> vector<16x16xf32>
    %cst_77 = arith.constant 0.176776692 : f32
    %137 = vector.broadcast %cst_77 : f32 to vector<16x16xf32>
    %138 = arith.mulf %136, %137 : vector<16x16xf32>
    %cst_78 = arith.constant dense<0xFF800000> : vector<16xf32>
    %139 = vector.multi_reduction <maximumf>, %138, %cst_78 [1] : vector<16x16xf32> to vector<16xf32>
    %140 = vector.shape_cast %139 : vector<16xf32> to vector<16x1xf32>
    %141 = vector.broadcast %140 : vector<16x1xf32> to vector<16x16xf32>
    %142 = arith.subf %138, %141 : vector<16x16xf32>
    %143 = math.exp %142 : vector<16x16xf32>
    %c0_79 = arith.constant 0 : index
    %c0_80 = arith.constant 0 : index
    %144 = vector.load %arg20[%c0_79, %c0_80] : memref<16x512xf32, #tpu.memory_space<vmem>>, vector<16x512xf32>
    %cst_81 = arith.constant dense<0.000000e+00> : vector<16x512xf32>
    %145 = tpu.matmul %143, %144, %cst_81 {dimension_numbers = #tpu.dot_dimension_numbers<[1], [0], [0], [1], [0, 0, 1, 1], [], []>} : vector<16x16xf32>, vector<16x512xf32>, vector<16x512xf32> -> vector<16x512xf32>
    %146 = arith.mulf %145, %81 : vector<16x512xf32>
    %147 = vector.extract_strided_slice %146 {offsets = [0, 0], sizes = [16, 128], strides = [1, 1]} : vector<16x512xf32> to vector<16x128xf32>
    %148 = vector.extract_strided_slice %146 {offsets = [0, 128], sizes = [16, 128], strides = [1, 1]} : vector<16x512xf32> to vector<16x128xf32>
    %149 = arith.addf %147, %148 : vector<16x128xf32>
    %150 = vector.extract_strided_slice %146 {offsets = [0, 256], sizes = [16, 128], strides = [1, 1]} : vector<16x512xf32> to vector<16x128xf32>
    %151 = arith.addf %149, %150 : vector<16x128xf32>
    %152 = vector.extract_strided_slice %146 {offsets = [0, 384], sizes = [16, 128], strides = [1, 1]} : vector<16x512xf32> to vector<16x128xf32>
    %153 = arith.addf %151, %152 : vector<16x128xf32>
    %c0_82 = arith.constant 0 : index
    %c0_83 = arith.constant 0 : index
    %154 = vector.load %arg21[%c0_82, %c0_83] : memref<16x128xf32, #tpu.memory_space<vmem>>, vector<16x128xf32>
    %cst_84 = arith.constant dense<0.000000e+00> : vector<16x128xf32>
    %155 = tpu.matmul %143, %154, %cst_84 {dimension_numbers = #tpu.dot_dimension_numbers<[1], [0], [0], [1], [0, 0, 1, 1], [], []>} : vector<16x16xf32>, vector<16x128xf32>, vector<16x128xf32> -> vector<16x128xf32>
    %156 = arith.divf %153, %155 : vector<16x128xf32>
    %157 = vector.extract_strided_slice %79 {offsets = [0, 384], sizes = [16, 128], strides = [1, 1]} : vector<16x512xf32> to vector<16x128xf32>
    %158 = tpu.concatenate %157, %157, %157, %157 in 1 : vector<16x128xf32>, vector<16x128xf32>, vector<16x128xf32>, vector<16x128xf32> -> vector<16x512xf32>
    %159 = arith.mulf %158, %80 : vector<16x512xf32>
    %c0_85 = arith.constant 0 : index
    %c0_86 = arith.constant 0 : index
    %160 = vector.load %arg19[%c0_85, %c0_86] : memref<512x16xf32, #tpu.memory_space<vmem>>, vector<512x16xf32>
    %cst_87 = arith.constant dense<0.000000e+00> : vector<16x16xf32>
    %161 = tpu.matmul %159, %160, %cst_87 {dimension_numbers = #tpu.dot_dimension_numbers<[1], [0], [0], [1], [0, 0, 1, 1], [], []>} : vector<16x512xf32>, vector<512x16xf32>, vector<16x16xf32> -> vector<16x16xf32>
    %cst_88 = arith.constant 0.176776692 : f32
    %162 = vector.broadcast %cst_88 : f32 to vector<16x16xf32>
    %163 = arith.mulf %161, %162 : vector<16x16xf32>
    %cst_89 = arith.constant dense<0xFF800000> : vector<16xf32>
    %164 = vector.multi_reduction <maximumf>, %163, %cst_89 [1] : vector<16x16xf32> to vector<16xf32>
    %165 = vector.shape_cast %164 : vector<16xf32> to vector<16x1xf32>
    %166 = vector.broadcast %165 : vector<16x1xf32> to vector<16x16xf32>
    %167 = arith.subf %163, %166 : vector<16x16xf32>
    %168 = math.exp %167 : vector<16x16xf32>
    %c0_90 = arith.constant 0 : index
    %c0_91 = arith.constant 0 : index
    %169 = vector.load %arg20[%c0_90, %c0_91] : memref<16x512xf32, #tpu.memory_space<vmem>>, vector<16x512xf32>
    %cst_92 = arith.constant dense<0.000000e+00> : vector<16x512xf32>
    %170 = tpu.matmul %168, %169, %cst_92 {dimension_numbers = #tpu.dot_dimension_numbers<[1], [0], [0], [1], [0, 0, 1, 1], [], []>} : vector<16x16xf32>, vector<16x512xf32>, vector<16x512xf32> -> vector<16x512xf32>
    %171 = arith.mulf %170, %81 : vector<16x512xf32>
    %172 = vector.extract_strided_slice %171 {offsets = [0, 0], sizes = [16, 128], strides = [1, 1]} : vector<16x512xf32> to vector<16x128xf32>
    %173 = vector.extract_strided_slice %171 {offsets = [0, 128], sizes = [16, 128], strides = [1, 1]} : vector<16x512xf32> to vector<16x128xf32>
    %174 = arith.addf %172, %173 : vector<16x128xf32>
    %175 = vector.extract_strided_slice %171 {offsets = [0, 256], sizes = [16, 128], strides = [1, 1]} : vector<16x512xf32> to vector<16x128xf32>
    %176 = arith.addf %174, %175 : vector<16x128xf32>
    %177 = vector.extract_strided_slice %171 {offsets = [0, 384], sizes = [16, 128], strides = [1, 1]} : vector<16x512xf32> to vector<16x128xf32>
    %178 = arith.addf %176, %177 : vector<16x128xf32>
    %c0_93 = arith.constant 0 : index
    %c0_94 = arith.constant 0 : index
    %179 = vector.load %arg21[%c0_93, %c0_94] : memref<16x128xf32, #tpu.memory_space<vmem>>, vector<16x128xf32>
    %cst_95 = arith.constant dense<0.000000e+00> : vector<16x128xf32>
    %180 = tpu.matmul %168, %179, %cst_95 {dimension_numbers = #tpu.dot_dimension_numbers<[1], [0], [0], [1], [0, 0, 1, 1], [], []>} : vector<16x16xf32>, vector<16x128xf32>, vector<16x128xf32> -> vector<16x128xf32>
    %181 = arith.divf %178, %180 : vector<16x128xf32>
    %182 = tpu.concatenate %106, %131, %156, %181 in 1 : vector<16x128xf32>, vector<16x128xf32>, vector<16x128xf32>, vector<16x128xf32> -> vector<16x512xf32>
    %c0_96 = arith.constant 0 : index
    %c0_97 = arith.constant 0 : index
    %183 = vector.load %arg22[%c0_96, %c0_97] : memref<512x256xf32, #tpu.memory_space<vmem>>, vector<512x256xf32>
    %cst_98 = arith.constant dense<0.000000e+00> : vector<16x256xf32>
    %184 = tpu.matmul %182, %183, %cst_98 {dimension_numbers = #tpu.dot_dimension_numbers<[1], [0], [0], [1], [0, 0, 1, 1], [], []>} : vector<16x512xf32>, vector<512x256xf32>, vector<16x256xf32> -> vector<16x256xf32>
    %c0_99 = arith.constant 0 : index
    %c0_100 = arith.constant 0 : index
    %185 = vector.load %arg23[%c0_99, %c0_100] : memref<1x256xf32, #tpu.memory_space<vmem>>, vector<1x256xf32>
    %186 = vector.broadcast %185 : vector<1x256xf32> to vector<16x256xf32>
    %187 = arith.addf %184, %186 : vector<16x256xf32>
    %188 = vector.extract_strided_slice %187 {offsets = [0, 128], sizes = [16, 128], strides = [1, 1]} : vector<16x256xf32> to vector<16x128xf32>
    %189 = arith.negf %188 : vector<16x128xf32>
    %190 = math.exp %189 : vector<16x128xf32>
    %cst_101 = arith.constant 1.000000e+00 : f32
    %191 = vector.broadcast %cst_101 : f32 to vector<16x128xf32>
    %192 = arith.addf %191, %190 : vector<16x128xf32>
    %193 = arith.divf %191, %192 : vector<16x128xf32>
    %194 = vector.extract_strided_slice %187 {offsets = [0, 0], sizes = [16, 128], strides = [1, 1]} : vector<16x256xf32> to vector<16x128xf32>
    %195 = math.tanh %194 : vector<16x128xf32>
    %196 = arith.mulf %193, %195 : vector<16x128xf32>
    %197 = arith.addf %76, %196 : vector<16x128xf32>
    %198 = arith.mulf %48, %197 : vector<16x128xf32>
    %cst_102 = arith.constant 1.000000e+00 : f32
    %199 = vector.broadcast %cst_102 : f32 to vector<16x128xf32>
    %200 = arith.subf %199, %48 : vector<16x128xf32>
    %201 = arith.mulf %200, %1 : vector<16x128xf32>
    %202 = arith.addf %198, %201 : vector<16x128xf32>
    %c0_103 = arith.constant 0 : index
    %c0_104 = arith.constant 0 : index
    %203 = vector.load %arg24[%c0_103, %c0_104] : memref<16x128xf32, #tpu.memory_space<vmem>>, vector<16x128xf32>
    tpu.vector_store %arg24[%c0_103, %c0_104], %202 {strides = array<i32>} : memref<16x128xf32, #tpu.memory_space<vmem>>, vector<16x128xf32>,
    %204 = arith.mulf %48, %76 : vector<16x128xf32>
    %cst_105 = arith.constant 1.000000e+00 : f32
    %205 = vector.broadcast %cst_105 : f32 to vector<16x128xf32>
    %206 = arith.subf %205, %48 : vector<16x128xf32>
    %207 = arith.mulf %206, %2 : vector<16x128xf32>
    %208 = arith.addf %204, %207 : vector<16x128xf32>
    %c0_106 = arith.constant 0 : index
    %c0_107 = arith.constant 0 : index
    %209 = vector.load %arg25[%c0_106, %c0_107] : memref<16x128xf32, #tpu.memory_space<vmem>>, vector<16x128xf32>
    tpu.vector_store %arg25[%c0_106, %c0_107], %208 {strides = array<i32>} : memref<16x128xf32, #tpu.memory_space<vmem>>, vector<16x128xf32>,
    %c0_108 = arith.constant 0 : index
    %c0_109 = arith.constant 0 : index
    %210 = vector.load %arg26[%c0_108, %c0_109] : memref<16x128xf32, #tpu.memory_space<vmem>>, vector<16x128xf32>
    tpu.vector_store %arg26[%c0_108, %c0_109], %48 {strides = array<i32>} : memref<16x128xf32, #tpu.memory_space<vmem>>, vector<16x128xf32>,
    return
  }
  func.func @transform_0(%arg0: i32) -> (i32, i32) {
    %c0_i32 = arith.constant 0 : i32
    %c0_i32_0 = arith.constant 0 : i32
    return %arg0, %c0_i32 : i32, i32
  }
  func.func @transform_1(%arg0: i32) -> (i32, i32) {
    %c0_i32 = arith.constant 0 : i32
    %c0_i32_0 = arith.constant 0 : i32
    return %arg0, %c0_i32 : i32, i32
  }
  func.func @transform_2(%arg0: i32) -> (i32, i32) {
    %c0_i32 = arith.constant 0 : i32
    %c0_i32_0 = arith.constant 0 : i32
    return %arg0, %c0_i32 : i32, i32
  }
  func.func @transform_3(%arg0: i32) -> (i32, i32) {
    %c0_i32 = arith.constant 0 : i32
    %c0_i32_0 = arith.constant 0 : i32
    %c0_i32_1 = arith.constant 0 : i32
    return %c0_i32, %c0_i32_0 : i32, i32
  }
  func.func @transform_4(%arg0: i32) -> (i32, i32) {
    %c0_i32 = arith.constant 0 : i32
    %c0_i32_0 = arith.constant 0 : i32
    %c0_i32_1 = arith.constant 0 : i32
    return %c0_i32, %c0_i32_0 : i32, i32
  }
  func.func @transform_5(%arg0: i32) -> (i32, i32) {
    %c0_i32 = arith.constant 0 : i32
    %c0_i32_0 = arith.constant 0 : i32
    %c0_i32_1 = arith.constant 0 : i32
    return %c0_i32, %c0_i32_0 : i32, i32
  }
  func.func @transform_6(%arg0: i32) -> (i32, i32) {
    %c0_i32 = arith.constant 0 : i32
    %c0_i32_0 = arith.constant 0 : i32
    %c0_i32_1 = arith.constant 0 : i32
    return %c0_i32, %c0_i32_0 : i32, i32
  }
  func.func @transform_7(%arg0: i32) -> (i32, i32) {
    %c0_i32 = arith.constant 0 : i32
    %c0_i32_0 = arith.constant 0 : i32
    %c0_i32_1 = arith.constant 0 : i32
    return %c0_i32, %c0_i32_0 : i32, i32
  }
  func.func @transform_8(%arg0: i32) -> (i32, i32) {
    %c0_i32 = arith.constant 0 : i32
    %c0_i32_0 = arith.constant 0 : i32
    %c0_i32_1 = arith.constant 0 : i32
    return %c0_i32, %c0_i32_0 : i32, i32
  }
  func.func @transform_9(%arg0: i32) -> (i32, i32) {
    %c0_i32 = arith.constant 0 : i32
    %c0_i32_0 = arith.constant 0 : i32
    %c0_i32_1 = arith.constant 0 : i32
    return %c0_i32, %c0_i32_0 : i32, i32
  }
  func.func @transform_10(%arg0: i32) -> (i32, i32) {
    %c0_i32 = arith.constant 0 : i32
    %c0_i32_0 = arith.constant 0 : i32
    %c0_i32_1 = arith.constant 0 : i32
    return %c0_i32, %c0_i32_0 : i32, i32
  }
  func.func @transform_11(%arg0: i32) -> (i32, i32) {
    %c0_i32 = arith.constant 0 : i32
    %c0_i32_0 = arith.constant 0 : i32
    %c0_i32_1 = arith.constant 0 : i32
    return %c0_i32, %c0_i32_0 : i32, i32
  }
  func.func @transform_12(%arg0: i32) -> (i32, i32) {
    %c0_i32 = arith.constant 0 : i32
    %c0_i32_0 = arith.constant 0 : i32
    %c0_i32_1 = arith.constant 0 : i32
    return %c0_i32, %c0_i32_0 : i32, i32
  }
  func.func @transform_13(%arg0: i32) -> (i32, i32) {
    %c0_i32 = arith.constant 0 : i32
    %c0_i32_0 = arith.constant 0 : i32
    %c0_i32_1 = arith.constant 0 : i32
    return %c0_i32, %c0_i32_0 : i32, i32
  }
  func.func @transform_14(%arg0: i32) -> (i32, i32) {
    %c0_i32 = arith.constant 0 : i32
    %c0_i32_0 = arith.constant 0 : i32
    %c0_i32_1 = arith.constant 0 : i32
    return %c0_i32, %c0_i32_0 : i32, i32
  }
  func.func @transform_15(%arg0: i32) -> (i32, i32) {
    %c0_i32 = arith.constant 0 : i32
    %c0_i32_0 = arith.constant 0 : i32
    %c0_i32_1 = arith.constant 0 : i32
    return %c0_i32, %c0_i32_0 : i32, i32
  }
  func.func @transform_16(%arg0: i32) -> (i32, i32) {
    %c0_i32 = arith.constant 0 : i32
    %c0_i32_0 = arith.constant 0 : i32
    %c0_i32_1 = arith.constant 0 : i32
    return %c0_i32, %c0_i32_0 : i32, i32
  }
  func.func @transform_17(%arg0: i32) -> (i32, i32) {
    %c0_i32 = arith.constant 0 : i32
    %c0_i32_0 = arith.constant 0 : i32
    %c0_i32_1 = arith.constant 0 : i32
    return %c0_i32, %c0_i32_0 : i32, i32
  }
  func.func @transform_18(%arg0: i32) -> (i32, i32) {
    %c0_i32 = arith.constant 0 : i32
    %c0_i32_0 = arith.constant 0 : i32
    %c0_i32_1 = arith.constant 0 : i32
    return %c0_i32, %c0_i32_0 : i32, i32
  }
  func.func @transform_19(%arg0: i32) -> (i32, i32) {
    %c0_i32 = arith.constant 0 : i32
    %c0_i32_0 = arith.constant 0 : i32
    %c0_i32_1 = arith.constant 0 : i32
    return %c0_i32, %c0_i32_0 : i32, i32
  }
  func.func @transform_20(%arg0: i32) -> (i32, i32) {
    %c0_i32 = arith.constant 0 : i32
    %c0_i32_0 = arith.constant 0 : i32
    %c0_i32_1 = arith.constant 0 : i32
    return %c0_i32, %c0_i32_0 : i32, i32
  }
  func.func @transform_21(%arg0: i32) -> (i32, i32) {
    %c0_i32 = arith.constant 0 : i32
    %c0_i32_0 = arith.constant 0 : i32
    %c0_i32_1 = arith.constant 0 : i32
    return %c0_i32, %c0_i32_0 : i32, i32
  }
  func.func @transform_22(%arg0: i32) -> (i32, i32) {
    %c0_i32 = arith.constant 0 : i32
    %c0_i32_0 = arith.constant 0 : i32
    %c0_i32_1 = arith.constant 0 : i32
    return %c0_i32, %c0_i32_0 : i32, i32
  }
  func.func @transform_23(%arg0: i32) -> (i32, i32) {
    %c0_i32 = arith.constant 0 : i32
    %c0_i32_0 = arith.constant 0 : i32
    return %arg0, %c0_i32 : i32, i32
  }
  func.func @transform_24(%arg0: i32) -> (i32, i32) {
    %c0_i32 = arith.constant 0 : i32
    %c0_i32_0 = arith.constant 0 : i32
    return %arg0, %c0_i32 : i32, i32
  }
  func.func @transform_25(%arg0: i32) -> (i32, i32) {
    %c0_i32 = arith.constant 0 : i32
    %c0_i32_0 = arith.constant 0 : i32
    return %arg0, %c0_i32 : i32, i32
  }
}

</mosaic_0001>

<llo_original>
// kernel: blocks_core_forward.1
$region0: #{blocks_core_forward.1}
  #allocation0 [shape = 'u32[]', space=smem, size = 0x4, offset = 0x4, fixed_abs, tag = 'smem constant byte address 0x4 - core index']
  #allocation1 [shape = 'u32[144,128]{1,0:T(1,128)}', space=vmem, size = 0x12000, scoped, tag = 'internal scratch']
  %s0 = inlined_call_operand.vmem [shape: f32[16,32], index: 0, kind: input, shape index: {}]
  %s1 = inlined_call_operand.vmem [shape: f32[16,128], index: 1, kind: input, shape index: {}]
  %s2 = inlined_call_operand.vmem [shape: f32[16,128], index: 2, kind: input, shape index: {}]
  %s3 = inlined_call_operand.vmem [shape: f32[128,256], index: 3, kind: input, shape index: {}]
  %s4 = inlined_call_operand.vmem [shape: f32[32,64], index: 4, kind: input, shape index: {}]
  %s5 = inlined_call_operand.vmem [shape: f32[32,32], index: 5, kind: input, shape index: {}]
  %s6 = inlined_call_operand.vmem [shape: f32[64,256], index: 6, kind: input, shape index: {}]
  %s7 = inlined_call_operand.vmem [shape: f32[32,128], index: 7, kind: input, shape index: {}]
  %s8 = inlined_call_operand.vmem [shape: f32[256,4], index: 8, kind: input, shape index: {}]
  %s9 = inlined_call_operand.vmem [shape: f32[4,128], index: 9, kind: input, shape index: {}]
  %s10 = inlined_call_operand.vmem [shape: f32[4,16], index: 10, kind: input, shape index: {}]
  %s11 = inlined_call_operand.vmem [shape: f32[4,16], index: 11, kind: input, shape index: {}]
  %s12 = inlined_call_operand.vmem [shape: f32[1,16], index: 12, kind: input, shape index: {}]
  %s13 = inlined_call_operand.vmem [shape: f32[1,16], index: 13, kind: input, shape index: {}]
  %s14 = inlined_call_operand.vmem [shape: f32[16,128], index: 14, kind: input, shape index: {}]
  %s15 = inlined_call_operand.hbm [shape: f32[256,512], index: 15, kind: input, shape index: {}]
  %s16 = inlined_call_operand.vmem [shape: f32[1,512], index: 16, kind: input, shape index: {}]
  %s17 = inlined_call_operand.hbm [shape: f32[128,1536], index: 17, kind: input, shape index: {}]
  %s18 = inlined_call_operand.vmem [shape: f32[512,16], index: 18, kind: input, shape index: {}]
  %s19 = inlined_call_operand.vmem [shape: f32[16,512], index: 19, kind: input, shape index: {}]
  %s20 = inlined_call_operand.vmem [shape: f32[16,128], index: 20, kind: input, shape index: {}]
  %s21 = inlined_call_operand.hbm [shape: f32[512,256], index: 21, kind: input, shape index: {}]
  %s22 = inlined_call_operand.vmem [shape: f32[1,256], index: 22, kind: input, shape index: {}]
  %s23 = inlined_call_operand.hbm [shape: f32[16,128], index: 23, kind: output, shape index: {0}]
  %s24 = inlined_call_operand.hbm [shape: f32[16,128], index: 24, kind: output, shape index: {1}]
  %s25 = inlined_call_operand.hbm [shape: f32[16,128], index: 25, kind: output, shape index: {2}]
  %26 = xla_tuple %s23, %s24, %s25
  %s27 = sld [smem:[#allocation0]]
  $region130: #{blocks_core_forward.1} parent=0
    _
  %s29 = ssub.s32 1, %s27
  %s30 = scalar_select 0, %s29, %s27
  $region1: #{blocks_core_forward.1} parent=0
    #allocation2 [shape = 'u8[524288]{0}', space=vmem, size = 0x80000, scoped, tag = 'input window, operand 15, single buffered']
    #allocation3 [shape = 's32[1]{0}', space=sflag, size = 0x4, scoped, tag = 'scoped memory for blocks_core_forward.1']
    #allocation4 [shape = 's32[1]{0}', space=sflag, size = 0x4, scoped, tag = 'scoped memory for blocks_core_forward.1']
    #allocation5 [shape = 'u8[786432]{0}', space=vmem, size = 0xc0000, scoped, tag = 'input window, operand 17, single buffered']
    #allocation6 [shape = 's32[1]{0}', space=sflag, size = 0x4, scoped, tag = 'scoped memory for blocks_core_forward.1']
    #allocation7 [shape = 'u8[524288]{0}', space=vmem, size = 0x80000, scoped, tag = 'input window, operand 21, single buffered']
    #allocation8 [shape = 'u8[8192]{0}', space=vmem, size = 0x2000, scoped, tag = 'output window, operand 0, single buffered']
    #allocation9 [shape = 'u8[8192]{0}', space=vmem, size = 0x2000, scoped, tag = 'output window, operand 1, single buffered']
    #allocation10 [shape = 's32[1]{0}', space=sflag, size = 0x4, scoped, tag = 'scoped memory for blocks_core_forward.1']
    #allocation11 [shape = 'u8[8192]{0}', space=vmem, size = 0x2000, scoped, tag = 'output window, operand 2, single buffered']
    %31 = vsyncpa [#allocation3], 0
    %32 = vsyncpa [#allocation6], 0
    %33 = vsyncpa [#allocation4], 0
    %34 = vsyncpa [#allocation10], 0
    // Predicated region
    $region2: #{blocks_core_forward.1} parent=1 // pred_check
      _
    $region3: #{blocks_core_forward.1} parent=1 // pred_check_branch
      %36 = sbr.rel (0) target = $region5
    $region4: #{blocks_core_forward.1} parent=1 // pred_region
      _
    $region5: #{blocks_core_forward.1} parent=1 // pred_fallthru
      _
    // Predicated region
    $region6: #{blocks_core_forward.1} parent=1 // pred_check
      _
    $region7: #{blocks_core_forward.1} parent=1 // pred_check_branch
      %38 = sbr.rel (0) target = $region9
    $region8: #{blocks_core_forward.1} parent=1 // pred_region
      _
    $region9: #{blocks_core_forward.1} parent=1 // pred_fallthru
      _
    // Predicated region
    $region10: #{blocks_core_forward.1} parent=1 // pred_check
      _
    $region11: #{blocks_core_forward.1} parent=1 // pred_check_branch
      %40 = sbr.rel (0) target = $region13
    $region12: #{blocks_core_forward.1} parent=1 // pred_region
      _
    $region13: #{blocks_core_forward.1} parent=1 // pred_fallthru
      _
    // Predicated region
    $region14: #{blocks_core_forward.1} parent=1 // pred_check
      _
    $region15: #{blocks_core_forward.1} parent=1 // pred_check_branch
      %42 = sbr.rel (0) target = $region17
    $region16: #{blocks_core_forward.1} parent=1 // pred_region
      _
    $region17: #{blocks_core_forward.1} parent=1 // pred_fallthru
      _
    // Predicated region
    $region18: #{blocks_core_forward.1} parent=1 // pred_check
      _
    $region19: #{blocks_core_forward.1} parent=1 // pred_check_branch
      %44 = sbr.rel (0) target = $region21
    $region20: #{blocks_core_forward.1} parent=1 // pred_region
      _
    $region21: #{blocks_core_forward.1} parent=1 // pred_fallthru
      _
    // Predicated region
    $region22: #{blocks_core_forward.1} parent=1 // pred_check
      _
    $region23: #{blocks_core_forward.1} parent=1 // pred_check_branch
      %46 = sbr.rel (0) target = $region25
    $region24: #{blocks_core_forward.1} parent=1 // pred_region
      _
    $region25: #{blocks_core_forward.1} parent=1 // pred_fallthru
      _
    // Predicated region
    $region26: #{blocks_core_forward.1} parent=1 // pred_check
      _
    $region27: #{blocks_core_forward.1} parent=1 // pred_check_branch
      %48 = sbr.rel (0) target = $region29
    $region28: #{blocks_core_forward.1} parent=1 // pred_region
      _
    $region29: #{blocks_core_forward.1} parent=1 // pred_fallthru
      _
    // Predicated region
    $region30: #{blocks_core_forward.1} parent=1 // pred_check
      _
    $region31: #{blocks_core_forward.1} parent=1 // pred_check_branch
      %50 = sbr.rel (0) target = $region33
    $region32: #{blocks_core_forward.1} parent=1 // pred_region
      _
    $region33: #{blocks_core_forward.1} parent=1 // pred_fallthru
      _
    // Predicated region
    $region34: #{blocks_core_forward.1} parent=1 // pred_check
      _
    $region35: #{blocks_core_forward.1} parent=1 // pred_check_branch
      %52 = sbr.rel (0) target = $region37
    $region36: #{blocks_core_forward.1} parent=1 // pred_region
      _
    $region37: #{blocks_core_forward.1} parent=1 // pred_fallthru
      _
    // Predicated region
    $region38: #{blocks_core_forward.1} parent=1 // pred_check
      _
    $region39: #{blocks_core_forward.1} parent=1 // pred_check_branch
      %54 = sbr.rel (0) target = $region41
    $region40: #{blocks_core_forward.1} parent=1 // pred_region
      _
    $region41: #{blocks_core_forward.1} parent=1 // pred_fallthru
      _
    // Predicated region
    $region42: #{blocks_core_forward.1} parent=1 // pred_check
      _
    $region43: #{blocks_core_forward.1} parent=1 // pred_check_branch
      %56 = sbr.rel (0) target = $region45
    $region44: #{blocks_core_forward.1} parent=1 // pred_region
      _
    $region45: #{blocks_core_forward.1} parent=1 // pred_fallthru
      _
    // Predicated region
    $region46: #{blocks_core_forward.1} parent=1 // pred_check
      _
    $region47: #{blocks_core_forward.1} parent=1 // pred_check_branch
      %58 = sbr.rel (0) target = $region49
    $region48: #{blocks_core_forward.1} parent=1 // pred_region
      _
    $region49: #{blocks_core_forward.1} parent=1 // pred_fallthru
      _
    // Predicated region
    $region50: #{blocks_core_forward.1} parent=1 // pred_check
      _
    $region51: #{blocks_core_forward.1} parent=1 // pred_check_branch
      %60 = sbr.rel (0) target = $region53
    $region52: #{blocks_core_forward.1} parent=1 // pred_region
      _
    $region53: #{blocks_core_forward.1} parent=1 // pred_fallthru
      _
    // Predicated region
    $region54: #{blocks_core_forward.1} parent=1 // pred_check
      _
    $region55: #{blocks_core_forward.1} parent=1 // pred_check_branch
      %62 = sbr.rel (0) target = $region57
    $region56: #{blocks_core_forward.1} parent=1 // pred_region
      _
    $region57: #{blocks_core_forward.1} parent=1 // pred_fallthru
      _
    // Predicated region
    $region58: #{blocks_core_forward.1} parent=1 // pred_check
      _
    $region59: #{blocks_core_forward.1} parent=1 // pred_check_branch
      %64 = sbr.rel (0) target = $region61
    $region60: #{blocks_core_forward.1} parent=1 // pred_region
      _
    $region61: #{blocks_core_forward.1} parent=1 // pred_fallthru
      _
    // Predicated region
    $region62: #{blocks_core_forward.1} parent=1 // pred_check
      _
    $region63: #{blocks_core_forward.1} parent=1 // pred_check_branch
      %66 = sbr.rel (0) target = $region65
    $region64: #{blocks_core_forward.1} parent=1 // pred_region
      %s68 = ssub.s32 16384, 16384
      %69 = vsyncadd [#allocation3], %s68
      %s70 = sshll.u32 [#allocation2], 4
      %s71 = int_to_ptr.vmem [resolvable:$true] %s70
      %76 = dma.hbm_to_vmem [thread:$0]  %s15, 16384, %s71, [#allocation3], 512, 512, 32
    $region65: #{blocks_core_forward.1} parent=1 // pred_fallthru
      _
    // Predicated region
    $region66: #{blocks_core_forward.1} parent=1 // pred_check
      _
    $region67: #{blocks_core_forward.1} parent=1 // pred_check_branch
      %78 = sbr.rel (0) target = $region69
    $region68: #{blocks_core_forward.1} parent=1 // pred_region
      _
    $region69: #{blocks_core_forward.1} parent=1 // pred_fallthru
      _
    // Predicated region
    $region70: #{blocks_core_forward.1} parent=1 // pred_check
      _
    $region71: #{blocks_core_forward.1} parent=1 // pred_check_branch
      %80 = sbr.rel (0) target = $region73
    $region72: #{blocks_core_forward.1} parent=1 // pred_region
      %s82 = ssub.s32 24576, 24576
      %83 = vsyncadd [#allocation6], %s82
      %s84 = sshll.u32 [#allocation5], 4
      %s85 = int_to_ptr.vmem [resolvable:$true] %s84
      %90 = dma.hbm_to_vmem [thread:$0]  %s17, 24576, %s85, [#allocation6], 1536, 1536, 96
    $region73: #{blocks_core_forward.1} parent=1 // pred_fallthru
      _
    // Predicated region
    $region74: #{blocks_core_forward.1} parent=1 // pred_check
      _
    $region75: #{blocks_core_forward.1} parent=1 // pred_check_branch
      %92 = sbr.rel (0) target = $region77
    $region76: #{blocks_core_forward.1} parent=1 // pred_region
      _
    $region77: #{blocks_core_forward.1} parent=1 // pred_fallthru
      _
    // Predicated region
    $region78: #{blocks_core_forward.1} parent=1 // pred_check
      _
    $region79: #{blocks_core_forward.1} parent=1 // pred_check_branch
      %94 = sbr.rel (0) target = $region81
    $region80: #{blocks_core_forward.1} parent=1 // pred_region
      _
    $region81: #{blocks_core_forward.1} parent=1 // pred_fallthru
      _
    // Predicated region
    $region82: #{blocks_core_forward.1} parent=1 // pred_check
      _
    $region83: #{blocks_core_forward.1} parent=1 // pred_check_branch
      %96 = sbr.rel (0) target = $region85
    $region84: #{blocks_core_forward.1} parent=1 // pred_region
      _
    $region85: #{blocks_core_forward.1} parent=1 // pred_fallthru
      _
    // Predicated region
    $region86: #{blocks_core_forward.1} parent=1 // pred_check
      _
    $region87: #{blocks_core_forward.1} parent=1 // pred_check_branch
      %98 = sbr.rel (0) target = $region89
    $region88: #{blocks_core_forward.1} parent=1 // pred_region
      %s100 = ssub.s32 16384, 16384
      %101 = vsyncadd [#allocation6], %s100
      %s102 = sshll.u32 [#allocation7], 4
      %s103 = int_to_ptr.vmem [resolvable:$true] %s102
      %108 = dma.hbm_to_vmem [thread:$0]  %s21, 16384, %s103, [#allocation6], 256, 256, 16
    $region89: #{blocks_core_forward.1} parent=1 // pred_fallthru
      _
    // Predicated region
    $region90: #{blocks_core_forward.1} parent=1 // pred_check
      _
    $region91: #{blocks_core_forward.1} parent=1 // pred_check_branch
      %110 = sbr.rel (0) target = $region93
    $region92: #{blocks_core_forward.1} parent=1 // pred_region
      _
    $region93: #{blocks_core_forward.1} parent=1 // pred_fallthru
      _
    // Predicated region
    $region94: #{blocks_core_forward.1} parent=1 // pred_check
      _
    $region95: #{blocks_core_forward.1} parent=1 // pred_check_branch
      %112 = sbr.rel (0) target = $region97
    $region96: #{blocks_core_forward.1} parent=1 // pred_region
      %113 = dma.done [#allocation3], 16384
    $region97: #{blocks_core_forward.1} parent=1 // pred_fallthru
      _
    // Predicated region
    $region98: #{blocks_core_forward.1} parent=1 // pred_check
      _
    $region99: #{blocks_core_forward.1} parent=1 // pred_check_branch
      %115 = sbr.rel (0) target = $region101
    $region100: #{blocks_core_forward.1} parent=1 // pred_region
      %116 = dma.done [#allocation6], 24576
    $region101: #{blocks_core_forward.1} parent=1 // pred_fallthru
      _
    // Predicated region
    $region102: #{blocks_core_forward.1} parent=1 // pred_check
      _
    $region103: #{blocks_core_forward.1} parent=1 // pred_check_branch
      %118 = sbr.rel (0) target = $region105
    $region104: #{blocks_core_forward.1} parent=1 // pred_region
      %119 = dma.done [#allocation6], 16384
    $region105: #{blocks_core_forward.1} parent=1 // pred_fallthru
      _
    %v120 = vld [vmem:[%s0] sm:$0xff]
    %v121 = vld [vmem:[%s0 + $0x8] sm:$0xff]
    %v122 = vld [vmem:[%s1] sm:$0xff]
    %v123 = vld [vmem:[%s1 + $0x8] sm:$0xff]
    %v124 = vld [vmem:[%s2] sm:$0xff]
    %v125 = vld [vmem:[%s2 + $0x8] sm:$0xff]
    %v126 = vld [vmem:[%s3] sm:$0xff]
    %v127 = vld [vmem:[%s3 + $0x8] sm:$0xff]
    %v128 = vld [vmem:[%s3 + $0x10] sm:$0xff]
    %v129 = vld [vmem:[%s3 + $0x18] sm:$0xff]
    %v130 = vld [vmem:[%s3 + $0x20] sm:$0xff]
    %v131 = vld [vmem:[%s3 + $0x28] sm:$0xff]
    %v132 = vld [vmem:[%s3 + $0x30] sm:$0xff]
    %v133 = vld [vmem:[%s3 + $0x38] sm:$0xff]
    %v134 = vld [vmem:[%s3 + $0x40] sm:$0xff]
    %v135 = vld [vmem:[%s3 + $0x48] sm:$0xff]
    %v136 = vld [vmem:[%s3 + $0x50] sm:$0xff]
    %v137 = vld [vmem:[%s3 + $0x58] sm:$0xff]
    %v138 = vld [vmem:[%s3 + $0x60] sm:$0xff]
    %v139 = vld [vmem:[%s3 + $0x68] sm:$0xff]
    %v140 = vld [vmem:[%s3 + $0x70] sm:$0xff]
    %v141 = vld [vmem:[%s3 + $0x78] sm:$0xff]
    %v142 = vld [vmem:[%s3 + $0x80] sm:$0xff]
    %v143 = vld [vmem:[%s3 + $0x88] sm:$0xff]
    %v144 = vld [vmem:[%s3 + $0x90] sm:$0xff]
    %v145 = vld [vmem:[%s3 + $0x98] sm:$0xff]
    %v146 = vld [vmem:[%s3 + $0xa0] sm:$0xff]
    %v147 = vld [vmem:[%s3 + $0xa8] sm:$0xff]
    %v148 = vld [vmem:[%s3 + $0xb0] sm:$0xff]
    %v149 = vld [vmem:[%s3 + $0xb8] sm:$0xff]
    %v150 = vld [vmem:[%s3 + $0xc0] sm:$0xff]
    %v151 = vld [vmem:[%s3 + $0xc8] sm:$0xff]
    %v152 = vld [vmem:[%s3 + $0xd0] sm:$0xff]
    %v153 = vld [vmem:[%s3 + $0xd8] sm:$0xff]
    %v154 = vld [vmem:[%s3 + $0xe0] sm:$0xff]
    %v155 = vld [vmem:[%s3 + $0xe8] sm:$0xff]
    %v156 = vld [vmem:[%s3 + $0xf0] sm:$0xff]
    %v157 = vld [vmem:[%s3 + $0xf8] sm:$0xff]
    %158 = vmatprep.subr.mxu0 %v127
    %159 = vmatpush1.msra.mxu0 %v126
    %160 = vmatprep.subr.mxu0 %v129
    %161 = vmatpush1.msra.mxu0 %v128
    %162 = vmatprep.subr.mxu0 %v131
    %163 = vmatpush1.msra.mxu0 %v130
    %164 = vmatprep.subr.mxu0 %v133
    %165 = vmatpush1.msra.mxu0 %v132
    %166 = vmatprep.subr.mxu0 %v135
    %167 = vmatpush1.msra.mxu0 %v134
    %168 = vmatprep.subr.mxu0 %v137
    %169 = vmatpush1.msra.mxu0 %v136
    %170 = vmatprep.subr.mxu0 %v139
    %171 = vmatpush1.msra.mxu0 %v138
    %172 = vmatprep.subr.mxu0 %v141
    %173 = vmatpush1.msra.mxu0 %v140
    %174 = vmatprep.subr.mxu0 %v143
    %175 = vmatpush1.msra.mxu0 %v142
    %176 = vmatprep.subr.mxu0 %v145
    %177 = vmatpush1.msra.mxu0 %v144
    %178 = vmatprep.subr.mxu0 %v147
    %179 = vmatpush1.msra.mxu0 %v146
    %180 = vmatprep.subr.mxu0 %v149
    %181 = vmatpush1.msra.mxu0 %v148
    %182 = vmatprep.subr.mxu0 %v151
    %183 = vmatpush1.msra.mxu0 %v150
    %184 = vmatprep.subr.mxu0 %v153
    %185 = vmatpush1.msra.mxu0 %v152
    %186 = vmatprep.subr.mxu0 %v155
    %187 = vmatpush1.msra.mxu0 %v154
    %188 = vmatprep.subr.mxu0 %v157
    %189 = vmatpush1.msra.mxu0 %v156
    %190 = vmatprep.subr.mxu0 0.0
    %191 = vmatpush1.msra.mxu0 0.0
    %192 = vmatprep.subr.mxu0 0.0
    %193 = vmatpush1.msra.mxu0 0.0
    %194 = vmatprep.subr.mxu0 0.0
    %195 = vmatpush1.msra.mxu0 0.0
    %196 = vmatprep.subr.mxu0 0.0
    %197 = vmatpush1.msra.mxu0 0.0
    %198 = vmatprep.subr.mxu0 0.0
    %199 = vmatpush1.msra.mxu0 0.0
    %200 = vmatprep.subr.mxu0 0.0
    %201 = vmatpush1.msra.mxu0 0.0
    %202 = vmatprep.subr.mxu0 0.0
    %203 = vmatpush1.msra.mxu0 0.0
    %204 = vmatprep.subr.mxu0 0.0
    %205 = vmatpush1.msra.mxu0 0.0
    %206 = vmatprep.subr.mxu0 0.0
    %207 = vmatpush1.msra.mxu0 0.0
    %208 = vmatprep.subr.mxu0 0.0
    %209 = vmatpush1.msra.mxu0 0.0
    %210 = vmatprep.subr.mxu0 0.0
    %211 = vmatpush1.msra.mxu0 0.0
    %212 = vmatprep.subr.mxu0 0.0
    %213 = vmatpush1.msra.mxu0 0.0
    %214 = vmatprep.subr.mxu0 0.0
    %215 = vmatpush1.msra.mxu0 0.0
    %216 = vmatprep.subr.mxu0 0.0
    %217 = vmatpush1.msra.mxu0 0.0
    %218 = vmatprep.subr.mxu0 0.0
    %219 = vmatpush1.msra.mxu0 0.0
    %220 = vmatprep.subr.mxu0 0.0
    %221 = vmatpush1.msra.mxu0 0.0
    %222 = vmatprep.mubr.f32.mxu0 0.0
    %223 = vmatmul.mubr.f32.gmra.mrb[0].mxu0 %v122
    %v224 = vpop.f32.mrb[0].mxu0
    %v225 = vadd.f32 0.0, %v224
    %v226 = vpop.f32.mrb[0].mxu0
    %v227 = vadd.f32 0.0, %v226
    %228 = vmatprep.mubr.f32.mxu0 0.0
    %229 = vmatmul.mubr.f32.gmra.mrb[0].mxu0 %v123
    %v230 = vpop.f32.mrb[0].mxu0
    %v231 = vadd.f32 0.0, %v230
    %v232 = vpop.f32.mrb[0].mxu0
    %v233 = vadd.f32 0.0, %v232
    %234 = vdwg.mxu0
    %v235 = vld [vmem:[%s4] sm:$0xff]
    %v236 = vld [vmem:[%s4 + $0x8] sm:$0xff]
    %v237 = vld [vmem:[%s4 + $0x10] sm:$0xff]
    %v238 = vld [vmem:[%s4 + $0x18] sm:$0xff]
    %vm239 = vcmask 261120
    %v241 = vsel %vm239, %v120, 0
    %v244 = vsel %vm239, %v121, 0
    %246 = vmatprep.subr.mxu0 0.0
    %247 = vmatpush1.msra.mxu0 %v235
    %248 = vmatprep.subr.mxu0 0.0
    %249 = vmatpush1.msra.mxu0 %v236
    %250 = vmatprep.subr.mxu0 0.0
    %251 = vmatpush1.msra.mxu0 %v237
    %252 = vmatprep.subr.mxu0 0.0
    %253 = vmatpush1.msra.mxu0 %v238
    %254 = vmatprep.subr.mxu0 0.0
    %255 = vmatpush1.msra.mxu0 0.0
    %256 = vmatprep.subr.mxu0 0.0
    %257 = vmatpush1.msra.mxu0 0.0
    %258 = vmatprep.subr.mxu0 0.0
    %259 = vmatpush1.msra.mxu0 0.0
    %260 = vmatprep.subr.mxu0 0.0
    %261 = vmatpush1.msra.mxu0 0.0
    %262 = vmatprep.subr.mxu0 0.0
    %263 = vmatpush1.msra.mxu0 0.0
    %264 = vmatprep.subr.mxu0 0.0
    %265 = vmatpush1.msra.mxu0 0.0
    %266 = vmatprep.subr.mxu0 0.0
    %267 = vmatpush1.msra.mxu0 0.0
    %268 = vmatprep.subr.mxu0 0.0
    %269 = vmatpush1.msra.mxu0 0.0
    %270 = vmatprep.subr.mxu0 0.0
    %271 = vmatpush1.msra.mxu0 0.0
    %272 = vmatprep.subr.mxu0 0.0
    %273 = vmatpush1.msra.mxu0 0.0
    %274 = vmatprep.subr.mxu0 0.0
    %275 = vmatpush1.msra.mxu0 0.0
    %276 = vmatprep.subr.mxu0 0.0
    %277 = vmatpush1.msra.mxu0 0.0
    %278 = vmatprep.subr.mxu0 0.0
    %279 = vmatpush1.msra.mxu0 0.0
    %280 = vmatprep.subr.mxu0 0.0
    %281 = vmatpush1.msra.mxu0 0.0
    %282 = vmatprep.subr.mxu0 0.0
    %283 = vmatpush1.msra.mxu0 0.0
    %284 = vmatprep.subr.mxu0 0.0
    %285 = vmatpush1.msra.mxu0 0.0
    %286 = vmatprep.subr.mxu0 0.0
    %287 = vmatpush1.msra.mxu0 0.0
    %288 = vmatprep.subr.mxu0 0.0
    %289 = vmatpush1.msra.mxu0 0.0
    %290 = vmatprep.subr.mxu0 0.0
    %291 = vmatpush1.msra.mxu0 0.0
    %292 = vmatprep.subr.mxu0 0.0
    %293 = vmatpush1.msra.mxu0 0.0
    %294 = vmatprep.subr.mxu0 0.0
    %295 = vmatpush1.msra.mxu0 0.0
    %296 = vmatprep.subr.mxu0 0.0
    %297 = vmatpush1.msra.mxu0 0.0
    %298 = vmatprep.subr.mxu0 0.0
    %299 = vmatpush1.msra.mxu0 0.0
    %300 = vmatprep.subr.mxu0 0.0
    %301 = vmatpush1.msra.mxu0 0.0
    %302 = vmatprep.subr.mxu0 0.0
    %303 = vmatpush1.msra.mxu0 0.0
    %304 = vmatprep.subr.mxu0 0.0
    %305 = vmatpush1.msra.mxu0 0.0
    %306 = vmatprep.subr.mxu0 0.0
    %307 = vmatpush1.msra.mxu0 0.0
    %308 = vmatprep.subr.mxu0 0.0
    %309 = vmatpush1.msra.mxu0 0.0
    %310 = vmatprep.mubr.f32.mxu0 0.0
    %311 = vmatmul.mubr.f32.gmra.mrb[0].mxu0 %v241
    %v312 = vpop.f32.mrb[0].mxu0
    %v313 = vadd.f32 0.0, %v312
    %v314 = vpop.f32.mrb[0].mxu0
    %315 = vmatprep.mubr.f32.mxu0 0.0
    %316 = vmatmul.mubr.f32.gmra.mrb[0].mxu0 %v244
    %v317 = vpop.f32.mrb[0].mxu0
    %v318 = vadd.f32 0.0, %v317
    %v319 = vpop.f32.mrb[0].mxu0
    %320 = vdwg.mxu0
    %v321 = vld [vmem:[%s5] sm:$0xff]
    %v322 = vld [vmem:[%s5 + $0x8] sm:$0xff]
    %v323 = vld [vmem:[%s5 + $0x10] sm:$0xff]
    %v324 = vld [vmem:[%s5 + $0x18] sm:$0xff]
    %325 = vmatprep.subr.mxu0 0.0
    %326 = vmatpush1.msra.mxu0 %v321
    %327 = vmatprep.subr.mxu0 0.0
    %328 = vmatpush1.msra.mxu0 %v322
    %329 = vmatprep.subr.mxu0 0.0
    %330 = vmatpush1.msra.mxu0 %v323
    %331 = vmatprep.subr.mxu0 0.0
    %332 = vmatpush1.msra.mxu0 %v324
    %333 = vmatprep.subr.mxu0 0.0
    %334 = vmatpush1.msra.mxu0 0.0
    %335 = vmatprep.subr.mxu0 0.0
    %336 = vmatpush1.msra.mxu0 0.0
    %337 = vmatprep.subr.mxu0 0.0
    %338 = vmatpush1.msra.mxu0 0.0
    %339 = vmatprep.subr.mxu0 0.0
    %340 = vmatpush1.msra.mxu0 0.0
    %341 = vmatprep.subr.mxu0 0.0
    %342 = vmatpush1.msra.mxu0 0.0
    %343 = vmatprep.subr.mxu0 0.0
    %344 = vmatpush1.msra.mxu0 0.0
    %345 = vmatprep.subr.mxu0 0.0
    %346 = vmatpush1.msra.mxu0 0.0
    %347 = vmatprep.subr.mxu0 0.0
    %348 = vmatpush1.msra.mxu0 0.0
    %349 = vmatprep.subr.mxu0 0.0
    %350 = vmatpush1.msra.mxu0 0.0
    %351 = vmatprep.subr.mxu0 0.0
    %352 = vmatpush1.msra.mxu0 0.0
    %353 = vmatprep.subr.mxu0 0.0
    %354 = vmatpush1.msra.mxu0 0.0
    %355 = vmatprep.subr.mxu0 0.0
    %356 = vmatpush1.msra.mxu0 0.0
    %357 = vmatprep.subr.mxu0 0.0
    %358 = vmatpush1.msra.mxu0 0.0
    %359 = vmatprep.subr.mxu0 0.0
    %360 = vmatpush1.msra.mxu0 0.0
    %361 = vmatprep.subr.mxu0 0.0
    %362 = vmatpush1.msra.mxu0 0.0
    %363 = vmatprep.subr.mxu0 0.0
    %364 = vmatpush1.msra.mxu0 0.0
    %365 = vmatprep.subr.mxu0 0.0
    %366 = vmatpush1.msra.mxu0 0.0
    %367 = vmatprep.subr.mxu0 0.0
    %368 = vmatpush1.msra.mxu0 0.0
    %369 = vmatprep.subr.mxu0 0.0
    %370 = vmatpush1.msra.mxu0 0.0
    %371 = vmatprep.subr.mxu0 0.0
    %372 = vmatpush1.msra.mxu0 0.0
    %373 = vmatprep.subr.mxu0 0.0
    %374 = vmatpush1.msra.mxu0 0.0
    %375 = vmatprep.subr.mxu0 0.0
    %376 = vmatpush1.msra.mxu0 0.0
    %377 = vmatprep.subr.mxu0 0.0
    %378 = vmatpush1.msra.mxu0 0.0
    %379 = vmatprep.subr.mxu0 0.0
    %380 = vmatpush1.msra.mxu0 0.0
    %381 = vmatprep.subr.mxu0 0.0
    %382 = vmatpush1.msra.mxu0 0.0
    %383 = vmatprep.subr.mxu0 0.0
    %384 = vmatpush1.msra.mxu0 0.0
    %385 = vmatprep.subr.mxu0 0.0
    %386 = vmatpush1.msra.mxu0 0.0
    %387 = vmatprep.subr.mxu0 0.0
    %388 = vmatpush1.msra.mxu0 0.0
    %389 = vmatprep.mubr.f32.mxu0 0.0
    %390 = vmatmul.mubr.f32.gmra.mrb[0].mxu0 %v241
    %v391 = vpop.f32.mrb[0].mxu0
    %v392 = vadd.f32 0.0, %v391
    %v393 = vpop.f32.mrb[0].mxu0
    %394 = vmatprep.mubr.f32.mxu0 0.0
    %395 = vmatmul.mubr.f32.gmra.mrb[0].mxu0 %v244
    %v396 = vpop.f32.mrb[0].mxu0
    %v397 = vadd.f32 0.0, %v396
    %v398 = vpop.f32.mrb[0].mxu0
    %399 = vdwg.mxu0
    %v400 = vld [vmem:[%s6] sm:$0xff]
    %v401 = vld [vmem:[%s6 + $0x8] sm:$0xff]
    %v402 = vld [vmem:[%s6 + $0x10] sm:$0xff]
    %v403 = vld [vmem:[%s6 + $0x18] sm:$0xff]
    %v404 = vld [vmem:[%s6 + $0x20] sm:$0xff]
    %v405 = vld [vmem:[%s6 + $0x28] sm:$0xff]
    %v406 = vld [vmem:[%s6 + $0x30] sm:$0xff]
    %v407 = vld [vmem:[%s6 + $0x38] sm:$0xff]
    %v408 = vld [vmem:[%s6 + $0x40] sm:$0xff]
    %v409 = vld [vmem:[%s6 + $0x48] sm:$0xff]
    %v410 = vld [vmem:[%s6 + $0x50] sm:$0xff]
    %v411 = vld [vmem:[%s6 + $0x58] sm:$0xff]
    %v412 = vld [vmem:[%s6 + $0x60] sm:$0xff]
    %v413 = vld [vmem:[%s6 + $0x68] sm:$0xff]
    %v414 = vld [vmem:[%s6 + $0x70] sm:$0xff]
    %v415 = vld [vmem:[%s6 + $0x78] sm:$0xff]
    %vm416 = vcmask 523264
    %v418 = vsel %vm416, %v313, 0
    %v421 = vsel %vm416, %v318, 0
    %423 = vmatprep.subr.mxu0 %v401
    %424 = vmatpush1.msra.mxu0 %v400
    %425 = vmatprep.subr.mxu0 %v403
    %426 = vmatpush1.msra.mxu0 %v402
    %427 = vmatprep.subr.mxu0 %v405
    %428 = vmatpush1.msra.mxu0 %v404
    %429 = vmatprep.subr.mxu0 %v407
    %430 = vmatpush1.msra.mxu0 %v406
    %431 = vmatprep.subr.mxu0 %v409
    %432 = vmatpush1.msra.mxu0 %v408
    %433 = vmatprep.subr.mxu0 %v411
    %434 = vmatpush1.msra.mxu0 %v410
    %435 = vmatprep.subr.mxu0 %v413
    %436 = vmatpush1.msra.mxu0 %v412
    %437 = vmatprep.subr.mxu0 %v415
    %438 = vmatpush1.msra.mxu0 %v414
    %439 = vmatprep.subr.mxu0 0.0
    %440 = vmatpush1.msra.mxu0 0.0
    %441 = vmatprep.subr.mxu0 0.0
    %442 = vmatpush1.msra.mxu0 0.0
    %443 = vmatprep.subr.mxu0 0.0
    %444 = vmatpush1.msra.mxu0 0.0
    %445 = vmatprep.subr.mxu0 0.0
    %446 = vmatpush1.msra.mxu0 0.0
    %447 = vmatprep.subr.mxu0 0.0
    %448 = vmatpush1.msra.mxu0 0.0
    %449 = vmatprep.subr.mxu0 0.0
    %450 = vmatpush1.msra.mxu0 0.0
    %451 = vmatprep.subr.mxu0 0.0
    %452 = vmatpush1.msra.mxu0 0.0
    %453 = vmatprep.subr.mxu0 0.0
    %454 = vmatpush1.msra.mxu0 0.0
    %455 = vmatprep.subr.mxu0 0.0
    %456 = vmatpush1.msra.mxu0 0.0
    %457 = vmatprep.subr.mxu0 0.0
    %458 = vmatpush1.msra.mxu0 0.0
    %459 = vmatprep.subr.mxu0 0.0
    %460 = vmatpush1.msra.mxu0 0.0
    %461 = vmatprep.subr.mxu0 0.0
    %462 = vmatpush1.msra.mxu0 0.0
    %463 = vmatprep.subr.mxu0 0.0
    %464 = vmatpush1.msra.mxu0 0.0
    %465 = vmatprep.subr.mxu0 0.0
    %466 = vmatpush1.msra.mxu0 0.0
    %467 = vmatprep.subr.mxu0 0.0
    %468 = vmatpush1.msra.mxu0 0.0
    %469 = vmatprep.subr.mxu0 0.0
    %470 = vmatpush1.msra.mxu0 0.0
    %471 = vmatprep.subr.mxu0 0.0
    %472 = vmatpush1.msra.mxu0 0.0
    %473 = vmatprep.subr.mxu0 0.0
    %474 = vmatpush1.msra.mxu0 0.0
    %475 = vmatprep.subr.mxu0 0.0
    %476 = vmatpush1.msra.mxu0 0.0
    %477 = vmatprep.subr.mxu0 0.0
    %478 = vmatpush1.msra.mxu0 0.0
    %479 = vmatprep.subr.mxu0 0.0
    %480 = vmatpush1.msra.mxu0 0.0
    %481 = vmatprep.subr.mxu0 0.0
    %482 = vmatpush1.msra.mxu0 0.0
    %483 = vmatprep.subr.mxu0 0.0
    %484 = vmatpush1.msra.mxu0 0.0
    %485 = vmatprep.subr.mxu0 0.0
    %486 = vmatpush1.msra.mxu0 0.0
    %487 = vmatprep.mubr.f32.mxu0 0.0
    %488 = vmatmul.mubr.f32.gmra.mrb[0].mxu0 %v418
    %v489 = vpop.f32.mrb[0].mxu0
    %v490 = vadd.f32 0.0, %v489
    %v491 = vpop.f32.mrb[0].mxu0
    %v492 = vadd.f32 0.0, %v491
    %493 = vmatprep.mubr.f32.mxu0 0.0
    %494 = vmatmul.mubr.f32.gmra.mrb[0].mxu0 %v421
    %v495 = vpop.f32.mrb[0].mxu0
    %v496 = vadd.f32 0.0, %v495
    %v497 = vpop.f32.mrb[0].mxu0
    %v498 = vadd.f32 0.0, %v497
    %499 = vdwg.mxu0
    %v500 = vld [vmem:[%s7] sm:$0xff]
    %v501 = vld [vmem:[%s7 + $0x8] sm:$0xff]
    %v502 = vld [vmem:[%s7 + $0x10] sm:$0xff]
    %v503 = vld [vmem:[%s7 + $0x18] sm:$0xff]
    %v505 = vsel %vm239, %v392, 0
    %v508 = vsel %vm239, %v397, 0
    %510 = vmatprep.subr.mxu0 0.0
    %511 = vmatpush1.msra.mxu0 %v500
    %512 = vmatprep.subr.mxu0 0.0
    %513 = vmatpush1.msra.mxu0 %v501
    %514 = vmatprep.subr.mxu0 0.0
    %515 = vmatpush1.msra.mxu0 %v502
    %516 = vmatprep.subr.mxu0 0.0
    %517 = vmatpush1.msra.mxu0 %v503
    %518 = vmatprep.subr.mxu0 0.0
    %519 = vmatpush1.msra.mxu0 0.0
    %520 = vmatprep.subr.mxu0 0.0
    %521 = vmatpush1.msra.mxu0 0.0
    %522 = vmatprep.subr.mxu0 0.0
    %523 = vmatpush1.msra.mxu0 0.0
    %524 = vmatprep.subr.mxu0 0.0
    %525 = vmatpush1.msra.mxu0 0.0
    %526 = vmatprep.subr.mxu0 0.0
    %527 = vmatpush1.msra.mxu0 0.0
    %528 = vmatprep.subr.mxu0 0.0
    %529 = vmatpush1.msra.mxu0 0.0
    %530 = vmatprep.subr.mxu0 0.0
    %531 = vmatpush1.msra.mxu0 0.0
    %532 = vmatprep.subr.mxu0 0.0
    %533 = vmatpush1.msra.mxu0 0.0
    %534 = vmatprep.subr.mxu0 0.0
    %535 = vmatpush1.msra.mxu0 0.0
    %536 = vmatprep.subr.mxu0 0.0
    %537 = vmatpush1.msra.mxu0 0.0
    %538 = vmatprep.subr.mxu0 0.0
    %539 = vmatpush1.msra.mxu0 0.0
    %540 = vmatprep.subr.mxu0 0.0
    %541 = vmatpush1.msra.mxu0 0.0
    %542 = vmatprep.subr.mxu0 0.0
    %543 = vmatpush1.msra.mxu0 0.0
    %544 = vmatprep.subr.mxu0 0.0
    %545 = vmatpush1.msra.mxu0 0.0
    %546 = vmatprep.subr.mxu0 0.0
    %547 = vmatpush1.msra.mxu0 0.0
    %548 = vmatprep.subr.mxu0 0.0
    %549 = vmatpush1.msra.mxu0 0.0
    %550 = vmatprep.subr.mxu0 0.0
    %551 = vmatpush1.msra.mxu0 0.0
    %552 = vmatprep.subr.mxu0 0.0
    %553 = vmatpush1.msra.mxu0 0.0
    %554 = vmatprep.subr.mxu0 0.0
    %555 = vmatpush1.msra.mxu0 0.0
    %556 = vmatprep.subr.mxu0 0.0
    %557 = vmatpush1.msra.mxu0 0.0
    %558 = vmatprep.subr.mxu0 0.0
    %559 = vmatpush1.msra.mxu0 0.0
    %560 = vmatprep.subr.mxu0 0.0
    %561 = vmatpush1.msra.mxu0 0.0
    %562 = vmatprep.subr.mxu0 0.0
    %563 = vmatpush1.msra.mxu0 0.0
    %564 = vmatprep.subr.mxu0 0.0
    %565 = vmatpush1.msra.mxu0 0.0
    %566 = vmatprep.subr.mxu0 0.0
    %567 = vmatpush1.msra.mxu0 0.0
    %568 = vmatprep.subr.mxu0 0.0
    %569 = vmatpush1.msra.mxu0 0.0
    %570 = vmatprep.subr.mxu0 0.0
    %571 = vmatpush1.msra.mxu0 0.0
    %572 = vmatprep.subr.mxu0 0.0
    %573 = vmatpush1.msra.mxu0 0.0
    %574 = vmatprep.mubr.f32.mxu0 0.0
    %575 = vmatmul.mubr.f32.gmra.mrb[0].mxu0 %v505
    %v576 = vpop.f32.mrb[0].mxu0
    %v577 = vadd.f32 0.0, %v576
    %v578 = vpop.f32.mrb[0].mxu0
    %579 = vmatprep.mubr.f32.mxu0 0.0
    %580 = vmatmul.mubr.f32.gmra.mrb[0].mxu0 %v508
    %v581 = vpop.f32.mrb[0].mxu0
    %v582 = vadd.f32 0.0, %v581
    %v583 = vpop.f32.mrb[0].mxu0
    %584 = vdwg.mxu0
    %v585 = vmul.f32 %v225, %v490
    %v586 = vmul.f32 %v227, %v492
    %v587 = vmul.f32 %v231, %v496
    %v588 = vmul.f32 %v233, %v498
    %v589 = vld [vmem:[%s8] sm:$0xff]
    %v590 = vld [vmem:[%s8 + $0x8] sm:$0xff]
    %v591 = vld [vmem:[%s8 + $0x10] sm:$0xff]
    %v592 = vld [vmem:[%s8 + $0x18] sm:$0xff]
    %v593 = vld [vmem:[%s8 + $0x20] sm:$0xff]
    %v594 = vld [vmem:[%s8 + $0x28] sm:$0xff]
    %v595 = vld [vmem:[%s8 + $0x30] sm:$0xff]
    %v596 = vld [vmem:[%s8 + $0x38] sm:$0xff]
    %v597 = vld [vmem:[%s8 + $0x40] sm:$0xff]
    %v598 = vld [vmem:[%s8 + $0x48] sm:$0xff]
    %v599 = vld [vmem:[%s8 + $0x50] sm:$0xff]
    %v600 = vld [vmem:[%s8 + $0x58] sm:$0xff]
    %v601 = vld [vmem:[%s8 + $0x60] sm:$0xff]
    %v602 = vld [vmem:[%s8 + $0x68] sm:$0xff]
    %v603 = vld [vmem:[%s8 + $0x70] sm:$0xff]
    %v604 = vld [vmem:[%s8 + $0x78] sm:$0xff]
    %v605 = vld [vmem:[%s8 + $0x80] sm:$0xff]
    %v606 = vld [vmem:[%s8 + $0x88] sm:$0xff]
    %v607 = vld [vmem:[%s8 + $0x90] sm:$0xff]
    %v608 = vld [vmem:[%s8 + $0x98] sm:$0xff]
    %v609 = vld [vmem:[%s8 + $0xa0] sm:$0xff]
    %v610 = vld [vmem:[%s8 + $0xa8] sm:$0xff]
    %v611 = vld [vmem:[%s8 + $0xb0] sm:$0xff]
    %v612 = vld [vmem:[%s8 + $0xb8] sm:$0xff]
    %v613 = vld [vmem:[%s8 + $0xc0] sm:$0xff]
    %v614 = vld [vmem:[%s8 + $0xc8] sm:$0xff]
    %v615 = vld [vmem:[%s8 + $0xd0] sm:$0xff]
    %v616 = vld [vmem:[%s8 + $0xd8] sm:$0xff]
    %v617 = vld [vmem:[%s8 + $0xe0] sm:$0xff]
    %v618 = vld [vmem:[%s8 + $0xe8] sm:$0xff]
    %v619 = vld [vmem:[%s8 + $0xf0] sm:$0xff]
    %v620 = vld [vmem:[%s8 + $0xf8] sm:$0xff]
    %621 = vmatprep.subr.mxu0 0.0
    %622 = vmatpush1.msra.mxu0 %v589
    %623 = vmatprep.subr.mxu0 0.0
    %624 = vmatpush1.msra.mxu0 %v590
    %625 = vmatprep.subr.mxu0 0.0
    %626 = vmatpush1.msra.mxu0 %v591
    %627 = vmatprep.subr.mxu0 0.0
    %628 = vmatpush1.msra.mxu0 %v592
    %629 = vmatprep.subr.mxu0 0.0
    %630 = vmatpush1.msra.mxu0 %v593
    %631 = vmatprep.subr.mxu0 0.0
    %632 = vmatpush1.msra.mxu0 %v594
    %633 = vmatprep.subr.mxu0 0.0
    %634 = vmatpush1.msra.mxu0 %v595
    %635 = vmatprep.subr.mxu0 0.0
    %636 = vmatpush1.msra.mxu0 %v596
    %637 = vmatprep.subr.mxu0 0.0
    %638 = vmatpush1.msra.mxu0 %v597
    %639 = vmatprep.subr.mxu0 0.0
    %640 = vmatpush1.msra.mxu0 %v598
    %641 = vmatprep.subr.mxu0 0.0
    %642 = vmatpush1.msra.mxu0 %v599
    %643 = vmatprep.subr.mxu0 0.0
    %644 = vmatpush1.msra.mxu0 %v600
    %645 = vmatprep.subr.mxu0 0.0
    %646 = vmatpush1.msra.mxu0 %v601
    %647 = vmatprep.subr.mxu0 0.0
    %648 = vmatpush1.msra.mxu0 %v602
    %649 = vmatprep.subr.mxu0 0.0
    %650 = vmatpush1.msra.mxu0 %v603
    %651 = vmatprep.subr.mxu0 0.0
    %652 = vmatpush1.msra.mxu0 %v604
    %653 = vmatprep.subr.mxu0 0.0
    %654 = vmatpush1.msra.mxu0 %v605
    %655 = vmatprep.subr.mxu0 0.0
    %656 = vmatpush1.msra.mxu0 %v606
    %657 = vmatprep.subr.mxu0 0.0
    %658 = vmatpush1.msra.mxu0 %v607
    %659 = vmatprep.subr.mxu0 0.0
    %660 = vmatpush1.msra.mxu0 %v608
    %661 = vmatprep.subr.mxu0 0.0
    %662 = vmatpush1.msra.mxu0 %v609
    %663 = vmatprep.subr.mxu0 0.0
    %664 = vmatpush1.msra.mxu0 %v610
    %665 = vmatprep.subr.mxu0 0.0
    %666 = vmatpush1.msra.mxu0 %v611
    %667 = vmatprep.subr.mxu0 0.0
    %668 = vmatpush1.msra.mxu0 %v612
    %669 = vmatprep.subr.mxu0 0.0
    %670 = vmatpush1.msra.mxu0 %v613
    %671 = vmatprep.subr.mxu0 0.0
    %672 = vmatpush1.msra.mxu0 %v614
    %673 = vmatprep.subr.mxu0 0.0
    %674 = vmatpush1.msra.mxu0 %v615
    %675 = vmatprep.subr.mxu0 0.0
    %676 = vmatpush1.msra.mxu0 %v616
    %677 = vmatprep.subr.mxu0 0.0
    %678 = vmatpush1.msra.mxu0 %v617
    %679 = vmatprep.subr.mxu0 0.0
    %680 = vmatpush1.msra.mxu0 %v618
    %681 = vmatprep.subr.mxu0 0.0
    %682 = vmatpush1.msra.mxu0 %v619
    %683 = vmatprep.subr.mxu0 0.0
    %684 = vmatpush1.msra.mxu0 %v620
    %685 = vmatprep.mubr.f32.mxu0 %v586
    %686 = vmatmul.mubr.f32.gmra.mrb[0].mxu0 %v585
    %v687 = vpop.f32.mrb[0].mxu0
    %v688 = vadd.f32 0.0, %v687
    %v689 = vpop.f32.mrb[0].mxu0
    %690 = vmatprep.mubr.f32.mxu0 %v588
    %691 = vmatmul.mubr.f32.gmra.mrb[0].mxu0 %v587
    %v692 = vpop.f32.mrb[0].mxu0
    %v693 = vadd.f32 0.0, %v692
    %v694 = vpop.f32.mrb[0].mxu0
    %695 = vdwg.mxu0
    %v696 = vmul.f32 %v688, 0.125
    %v697 = vmul.f32 %v693, 0.125
    %v698 = vld [vmem:[%s9] sm:$0xf]
    %vm699 = vcmask 31744
    %v701 = vsel %vm699, %v696, 0
    %v704 = vsel %vm699, %v697, 0
    %vm706 = vcmask 1043456
    %v708 = vsel %vm706, %v698, 0
    %710 = vmatprep.subr.mxu0 0.0
    %711 = vmatpush1.msra.mxu0 %v708
    %712 = vmatprep.subr.mxu0 0.0
    %713 = vmatpush1.msra.mxu0 0.0
    %714 = vmatprep.subr.mxu0 0.0
    %715 = vmatpush1.msra.mxu0 0.0
    %716 = vmatprep.subr.mxu0 0.0
    %717 = vmatpush1.msra.mxu0 0.0
    %718 = vmatprep.subr.mxu0 0.0
    %719 = vmatpush1.msra.mxu0 0.0
    %720 = vmatprep.subr.mxu0 0.0
    %721 = vmatpush1.msra.mxu0 0.0
    %722 = vmatprep.subr.mxu0 0.0
    %723 = vmatpush1.msra.mxu0 0.0
    %724 = vmatprep.subr.mxu0 0.0
    %725 = vmatpush1.msra.mxu0 0.0
    %726 = vmatprep.subr.mxu0 0.0
    %727 = vmatpush1.msra.mxu0 0.0
    %728 = vmatprep.subr.mxu0 0.0
    %729 = vmatpush1.msra.mxu0 0.0
    %730 = vmatprep.subr.mxu0 0.0
    %731 = vmatpush1.msra.mxu0 0.0
    %732 = vmatprep.subr.mxu0 0.0
    %733 = vmatpush1.msra.mxu0 0.0
    %734 = vmatprep.subr.mxu0 0.0
    %735 = vmatpush1.msra.mxu0 0.0
    %736 = vmatprep.subr.mxu0 0.0
    %737 = vmatpush1.msra.mxu0 0.0
    %738 = vmatprep.subr.mxu0 0.0
    %739 = vmatpush1.msra.mxu0 0.0
    %740 = vmatprep.subr.mxu0 0.0
    %741 = vmatpush1.msra.mxu0 0.0
    %742 = vmatprep.subr.mxu0 0.0
    %743 = vmatpush1.msra.mxu0 0.0
    %744 = vmatprep.subr.mxu0 0.0
    %745 = vmatpush1.msra.mxu0 0.0
    %746 = vmatprep.subr.mxu0 0.0
    %747 = vmatpush1.msra.mxu0 0.0
    %748 = vmatprep.subr.mxu0 0.0
    %749 = vmatpush1.msra.mxu0 0.0
    %750 = vmatprep.subr.mxu0 0.0
    %751 = vmatpush1.msra.mxu0 0.0
    %752 = vmatprep.subr.mxu0 0.0
    %753 = vmatpush1.msra.mxu0 0.0
    %754 = vmatprep.subr.mxu0 0.0
    %755 = vmatpush1.msra.mxu0 0.0
    %756 = vmatprep.subr.mxu0 0.0
    %757 = vmatpush1.msra.mxu0 0.0
    %758 = vmatprep.subr.mxu0 0.0
    %759 = vmatpush1.msra.mxu0 0.0
    %760 = vmatprep.subr.mxu0 0.0
    %761 = vmatpush1.msra.mxu0 0.0
    %762 = vmatprep.subr.mxu0 0.0
    %763 = vmatpush1.msra.mxu0 0.0
    %764 = vmatprep.subr.mxu0 0.0
    %765 = vmatpush1.msra.mxu0 0.0
    %766 = vmatprep.subr.mxu0 0.0
    %767 = vmatpush1.msra.mxu0 0.0
    %768 = vmatprep.subr.mxu0 0.0
    %769 = vmatpush1.msra.mxu0 0.0
    %770 = vmatprep.subr.mxu0 0.0
    %771 = vmatpush1.msra.mxu0 0.0
    %772 = vmatprep.subr.mxu0 0.0
    %773 = vmatpush1.msra.mxu0 0.0
    %774 = vmatprep.mubr.f32.mxu0 0.0
    %775 = vmatmul.mubr.f32.gmra.mrb[0].mxu0 %v701
    %v776 = vpop.f32.mrb[0].mxu0
    %v777 = vadd.f32 0.0, %v776
    %v778 = vpop.f32.mrb[0].mxu0
    %779 = vmatprep.mubr.f32.mxu0 0.0
    %780 = vmatmul.mubr.f32.gmra.mrb[0].mxu0 %v704
    %v781 = vpop.f32.mrb[0].mxu0
    %v782 = vadd.f32 0.0, %v781
    %v783 = vpop.f32.mrb[0].mxu0
    %784 = vdwg.mxu0
    %v785 = vxor.u32 %v777, 2147483648
    %v786 = vxor.u32 %v782, 2147483648
    %v787 = vmul.f32 %v785, 1.442695
    %v788 = vpow.pop %v787
    %v789 = vmul.f32 %v786, 1.442695
    %v790 = vpow.pop %v789
    %v791 = vadd.f32 %v788, 1.0
    %v792 = vadd.f32 %v790, 1.0
    %v793 = vrcp.pop %v791
    %v794 = vmul.f32 1.0, %v793
    %v795 = vrcp.pop %v792
    %v796 = vmul.f32 1.0, %v795
    %v797 = vmul.f32 %v794, %v577
    %v798 = vmul.f32 %v796, %v582
    %v799 = vld [vmem:[%s10] sm:$0xf]
    %v801 = vsel %vm706, %v799, 0
    %803 = vmatprep.subr.mxu0 0.0
    %804 = vmatpush1.msra.mxu0 %v801
    %805 = vmatprep.subr.mxu0 0.0
    %806 = vmatpush1.msra.mxu0 0.0
    %807 = vmatprep.subr.mxu0 0.0
    %808 = vmatpush1.msra.mxu0 0.0
    %809 = vmatprep.subr.mxu0 0.0
    %810 = vmatpush1.msra.mxu0 0.0
    %811 = vmatprep.subr.mxu0 0.0
    %812 = vmatpush1.msra.mxu0 0.0
    %813 = vmatprep.subr.mxu0 0.0
    %814 = vmatpush1.msra.mxu0 0.0
    %815 = vmatprep.subr.mxu0 0.0
    %816 = vmatpush1.msra.mxu0 0.0
    %817 = vmatprep.subr.mxu0 0.0
    %818 = vmatpush1.msra.mxu0 0.0
    %819 = vmatprep.subr.mxu0 0.0
    %820 = vmatpush1.msra.mxu0 0.0
    %821 = vmatprep.subr.mxu0 0.0
    %822 = vmatpush1.msra.mxu0 0.0
    %823 = vmatprep.subr.mxu0 0.0
    %824 = vmatpush1.msra.mxu0 0.0
    %825 = vmatprep.subr.mxu0 0.0
    %826 = vmatpush1.msra.mxu0 0.0
    %827 = vmatprep.subr.mxu0 0.0
    %828 = vmatpush1.msra.mxu0 0.0
    %829 = vmatprep.subr.mxu0 0.0
    %830 = vmatpush1.msra.mxu0 0.0
    %831 = vmatprep.subr.mxu0 0.0
    %832 = vmatpush1.msra.mxu0 0.0
    %833 = vmatprep.subr.mxu0 0.0
    %834 = vmatpush1.msra.mxu0 0.0
    %835 = vmatprep.subr.mxu0 0.0
    %836 = vmatpush1.msra.mxu0 0.0
    %837 = vmatprep.subr.mxu0 0.0
    %838 = vmatpush1.msra.mxu0 0.0
    %839 = vmatprep.subr.mxu0 0.0
    %840 = vmatpush1.msra.mxu0 0.0
    %841 = vmatprep.subr.mxu0 0.0
    %842 = vmatpush1.msra.mxu0 0.0
    %843 = vmatprep.subr.mxu0 0.0
    %844 = vmatpush1.msra.mxu0 0.0
    %845 = vmatprep.subr.mxu0 0.0
    %846 = vmatpush1.msra.mxu0 0.0
    %847 = vmatprep.subr.mxu0 0.0
    %848 = vmatpush1.msra.mxu0 0.0
    %849 = vmatprep.subr.mxu0 0.0
    %850 = vmatpush1.msra.mxu0 0.0
    %851 = vmatprep.subr.mxu0 0.0
    %852 = vmatpush1.msra.mxu0 0.0
    %853 = vmatprep.subr.mxu0 0.0
    %854 = vmatpush1.msra.mxu0 0.0
    %855 = vmatprep.subr.mxu0 0.0
    %856 = vmatpush1.msra.mxu0 0.0
    %857 = vmatprep.subr.mxu0 0.0
    %858 = vmatpush1.msra.mxu0 0.0
    %859 = vmatprep.subr.mxu0 0.0
    %860 = vmatpush1.msra.mxu0 0.0
    %861 = vmatprep.subr.mxu0 0.0
    %862 = vmatpush1.msra.mxu0 0.0
    %863 = vmatprep.subr.mxu0 0.0
    %864 = vmatpush1.msra.mxu0 0.0
    %865 = vmatprep.subr.mxu0 0.0
    %866 = vmatpush1.msra.mxu0 0.0
    %867 = vmatprep.mubr.f32.mxu0 0.0
    %868 = vmatmul.mubr.f32.gmra.mrb[0].mxu0 %v701
    %v869 = vpop.f32.mrb[0].mxu0
    %v870 = vadd.f32 0.0, %v869
    %v871 = vpop.f32.mrb[0].mxu0
    %872 = vmatprep.mubr.f32.mxu0 0.0
    %873 = vmatmul.mubr.f32.gmra.mrb[0].mxu0 %v704
    %v874 = vpop.f32.mrb[0].mxu0
    %v875 = vadd.f32 0.0, %v874
    %v876 = vpop.f32.mrb[0].mxu0
    %877 = vdwg.mxu0
    %v878 = vld [vmem:[%s11] sm:$0xf]
    %v880 = vsel %vm706, %v878, 0
    %882 = vmatprep.subr.mxu0 0.0
    %883 = vmatpush1.msra.mxu0 %v880
    %884 = vmatprep.subr.mxu0 0.0
    %885 = vmatpush1.msra.mxu0 0.0
    %886 = vmatprep.subr.mxu0 0.0
    %887 = vmatpush1.msra.mxu0 0.0
    %888 = vmatprep.subr.mxu0 0.0
    %889 = vmatpush1.msra.mxu0 0.0
    %890 = vmatprep.subr.mxu0 0.0
    %891 = vmatpush1.msra.mxu0 0.0
    %892 = vmatprep.subr.mxu0 0.0
    %893 = vmatpush1.msra.mxu0 0.0
    %894 = vmatprep.subr.mxu0 0.0
    %895 = vmatpush1.msra.mxu0 0.0
    %896 = vmatprep.subr.mxu0 0.0
    %897 = vmatpush1.msra.mxu0 0.0
    %898 = vmatprep.subr.mxu0 0.0
    %899 = vmatpush1.msra.mxu0 0.0
    %900 = vmatprep.subr.mxu0 0.0
    %901 = vmatpush1.msra.mxu0 0.0
    %902 = vmatprep.subr.mxu0 0.0
    %903 = vmatpush1.msra.mxu0 0.0
    %904 = vmatprep.subr.mxu0 0.0
    %905 = vmatpush1.msra.mxu0 0.0
    %906 = vmatprep.subr.mxu0 0.0
    %907 = vmatpush1.msra.mxu0 0.0
    %908 = vmatprep.subr.mxu0 0.0
    %909 = vmatpush1.msra.mxu0 0.0
    %910 = vmatprep.subr.mxu0 0.0
    %911 = vmatpush1.msra.mxu0 0.0
    %912 = vmatprep.subr.mxu0 0.0
    %913 = vmatpush1.msra.mxu0 0.0
    %914 = vmatprep.subr.mxu0 0.0
    %915 = vmatpush1.msra.mxu0 0.0
    %916 = vmatprep.subr.mxu0 0.0
    %917 = vmatpush1.msra.mxu0 0.0
    %918 = vmatprep.subr.mxu0 0.0
    %919 = vmatpush1.msra.mxu0 0.0
    %920 = vmatprep.subr.mxu0 0.0
    %921 = vmatpush1.msra.mxu0 0.0
    %922 = vmatprep.subr.mxu0 0.0
    %923 = vmatpush1.msra.mxu0 0.0
    %924 = vmatprep.subr.mxu0 0.0
    %925 = vmatpush1.msra.mxu0 0.0
    %926 = vmatprep.subr.mxu0 0.0
    %927 = vmatpush1.msra.mxu0 0.0
    %928 = vmatprep.subr.mxu0 0.0
    %929 = vmatpush1.msra.mxu0 0.0
    %930 = vmatprep.subr.mxu0 0.0
    %931 = vmatpush1.msra.mxu0 0.0
    %932 = vmatprep.subr.mxu0 0.0
    %933 = vmatpush1.msra.mxu0 0.0
    %934 = vmatprep.subr.mxu0 0.0
    %935 = vmatpush1.msra.mxu0 0.0
    %936 = vmatprep.subr.mxu0 0.0
    %937 = vmatpush1.msra.mxu0 0.0
    %938 = vmatprep.subr.mxu0 0.0
    %939 = vmatpush1.msra.mxu0 0.0
    %940 = vmatprep.subr.mxu0 0.0
    %941 = vmatpush1.msra.mxu0 0.0
    %942 = vmatprep.subr.mxu0 0.0
    %943 = vmatpush1.msra.mxu0 0.0
    %944 = vmatprep.subr.mxu0 0.0
    %945 = vmatpush1.msra.mxu0 0.0
    %946 = vmatprep.mubr.f32.mxu0 0.0
    %947 = vmatmul.mubr.f32.gmra.mrb[0].mxu0 %v701
    %v948 = vpop.f32.mrb[0].mxu0
    %v949 = vadd.f32 0.0, %v948
    %v950 = vpop.f32.mrb[0].mxu0
    %951 = vmatprep.mubr.f32.mxu0 0.0
    %952 = vmatmul.mubr.f32.gmra.mrb[0].mxu0 %v704
    %v953 = vpop.f32.mrb[0].mxu0
    %v954 = vadd.f32 0.0, %v953
    %v955 = vpop.f32.mrb[0].mxu0
    %956 = vdwg.mxu0
    %vm957 = vcmp.le.f32.partialorder %v870, %v949
    %vm958 = vcmp.le.f32.partialorder %v875, %v954
    %v959 = vsel %vm957, 1, 0
    %v960 = vsel %vm958, 1, 0
    %v961 = vcvt.s32.f32 %v959
    %v962 = vcvt.s32.f32 %v960
    %v963 = vld [vmem:[%s12] sm:$0x1]
    %v965 = vlaneseq
    %v966 = vshrl.u32 %v965, 7
    %v967 = vsub.s32 0, %v966
    %v968 = vrot.slane %v963, %v967
    %v970 = vmul.f32 %v961, %v968
    %v971 = vmul.f32 %v962, %v968
    %vm972 = vcmp.lt.f32.partialorder %v870, %v949
    %vm973 = vcmp.lt.f32.partialorder %v875, %v954
    %v974 = vsel %vm972, 1, 0
    %v975 = vsel %vm973, 1, 0
    %v976 = vcvt.s32.f32 %v974
    %v977 = vcvt.s32.f32 %v975
    %v978 = vld [vmem:[%s13] sm:$0x1]
    %v980 = vlaneseq
    %v981 = vshrl.u32 %v980, 7
    %v982 = vsub.s32 0, %v981
    %v983 = vrot.slane %v978, %v982
    %v985 = vmul.f32 %v976, %v983
    %v986 = vmul.f32 %v977, %v983
    %v987 = vadd.f32 %v970, %v985
    %v988 = vadd.f32 %v971, %v986
    %v989 = vld [vmem:[%s14] sm:$0xff]
    %v990 = vld [vmem:[%s14 + $0x8] sm:$0xff]
    %vm991 = vcmask 130048
    %v993 = vsel %vm991, %v987, 0
    %v996 = vsel %vm991, %v988, 0
    %998 = vmatprep.subr.mxu0 0.0
    %999 = vmatpush1.msra.mxu0 %v989
    %1000 = vmatprep.subr.mxu0 0.0
    %1001 = vmatpush1.msra.mxu0 %v990
    %1002 = vmatprep.subr.mxu0 0.0
    %1003 = vmatpush1.msra.mxu0 0.0
    %1004 = vmatprep.subr.mxu0 0.0
    %1005 = vmatpush1.msra.mxu0 0.0
    %1006 = vmatprep.subr.mxu0 0.0
    %1007 = vmatpush1.msra.mxu0 0.0
    %1008 = vmatprep.subr.mxu0 0.0
    %1009 = vmatpush1.msra.mxu0 0.0
    %1010 = vmatprep.subr.mxu0 0.0
    %1011 = vmatpush1.msra.mxu0 0.0
    %1012 = vmatprep.subr.mxu0 0.0
    %1013 = vmatpush1.msra.mxu0 0.0
    %1014 = vmatprep.subr.mxu0 0.0
    %1015 = vmatpush1.msra.mxu0 0.0
    %1016 = vmatprep.subr.mxu0 0.0
    %1017 = vmatpush1.msra.mxu0 0.0
    %1018 = vmatprep.subr.mxu0 0.0
    %1019 = vmatpush1.msra.mxu0 0.0
    %1020 = vmatprep.subr.mxu0 0.0
    %1021 = vmatpush1.msra.mxu0 0.0
    %1022 = vmatprep.subr.mxu0 0.0
    %1023 = vmatpush1.msra.mxu0 0.0
    %1024 = vmatprep.subr.mxu0 0.0
    %1025 = vmatpush1.msra.mxu0 0.0
    %1026 = vmatprep.subr.mxu0 0.0
    %1027 = vmatpush1.msra.mxu0 0.0
    %1028 = vmatprep.subr.mxu0 0.0
    %1029 = vmatpush1.msra.mxu0 0.0
    %1030 = vmatprep.subr.mxu0 0.0
    %1031 = vmatpush1.msra.mxu0 0.0
    %1032 = vmatprep.subr.mxu0 0.0
    %1033 = vmatpush1.msra.mxu0 0.0
    %1034 = vmatprep.subr.mxu0 0.0
    %1035 = vmatpush1.msra.mxu0 0.0
    %1036 = vmatprep.subr.mxu0 0.0
    %1037 = vmatpush1.msra.mxu0 0.0
    %1038 = vmatprep.subr.mxu0 0.0
    %1039 = vmatpush1.msra.mxu0 0.0
    %1040 = vmatprep.subr.mxu0 0.0
    %1041 = vmatpush1.msra.mxu0 0.0
    %1042 = vmatprep.subr.mxu0 0.0
    %1043 = vmatpush1.msra.mxu0 0.0
    %1044 = vmatprep.subr.mxu0 0.0
    %1045 = vmatpush1.msra.mxu0 0.0
    %1046 = vmatprep.subr.mxu0 0.0
    %1047 = vmatpush1.msra.mxu0 0.0
    %1048 = vmatprep.subr.mxu0 0.0
    %1049 = vmatpush1.msra.mxu0 0.0
    %1050 = vmatprep.subr.mxu0 0.0
    %1051 = vmatpush1.msra.mxu0 0.0
    %1052 = vmatprep.subr.mxu0 0.0
    %1053 = vmatpush1.msra.mxu0 0.0
    %1054 = vmatprep.subr.mxu0 0.0
    %1055 = vmatpush1.msra.mxu0 0.0
    %1056 = vmatprep.subr.mxu0 0.0
    %1057 = vmatpush1.msra.mxu0 0.0
    %1058 = vmatprep.subr.mxu0 0.0
    %1059 = vmatpush1.msra.mxu0 0.0
    %1060 = vmatprep.subr.mxu0 0.0
    %1061 = vmatpush1.msra.mxu0 0.0
    %1062 = vmatprep.mubr.f32.mxu0 0.0
    %1063 = vmatmul.mubr.f32.gmra.mrb[0].mxu0 %v993
    %v1064 = vpop.f32.mrb[0].mxu0
    %v1065 = vadd.f32 0.0, %v1064
    %v1066 = vpop.f32.mrb[0].mxu0
    %1067 = vmatprep.mubr.f32.mxu0 0.0
    %1068 = vmatmul.mubr.f32.gmra.mrb[0].mxu0 %v996
    %v1069 = vpop.f32.mrb[0].mxu0
    %v1070 = vadd.f32 0.0, %v1069
    %v1071 = vpop.f32.mrb[0].mxu0
    %1072 = vdwg.mxu0
    %vm1073 = vcmp.ge.f32.partialorder %v1065, 2.0
    %vm1074 = vcmp.ge.f32.partialorder %v1070, 2.0
    %v1075 = vsel %vm1073, 1, 0
    %v1076 = vsel %vm1074, 1, 0
    %v1077 = vcvt.s32.f32 %v1075
    %v1078 = vcvt.s32.f32 %v1076
    %v1079 = vld [vmem:[#allocation2] sm:$0xff]
    %v1080 = vld [vmem:[#allocation2 + $0x8] sm:$0xff]
    %v1081 = vld [vmem:[#allocation2 + $0x10] sm:$0xff]
    %v1082 = vld [vmem:[#allocation2 + $0x18] sm:$0xff]
    %v1083 = vld [vmem:[#allocation2 + $0x20] sm:$0xff]
    %v1084 = vld [vmem:[#allocation2 + $0x28] sm:$0xff]
    %v1085 = vld [vmem:[#allocation2 + $0x30] sm:$0xff]
    %v1086 = vld [vmem:[#allocation2 + $0x38] sm:$0xff]
    %v1087 = vld [vmem:[#allocation2 + $0x40] sm:$0xff]
    %v1088 = vld [vmem:[#allocation2 + $0x48] sm:$0xff]
    %v1089 = vld [vmem:[#allocation2 + $0x50] sm:$0xff]
    %v1090 = vld [vmem:[#allocation2 + $0x58] sm:$0xff]
    %v1091 = vld [vmem:[#allocation2 + $0x60] sm:$0xff]
    %v1092 = vld [vmem:[#allocation2 + $0x68] sm:$0xff]
    %v1093 = vld [vmem:[#allocation2 + $0x70] sm:$0xff]
    %v1094 = vld [vmem:[#allocation2 + $0x78] sm:$0xff]
    %v1095 = vld [vmem:[#allocation2 + $0x80] sm:$0xff]
    %v1096 = vld [vmem:[#allocation2 + $0x88] sm:$0xff]
    %v1097 = vld [vmem:[#allocation2 + $0x90] sm:$0xff]
    %v1098 = vld [vmem:[#allocation2 + $0x98] sm:$0xff]
    %v1099 = vld [vmem:[#allocation2 + $0xa0] sm:$0xff]
    %v1100 = vld [vmem:[#allocation2 + $0xa8] sm:$0xff]
    %v1101 = vld [vmem:[#allocation2 + $0xb0] sm:$0xff]
    %v1102 = vld [vmem:[#allocation2 + $0xb8] sm:$0xff]
    %v1103 = vld [vmem:[#allocation2 + $0xc0] sm:$0xff]
    %v1104 = vld [vmem:[#allocation2 + $0xc8] sm:$0xff]
    %v1105 = vld [vmem:[#allocation2 + $0xd0] sm:$0xff]
    %v1106 = vld [vmem:[#allocation2 + $0xd8] sm:$0xff]
    %v1107 = vld [vmem:[#allocation2 + $0xe0] sm:$0xff]
    %v1108 = vld [vmem:[#allocation2 + $0xe8] sm:$0xff]
    %v1109 = vld [vmem:[#allocation2 + $0xf0] sm:$0xff]
    %v1110 = vld [vmem:[#allocation2 + $0xf8] sm:$0xff]
    %v1111 = vld [vmem:[#allocation2 + $0x100] sm:$0xff]
    %v1112 = vld [vmem:[#allocation2 + $0x108] sm:$0xff]
    %v1113 = vld [vmem:[#allocation2 + $0x110] sm:$0xff]
    %v1114 = vld [vmem:[#allocation2 + $0x118] sm:$0xff]
    %v1115 = vld [vmem:[#allocation2 + $0x120] sm:$0xff]
    %v1116 = vld [vmem:[#allocation2 + $0x128] sm:$0xff]
    %v1117 = vld [vmem:[#allocation2 + $0x130] sm:$0xff]
    %v1118 = vld [vmem:[#allocation2 + $0x138] sm:$0xff]
    %v1119 = vld [vmem:[#allocation2 + $0x140] sm:$0xff]
    %v1120 = vld [vmem:[#allocation2 + $0x148] sm:$0xff]
    %v1121 = vld [vmem:[#allocation2 + $0x150] sm:$0xff]
    %v1122 = vld [vmem:[#allocation2 + $0x158] sm:$0xff]
    %v1123 = vld [vmem:[#allocation2 + $0x160] sm:$0xff]
    %v1124 = vld [vmem:[#allocation2 + $0x168] sm:$0xff]
    %v1125 = vld [vmem:[#allocation2 + $0x170] sm:$0xff]
    %v1126 = vld [vmem:[#allocation2 + $0x178] sm:$0xff]
    %v1127 = vld [vmem:[#allocation2 + $0x180] sm:$0xff]
    %v1128 = vld [vmem:[#allocation2 + $0x188] sm:$0xff]
    %v1129 = vld [vmem:[#allocation2 + $0x190] sm:$0xff]
    %v1130 = vld [vmem:[#allocation2 + $0x198] sm:$0xff]
    %v1131 = vld [vmem:[#allocation2 + $0x1a0] sm:$0xff]
    %v1132 = vld [vmem:[#allocation2 + $0x1a8] sm:$0xff]
    %v1133 = vld [vmem:[#allocation2 + $0x1b0] sm:$0xff]
    %v1134 = vld [vmem:[#allocation2 + $0x1b8] sm:$0xff]
    %v1135 = vld [vmem:[#allocation2 + $0x1c0] sm:$0xff]
    %v1136 = vld [vmem:[#allocation2 + $0x1c8] sm:$0xff]
    %v1137 = vld [vmem:[#allocation2 + $0x1d0] sm:$0xff]
    %v1138 = vld [vmem:[#allocation2 + $0x1d8] sm:$0xff]
    %v1139 = vld [vmem:[#allocation2 + $0x1e0] sm:$0xff]
    %v1140 = vld [vmem:[#allocation2 + $0x1e8] sm:$0xff]
    %v1141 = vld [vmem:[#allocation2 + $0x1f0] sm:$0xff]
    %v1142 = vld [vmem:[#allocation2 + $0x1f8] sm:$0xff]
    %v1143 = vld [vmem:[#allocation2 + $0x200] sm:$0xff]
    %v1144 = vld [vmem:[#allocation2 + $0x208] sm:$0xff]
    %v1145 = vld [vmem:[#allocation2 + $0x210] sm:$0xff]
    %v1146 = vld [vmem:[#allocation2 + $0x218] sm:$0xff]
    %v1147 = vld [vmem:[#allocation2 + $0x220] sm:$0xff]
    %v1148 = vld [vmem:[#allocation2 + $0x228] sm:$0xff]
    %v1149 = vld [vmem:[#allocation2 + $0x230] sm:$0xff]
    %v1150 = vld [vmem:[#allocation2 + $0x238] sm:$0xff]
    %v1151 = vld [vmem:[#allocation2 + $0x240] sm:$0xff]
    %v1152 = vld [vmem:[#allocation2 + $0x248] sm:$0xff]
    %v1153 = vld [vmem:[#allocation2 + $0x250] sm:$0xff]
    %v1154 = vld [vmem:[#allocation2 + $0x258] sm:$0xff]
    %v1155 = vld [vmem:[#allocation2 + $0x260] sm:$0xff]
    %v1156 = vld [vmem:[#allocation2 + $0x268] sm:$0xff]
    %v1157 = vld [vmem:[#allocation2 + $0x270] sm:$0xff]
    %v1158 = vld [vmem:[#allocation2 + $0x278] sm:$0xff]
    %v1159 = vld [vmem:[#allocation2 + $0x280] sm:$0xff]
    %v1160 = vld [vmem:[#allocation2 + $0x288] sm:$0xff]
    %v1161 = vld [vmem:[#allocation2 + $0x290] sm:$0xff]
    %v1162 = vld [vmem:[#allocation2 + $0x298] sm:$0xff]
    %v1163 = vld [vmem:[#allocation2 + $0x2a0] sm:$0xff]
    %v1164 = vld [vmem:[#allocation2 + $0x2a8] sm:$0xff]
    %v1165 = vld [vmem:[#allocation2 + $0x2b0] sm:$0xff]
    %v1166 = vld [vmem:[#allocation2 + $0x2b8] sm:$0xff]
    %v1167 = vld [vmem:[#allocation2 + $0x2c0] sm:$0xff]
    %v1168 = vld [vmem:[#allocation2 + $0x2c8] sm:$0xff]
    %v1169 = vld [vmem:[#allocation2 + $0x2d0] sm:$0xff]
    %v1170 = vld [vmem:[#allocation2 + $0x2d8] sm:$0xff]
    %v1171 = vld [vmem:[#allocation2 + $0x2e0] sm:$0xff]
    %v1172 = vld [vmem:[#allocation2 + $0x2e8] sm:$0xff]
    %v1173 = vld [vmem:[#allocation2 + $0x2f0] sm:$0xff]
    %v1174 = vld [vmem:[#allocation2 + $0x2f8] sm:$0xff]
    %v1175 = vld [vmem:[#allocation2 + $0x300] sm:$0xff]
    %v1176 = vld [vmem:[#allocation2 + $0x308] sm:$0xff]
    %v1177 = vld [vmem:[#allocation2 + $0x310] sm:$0xff]
    %v1178 = vld [vmem:[#allocation2 + $0x318] sm:$0xff]
    %v1179 = vld [vmem:[#allocation2 + $0x320] sm:$0xff]
    %v1180 = vld [vmem:[#allocation2 + $0x328] sm:$0xff]
    %v1181 = vld [vmem:[#allocation2 + $0x330] sm:$0xff]
    %v1182 = vld [vmem:[#allocation2 + $0x338] sm:$0xff]
    %v1183 = vld [vmem:[#allocation2 + $0x340] sm:$0xff]
    %v1184 = vld [vmem:[#allocation2 + $0x348] sm:$0xff]
    %v1185 = vld [vmem:[#allocation2 + $0x350] sm:$0xff]
    %v1186 = vld [vmem:[#allocation2 + $0x358] sm:$0xff]
    %v1187 = vld [vmem:[#allocation2 + $0x360] sm:$0xff]
    %v1188 = vld [vmem:[#allocation2 + $0x368] sm:$0xff]
    %v1189 = vld [vmem:[#allocation2 + $0x370] sm:$0xff]
    %v1190 = vld [vmem:[#allocation2 + $0x378] sm:$0xff]
    %v1191 = vld [vmem:[#allocation2 + $0x380] sm:$0xff]
    %v1192 = vld [vmem:[#allocation2 + $0x388] sm:$0xff]
    %v1193 = vld [vmem:[#allocation2 + $0x390] sm:$0xff]
    %v1194 = vld [vmem:[#allocation2 + $0x398] sm:$0xff]
    %v1195 = vld [vmem:[#allocation2 + $0x3a0] sm:$0xff]
    %v1196 = vld [vmem:[#allocation2 + $0x3a8] sm:$0xff]
    %v1197 = vld [vmem:[#allocation2 + $0x3b0] sm:$0xff]
    %v1198 = vld [vmem:[#allocation2 + $0x3b8] sm:$0xff]
    %v1199 = vld [vmem:[#allocation2 + $0x3c0] sm:$0xff]
    %v1200 = vld [vmem:[#allocation2 + $0x3c8] sm:$0xff]
    %v1201 = vld [vmem:[#allocation2 + $0x3d0] sm:$0xff]
    %v1202 = vld [vmem:[#allocation2 + $0x3d8] sm:$0xff]
    %v1203 = vld [vmem:[#allocation2 + $0x3e0] sm:$0xff]
    %v1204 = vld [vmem:[#allocation2 + $0x3e8] sm:$0xff]
    %v1205 = vld [vmem:[#allocation2 + $0x3f0] sm:$0xff]
    %v1206 = vld [vmem:[#allocation2 + $0x3f8] sm:$0xff]
    %v1207 = vld [vmem:[%s16] sm:$0xf]
    %v1209 = vlaneseq
    %v1210 = vshrl.u32 %v1209, 7
    %v1211 = vsub.s32 0, %v1210
    %v1212 = vrot.slane %v1207, %v1211
    %v1213 = vlaneseq
    %v1214 = vshrl.u32 %v1213, 7
    %v1215 = vsub.s32 1, %v1214
    %v1216 = vrot.slane %v1207, %v1215
    %v1217 = vlaneseq
    %v1218 = vshrl.u32 %v1217, 7
    %v1219 = vsub.s32 2, %v1218
    %v1220 = vrot.slane %v1207, %v1219
    %v1221 = vlaneseq
    %v1222 = vshrl.u32 %v1221, 7
    %v1223 = vsub.s32 3, %v1222
    %v1224 = vrot.slane %v1207, %v1223
    %1229 = vmatprep.subr.mxu0 %v1080
    %1230 = vmatpush1.msra.mxu0 %v1079
    %1231 = vmatprep.subr.mxu0 %v1084
    %1232 = vmatpush1.msra.mxu0 %v1083
    %1233 = vmatprep.subr.mxu0 %v1088
    %1234 = vmatpush1.msra.mxu0 %v1087
    %1235 = vmatprep.subr.mxu0 %v1092
    %1236 = vmatpush1.msra.mxu0 %v1091
    %1237 = vmatprep.subr.mxu0 %v1096
    %1238 = vmatpush1.msra.mxu0 %v1095
    %1239 = vmatprep.subr.mxu0 %v1100
    %1240 = vmatpush1.msra.mxu0 %v1099
    %1241 = vmatprep.subr.mxu0 %v1104
    %1242 = vmatpush1.msra.mxu0 %v1103
    %1243 = vmatprep.subr.mxu0 %v1108
    %1244 = vmatpush1.msra.mxu0 %v1107
    %1245 = vmatprep.subr.mxu0 %v1112
    %1246 = vmatpush1.msra.mxu0 %v1111
    %1247 = vmatprep.subr.mxu0 %v1116
    %1248 = vmatpush1.msra.mxu0 %v1115
    %1249 = vmatprep.subr.mxu0 %v1120
    %1250 = vmatpush1.msra.mxu0 %v1119
    %1251 = vmatprep.subr.mxu0 %v1124
    %1252 = vmatpush1.msra.mxu0 %v1123
    %1253 = vmatprep.subr.mxu0 %v1128
    %1254 = vmatpush1.msra.mxu0 %v1127
    %1255 = vmatprep.subr.mxu0 %v1132
    %1256 = vmatpush1.msra.mxu0 %v1131
    %1257 = vmatprep.subr.mxu0 %v1136
    %1258 = vmatpush1.msra.mxu0 %v1135
    %1259 = vmatprep.subr.mxu0 %v1140
    %1260 = vmatpush1.msra.mxu0 %v1139
    %1261 = vmatprep.subr.mxu0 %v1144
    %1262 = vmatpush1.msra.mxu0 %v1143
    %1263 = vmatprep.subr.mxu0 %v1148
    %1264 = vmatpush1.msra.mxu0 %v1147
    %1265 = vmatprep.subr.mxu0 %v1152
    %1266 = vmatpush1.msra.mxu0 %v1151
    %1267 = vmatprep.subr.mxu0 %v1156
    %1268 = vmatpush1.msra.mxu0 %v1155
    %1269 = vmatprep.subr.mxu0 %v1160
    %1270 = vmatpush1.msra.mxu0 %v1159
    %1271 = vmatprep.subr.mxu0 %v1164
    %1272 = vmatpush1.msra.mxu0 %v1163
    %1273 = vmatprep.subr.mxu0 %v1168
    %1274 = vmatpush1.msra.mxu0 %v1167
    %1275 = vmatprep.subr.mxu0 %v1172
    %1276 = vmatpush1.msra.mxu0 %v1171
    %1277 = vmatprep.subr.mxu0 %v1176
    %1278 = vmatpush1.msra.mxu0 %v1175
    %1279 = vmatprep.subr.mxu0 %v1180
    %1280 = vmatpush1.msra.mxu0 %v1179
    %1281 = vmatprep.subr.mxu0 %v1184
    %1282 = vmatpush1.msra.mxu0 %v1183
    %1283 = vmatprep.subr.mxu0 %v1188
    %1284 = vmatpush1.msra.mxu0 %v1187
    %1285 = vmatprep.subr.mxu0 %v1192
    %1286 = vmatpush1.msra.mxu0 %v1191
    %1287 = vmatprep.subr.mxu0 %v1196
    %1288 = vmatpush1.msra.mxu0 %v1195
    %1289 = vmatprep.subr.mxu0 %v1200
    %1290 = vmatpush1.msra.mxu0 %v1199
    %1291 = vmatprep.subr.mxu0 %v1204
    %1292 = vmatpush1.msra.mxu0 %v1203
    %1293 = vmatprep.mubr.f32.mxu0 %v122
    %1294 = vmatmul.mubr.f32.gmra.mrb[0].mxu0 %v797
    %v1295 = vpop.f32.mrb[0].mxu0
    %v1296 = vadd.f32 %v1212, %v1295
    %v1297 = vpop.f32.mrb[0].mxu0
    %v1298 = vadd.f32 %v1216, %v1297
    %1299 = vmatprep.mubr.f32.mxu0 %v123
    %1300 = vmatmul.mubr.f32.gmra.mrb[0].mxu0 %v798
    %v1301 = vpop.f32.mrb[0].mxu0
    %v1302 = vadd.f32 %v1212, %v1301
    %v1303 = vpop.f32.mrb[0].mxu0
    %v1304 = vadd.f32 %v1216, %v1303
    %1305 = vdwg.mxu0
    %1306 = vmatprep.subr.mxu0 %v1082
    %1307 = vmatpush1.msra.mxu0 %v1081
    %1308 = vmatprep.subr.mxu0 %v1086
    %1309 = vmatpush1.msra.mxu0 %v1085
    %1310 = vmatprep.subr.mxu0 %v1090
    %1311 = vmatpush1.msra.mxu0 %v1089
    %1312 = vmatprep.subr.mxu0 %v1094
    %1313 = vmatpush1.msra.mxu0 %v1093
    %1314 = vmatprep.subr.mxu0 %v1098
    %1315 = vmatpush1.msra.mxu0 %v1097
    %1316 = vmatprep.subr.mxu0 %v1102
    %1317 = vmatpush1.msra.mxu0 %v1101
    %1318 = vmatprep.subr.mxu0 %v1106
    %1319 = vmatpush1.msra.mxu0 %v1105
    %1320 = vmatprep.subr.mxu0 %v1110
    %1321 = vmatpush1.msra.mxu0 %v1109
    %1322 = vmatprep.subr.mxu0 %v1114
    %1323 = vmatpush1.msra.mxu0 %v1113
    %1324 = vmatprep.subr.mxu0 %v1118
    %1325 = vmatpush1.msra.mxu0 %v1117
    %1326 = vmatprep.subr.mxu0 %v1122
    %1327 = vmatpush1.msra.mxu0 %v1121
    %1328 = vmatprep.subr.mxu0 %v1126
    %1329 = vmatpush1.msra.mxu0 %v1125
    %1330 = vmatprep.subr.mxu0 %v1130
    %1331 = vmatpush1.msra.mxu0 %v1129
    %1332 = vmatprep.subr.mxu0 %v1134
    %1333 = vmatpush1.msra.mxu0 %v1133
    %1334 = vmatprep.subr.mxu0 %v1138
    %1335 = vmatpush1.msra.mxu0 %v1137
    %1336 = vmatprep.subr.mxu0 %v1142
    %1337 = vmatpush1.msra.mxu0 %v1141
    %1338 = vmatprep.subr.mxu0 %v1146
    %1339 = vmatpush1.msra.mxu0 %v1145
    %1340 = vmatprep.subr.mxu0 %v1150
    %1341 = vmatpush1.msra.mxu0 %v1149
    %1342 = vmatprep.subr.mxu0 %v1154
    %1343 = vmatpush1.msra.mxu0 %v1153
    %1344 = vmatprep.subr.mxu0 %v1158
    %1345 = vmatpush1.msra.mxu0 %v1157
    %1346 = vmatprep.subr.mxu0 %v1162
    %1347 = vmatpush1.msra.mxu0 %v1161
    %1348 = vmatprep.subr.mxu0 %v1166
    %1349 = vmatpush1.msra.mxu0 %v1165
    %1350 = vmatprep.subr.mxu0 %v1170
    %1351 = vmatpush1.msra.mxu0 %v1169
    %1352 = vmatprep.subr.mxu0 %v1174
    %1353 = vmatpush1.msra.mxu0 %v1173
    %1354 = vmatprep.subr.mxu0 %v1178
    %1355 = vmatpush1.msra.mxu0 %v1177
    %1356 = vmatprep.subr.mxu0 %v1182
    %1357 = vmatpush1.msra.mxu0 %v1181
    %1358 = vmatprep.subr.mxu0 %v1186
    %1359 = vmatpush1.msra.mxu0 %v1185
    %1360 = vmatprep.subr.mxu0 %v1190
    %1361 = vmatpush1.msra.mxu0 %v1189
    %1362 = vmatprep.subr.mxu0 %v1194
    %1363 = vmatpush1.msra.mxu0 %v1193
    %1364 = vmatprep.subr.mxu0 %v1198
    %1365 = vmatpush1.msra.mxu0 %v1197
    %1366 = vmatprep.subr.mxu0 %v1202
    %1367 = vmatpush1.msra.mxu0 %v1201
    %1368 = vmatprep.subr.mxu0 %v1206
    %1369 = vmatpush1.msra.mxu0 %v1205
    %1370 = vmatprep.mubr.f32.mxu0 %v122
    %1371 = vmatmul.mubr.f32.gmra.mrb[0].mxu0 %v797
    %v1372 = vpop.f32.mrb[0].mxu0
    %v1373 = vadd.f32 %v1220, %v1372
    %v1374 = vpop.f32.mrb[0].mxu0
    %v1375 = vadd.f32 %v1224, %v1374
    %1376 = vmatprep.mubr.f32.mxu0 %v123
    %1377 = vmatmul.mubr.f32.gmra.mrb[0].mxu0 %v798
    %v1378 = vpop.f32.mrb[0].mxu0
    %v1379 = vadd.f32 %v1220, %v1378
    %v1380 = vpop.f32.mrb[0].mxu0
    %v1381 = vadd.f32 %v1224, %v1380
    %1382 = vdwg.mxu0
    %v1383 = vxor.u32 %v1296, 2147483648
    %v1384 = vxor.u32 %v1302, 2147483648
    %v1385 = vmul.f32 %v1383, 1.442695
    %v1386 = vpow.pop %v1385
    %v1387 = vmul.f32 %v1384, 1.442695
    %v1388 = vpow.pop %v1387
    %v1389 = vadd.f32 %v1386, 1.0
    %v1390 = vadd.f32 %v1388, 1.0
    %v1391 = vrcp.pop %v1389
    %v1392 = vmul.f32 1.0, %v1391
    %v1393 = vrcp.pop %v1390
    %v1394 = vmul.f32 1.0, %v1393
    %v1395 = vxor.u32 %v1298, 2147483648
    %v1396 = vxor.u32 %v1304, 2147483648
    %v1397 = vmul.f32 %v1395, 1.442695
    %v1398 = vpow.pop %v1397
    %v1399 = vmul.f32 %v1396, 1.442695
    %v1400 = vpow.pop %v1399
    %v1401 = vadd.f32 %v1398, 1.0
    %v1402 = vadd.f32 %v1400, 1.0
    %v1403 = vrcp.pop %v1401
    %v1404 = vmul.f32 1.0, %v1403
    %v1405 = vrcp.pop %v1402
    %v1406 = vmul.f32 1.0, %v1405
    %v1407 = vmul.f32 %v1392, %v1375
    %v1408 = vmul.f32 %v1394, %v1381
    %v1409 = vadd.f32 %v1373, %v1407
    %v1410 = vadd.f32 %v1379, %v1408
    %v1411 = vtanh.pop %v1409
    %v1412 = vtanh.pop %v1410
    %v1413 = vsub.f32 1.0, %v1404
    %v1414 = vsub.f32 1.0, %v1406
    %v1415 = vmul.f32 %v1413, %v1411
    %v1416 = vmul.f32 %v1414, %v1412
    %v1417 = vmul.f32 %v1404, %v122
    %v1418 = vmul.f32 %v1406, %v123
    %v1419 = vadd.f32 %v1415, %v1417
    %v1420 = vadd.f32 %v1416, %v1418
    %v1421 = vld [vmem:[#allocation5] sm:$0xff]
    %v1422 = vld [vmem:[#allocation5 + $0x8] sm:$0xff]
    %v1423 = vld [vmem:[#allocation5 + $0x10] sm:$0xff]
    %v1424 = vld [vmem:[#allocation5 + $0x18] sm:$0xff]
    %v1425 = vld [vmem:[#allocation5 + $0x20] sm:$0xff]
    %v1426 = vld [vmem:[#allocation5 + $0x28] sm:$0xff]
    %v1427 = vld [vmem:[#allocation5 + $0x30] sm:$0xff]
    %v1428 = vld [vmem:[#allocation5 + $0x38] sm:$0xff]
    %v1429 = vld [vmem:[#allocation5 + $0x40] sm:$0xff]
    %v1430 = vld [vmem:[#allocation5 + $0x48] sm:$0xff]
    %v1431 = vld [vmem:[#allocation5 + $0x50] sm:$0xff]
    %v1432 = vld [vmem:[#allocation5 + $0x58] sm:$0xff]
    %v1433 = vld [vmem:[#allocation5 + $0x60] sm:$0xff]
    %v1434 = vld [vmem:[#allocation5 + $0x68] sm:$0xff]
    %v1435 = vld [vmem:[#allocation5 + $0x70] sm:$0xff]
    %v1436 = vld [vmem:[#allocation5 + $0x78] sm:$0xff]
    %v1437 = vld [vmem:[#allocation5 + $0x80] sm:$0xff]
    %v1438 = vld [vmem:[#allocation5 + $0x88] sm:$0xff]
    %v1439 = vld [vmem:[#allocation5 + $0x90] sm:$0xff]
    %v1440 = vld [vmem:[#allocation5 + $0x98] sm:$0xff]
    %v1441 = vld [vmem:[#allocation5 + $0xa0] sm:$0xff]
    %v1442 = vld [vmem:[#allocation5 + $0xa8] sm:$0xff]
    %v1443 = vld [vmem:[#allocation5 + $0xb0] sm:$0xff]
    %v1444 = vld [vmem:[#allocation5 + $0xb8] sm:$0xff]
    %v1445 = vld [vmem:[#allocation5 + $0xc0] sm:$0xff]
    %v1446 = vld [vmem:[#allocation5 + $0xc8] sm:$0xff]
    %v1447 = vld [vmem:[#allocation5 + $0xd0] sm:$0xff]
    %v1448 = vld [vmem:[#allocation5 + $0xd8] sm:$0xff]
    %v1449 = vld [vmem:[#allocation5 + $0xe0] sm:$0xff]
    %v1450 = vld [vmem:[#allocation5 + $0xe8] sm:$0xff]
    %v1451 = vld [vmem:[#allocation5 + $0xf0] sm:$0xff]
    %v1452 = vld [vmem:[#allocation5 + $0xf8] sm:$0xff]
    %v1453 = vld [vmem:[#allocation5 + $0x100] sm:$0xff]
    %v1454 = vld [vmem:[#allocation5 + $0x108] sm:$0xff]
    %v1455 = vld [vmem:[#allocation5 + $0x110] sm:$0xff]
    %v1456 = vld [vmem:[#allocation5 + $0x118] sm:$0xff]
    %v1457 = vld [vmem:[#allocation5 + $0x120] sm:$0xff]
    %v1458 = vld [vmem:[#allocation5 + $0x128] sm:$0xff]
    %v1459 = vld [vmem:[#allocation5 + $0x130] sm:$0xff]
    %v1460 = vld [vmem:[#allocation5 + $0x138] sm:$0xff]
    %v1461 = vld [vmem:[#allocation5 + $0x140] sm:$0xff]
    %v1462 = vld [vmem:[#allocation5 + $0x148] sm:$0xff]
    %v1463 = vld [vmem:[#allocation5 + $0x150] sm:$0xff]
    %v1464 = vld [vmem:[#allocation5 + $0x158] sm:$0xff]
    %v1465 = vld [vmem:[#allocation5 + $0x160] sm:$0xff]
    %v1466 = vld [vmem:[#allocation5 + $0x168] sm:$0xff]
    %v1467 = vld [vmem:[#allocation5 + $0x170] sm:$0xff]
    %v1468 = vld [vmem:[#allocation5 + $0x178] sm:$0xff]
    %v1469 = vld [vmem:[#allocation5 + $0x180] sm:$0xff]
    %v1470 = vld [vmem:[#allocation5 + $0x188] sm:$0xff]
    %v1471 = vld [vmem:[#allocation5 + $0x190] sm:$0xff]
    %v1472 = vld [vmem:[#allocation5 + $0x198] sm:$0xff]
    %v1473 = vld [vmem:[#allocation5 + $0x1a0] sm:$0xff]
    %v1474 = vld [vmem:[#allocation5 + $0x1a8] sm:$0xff]
    %v1475 = vld [vmem:[#allocation5 + $0x1b0] sm:$0xff]
    %v1476 = vld [vmem:[#allocation5 + $0x1b8] sm:$0xff]
    %v1477 = vld [vmem:[#allocation5 + $0x1c0] sm:$0xff]
    %v1478 = vld [vmem:[#allocation5 + $0x1c8] sm:$0xff]
    %v1479 = vld [vmem:[#allocation5 + $0x1d0] sm:$0xff]
    %v1480 = vld [vmem:[#allocation5 + $0x1d8] sm:$0xff]
    %v1481 = vld [vmem:[#allocation5 + $0x1e0] sm:$0xff]
    %v1482 = vld [vmem:[#allocation5 + $0x1e8] sm:$0xff]
    %v1483 = vld [vmem:[#allocation5 + $0x1f0] sm:$0xff]
    %v1484 = vld [vmem:[#allocation5 + $0x1f8] sm:$0xff]
    %v1485 = vld [vmem:[#allocation5 + $0x200] sm:$0xff]
    %v1486 = vld [vmem:[#allocation5 + $0x208] sm:$0xff]
    %v1487 = vld [vmem:[#allocation5 + $0x210] sm:$0xff]
    %v1488 = vld [vmem:[#allocation5 + $0x218] sm:$0xff]
    %v1489 = vld [vmem:[#allocation5 + $0x220] sm:$0xff]
    %v1490 = vld [vmem:[#allocation5 + $0x228] sm:$0xff]
    %v1491 = vld [vmem:[#allocation5 + $0x230] sm:$0xff]
    %v1492 = vld [vmem:[#allocation5 + $0x238] sm:$0xff]
    %v1493 = vld [vmem:[#allocation5 + $0x240] sm:$0xff]
    %v1494 = vld [vmem:[#allocation5 + $0x248] sm:$0xff]
    %v1495 = vld [vmem:[#allocation5 + $0x250] sm:$0xff]
    %v1496 = vld [vmem:[#allocation5 + $0x258] sm:$0xff]
    %v1497 = vld [vmem:[#allocation5 + $0x260] sm:$0xff]
    %v1498 = vld [vmem:[#allocation5 + $0x268] sm:$0xff]
    %v1499 = vld [vmem:[#allocation5 + $0x270] sm:$0xff]
    %v1500 = vld [vmem:[#allocation5 + $0x278] sm:$0xff]
    %v1501 = vld [vmem:[#allocation5 + $0x280] sm:$0xff]
    %v1502 = vld [vmem:[#allocation5 + $0x288] sm:$0xff]
    %v1503 = vld [vmem:[#allocation5 + $0x290] sm:$0xff]
    %v1504 = vld [vmem:[#allocation5 + $0x298] sm:$0xff]
    %v1505 = vld [vmem:[#allocation5 + $0x2a0] sm:$0xff]
    %v1506 = vld [vmem:[#allocation5 + $0x2a8] sm:$0xff]
    %v1507 = vld [vmem:[#allocation5 + $0x2b0] sm:$0xff]
    %v1508 = vld [vmem:[#allocation5 + $0x2b8] sm:$0xff]
    %v1509 = vld [vmem:[#allocation5 + $0x2c0] sm:$0xff]
    %v1510 = vld [vmem:[#allocation5 + $0x2c8] sm:$0xff]
    %v1511 = vld [vmem:[#allocation5 + $0x2d0] sm:$0xff]
    %v1512 = vld [vmem:[#allocation5 + $0x2d8] sm:$0xff]
    %v1513 = vld [vmem:[#allocation5 + $0x2e0] sm:$0xff]
    %v1514 = vld [vmem:[#allocation5 + $0x2e8] sm:$0xff]
    %v1515 = vld [vmem:[#allocation5 + $0x2f0] sm:$0xff]
    %v1516 = vld [vmem:[#allocation5 + $0x2f8] sm:$0xff]
    %v1517 = vld [vmem:[#allocation5 + $0x300] sm:$0xff]
    %v1518 = vld [vmem:[#allocation5 + $0x308] sm:$0xff]
    %v1519 = vld [vmem:[#allocation5 + $0x310] sm:$0xff]
    %v1520 = vld [vmem:[#allocation5 + $0x318] sm:$0xff]
    %v1521 = vld [vmem:[#allocation5 + $0x320] sm:$0xff]
    %v1522 = vld [vmem:[#allocation5 + $0x328] sm:$0xff]
    %v1523 = vld [vmem:[#allocation5 + $0x330] sm:$0xff]
    %v1524 = vld [vmem:[#allocation5 + $0x338] sm:$0xff]
    %v1525 = vld [vmem:[#allocation5 + $0x340] sm:$0xff]
    %v1526 = vld [vmem:[#allocation5 + $0x348] sm:$0xff]
    %v1527 = vld [vmem:[#allocation5 + $0x350] sm:$0xff]
    %v1528 = vld [vmem:[#allocation5 + $0x358] sm:$0xff]
    %v1529 = vld [vmem:[#allocation5 + $0x360] sm:$0xff]
    %v1530 = vld [vmem:[#allocation5 + $0x368] sm:$0xff]
    %v1531 = vld [vmem:[#allocation5 + $0x370] sm:$0xff]
    %v1532 = vld [vmem:[#allocation5 + $0x378] sm:$0xff]
    %v1533 = vld [vmem:[#allocation5 + $0x380] sm:$0xff]
    %v1534 = vld [vmem:[#allocation5 + $0x388] sm:$0xff]
    %v1535 = vld [vmem:[#allocation5 + $0x390] sm:$0xff]
    %v1536 = vld [vmem:[#allocation5 + $0x398] sm:$0xff]
    %v1537 = vld [vmem:[#allocation5 + $0x3a0] sm:$0xff]
    %v1538 = vld [vmem:[#allocation5 + $0x3a8] sm:$0xff]
    %v1539 = vld [vmem:[#allocation5 + $0x3b0] sm:$0xff]
    %v1540 = vld [vmem:[#allocation5 + $0x3b8] sm:$0xff]
    %v1541 = vld [vmem:[#allocation5 + $0x3c0] sm:$0xff]
    %v1542 = vld [vmem:[#allocation5 + $0x3c8] sm:$0xff]
    %v1543 = vld [vmem:[#allocation5 + $0x3d0] sm:$0xff]
    %v1544 = vld [vmem:[#allocation5 + $0x3d8] sm:$0xff]
    %v1545 = vld [vmem:[#allocation5 + $0x3e0] sm:$0xff]
    %v1546 = vld [vmem:[#allocation5 + $0x3e8] sm:$0xff]
    %v1547 = vld [vmem:[#allocation5 + $0x3f0] sm:$0xff]
    %v1548 = vld [vmem:[#allocation5 + $0x3f8] sm:$0xff]
    %v1549 = vld [vmem:[#allocation5 + $0x400] sm:$0xff]
    %v1550 = vld [vmem:[#allocation5 + $0x408] sm:$0xff]
    %v1551 = vld [vmem:[#allocation5 + $0x410] sm:$0xff]
    %v1552 = vld [vmem:[#allocation5 + $0x418] sm:$0xff]
    %v1553 = vld [vmem:[#allocation5 + $0x420] sm:$0xff]
    %v1554 = vld [vmem:[#allocation5 + $0x428] sm:$0xff]
    %v1555 = vld [vmem:[#allocation5 + $0x430] sm:$0xff]
    %v1556 = vld [vmem:[#allocation5 + $0x438] sm:$0xff]
    %v1557 = vld [vmem:[#allocation5 + $0x440] sm:$0xff]
    %v1558 = vld [vmem:[#allocation5 + $0x448] sm:$0xff]
    %v1559 = vld [vmem:[#allocation5 + $0x450] sm:$0xff]
    %v1560 = vld [vmem:[#allocation5 + $0x458] sm:$0xff]
    %v1561 = vld [vmem:[#allocation5 + $0x460] sm:$0xff]
    %v1562 = vld [vmem:[#allocation5 + $0x468] sm:$0xff]
    %v1563 = vld [vmem:[#allocation5 + $0x470] sm:$0xff]
    %v1564 = vld [vmem:[#allocation5 + $0x478] sm:$0xff]
    %v1565 = vld [vmem:[#allocation5 + $0x480] sm:$0xff]
    %v1566 = vld [vmem:[#allocation5 + $0x488] sm:$0xff]
    %v1567 = vld [vmem:[#allocation5 + $0x490] sm:$0xff]
    %v1568 = vld [vmem:[#allocation5 + $0x498] sm:$0xff]
    %v1569 = vld [vmem:[#allocation5 + $0x4a0] sm:$0xff]
    %v1570 = vld [vmem:[#allocation5 + $0x4a8] sm:$0xff]
    %v1571 = vld [vmem:[#allocation5 + $0x4b0] sm:$0xff]
    %v1572 = vld [vmem:[#allocation5 + $0x4b8] sm:$0xff]
    %v1573 = vld [vmem:[#allocation5 + $0x4c0] sm:$0xff]
    %v1574 = vld [vmem:[#allocation5 + $0x4c8] sm:$0xff]
    %v1575 = vld [vmem:[#allocation5 + $0x4d0] sm:$0xff]
    %v1576 = vld [vmem:[#allocation5 + $0x4d8] sm:$0xff]
    %v1577 = vld [vmem:[#allocation5 + $0x4e0] sm:$0xff]
    %v1578 = vld [vmem:[#allocation5 + $0x4e8] sm:$0xff]
    %v1579 = vld [vmem:[#allocation5 + $0x4f0] sm:$0xff]
    %v1580 = vld [vmem:[#allocation5 + $0x4f8] sm:$0xff]
    %v1581 = vld [vmem:[#allocation5 + $0x500] sm:$0xff]
    %v1582 = vld [vmem:[#allocation5 + $0x508] sm:$0xff]
    %v1583 = vld [vmem:[#allocation5 + $0x510] sm:$0xff]
    %v1584 = vld [vmem:[#allocation5 + $0x518] sm:$0xff]
    %v1585 = vld [vmem:[#allocation5 + $0x520] sm:$0xff]
    %v1586 = vld [vmem:[#allocation5 + $0x528] sm:$0xff]
    %v1587 = vld [vmem:[#allocation5 + $0x530] sm:$0xff]
    %v1588 = vld [vmem:[#allocation5 + $0x538] sm:$0xff]
    %v1589 = vld [vmem:[#allocation5 + $0x540] sm:$0xff]
    %v1590 = vld [vmem:[#allocation5 + $0x548] sm:$0xff]
    %v1591 = vld [vmem:[#allocation5 + $0x550] sm:$0xff]
    %v1592 = vld [vmem:[#allocation5 + $0x558] sm:$0xff]
    %v1593 = vld [vmem:[#allocation5 + $0x560] sm:$0xff]
    %v1594 = vld [vmem:[#allocation5 + $0x568] sm:$0xff]
    %v1595 = vld [vmem:[#allocation5 + $0x570] sm:$0xff]
    %v1596 = vld [vmem:[#allocation5 + $0x578] sm:$0xff]
    %v1597 = vld [vmem:[#allocation5 + $0x580] sm:$0xff]
    %v1598 = vld [vmem:[#allocation5 + $0x588] sm:$0xff]
    %v1599 = vld [vmem:[#allocation5 + $0x590] sm:$0xff]
    %v1600 = vld [vmem:[#allocation5 + $0x598] sm:$0xff]
    %v1601 = vld [vmem:[#allocation5 + $0x5a0] sm:$0xff]
    %v1602 = vld [vmem:[#allocation5 + $0x5a8] sm:$0xff]
    %v1603 = vld [vmem:[#allocation5 + $0x5b0] sm:$0xff]
    %v1604 = vld [vmem:[#allocation5 + $0x5b8] sm:$0xff]
    %v1605 = vld [vmem:[#allocation5 + $0x5c0] sm:$0xff]
    %v1606 = vld [vmem:[#allocation5 + $0x5c8] sm:$0xff]
    %v1607 = vld [vmem:[#allocation5 + $0x5d0] sm:$0xff]
    %v1608 = vld [vmem:[#allocation5 + $0x5d8] sm:$0xff]
    %v1609 = vld [vmem:[#allocation5 + $0x5e0] sm:$0xff]
    %v1610 = vld [vmem:[#allocation5 + $0x5e8] sm:$0xff]
    %v1611 = vld [vmem:[#allocation5 + $0x5f0] sm:$0xff]
    %v1612 = vld [vmem:[#allocation5 + $0x5f8] sm:$0xff]
    %1613 = vmatprep.subr.mxu0 %v1422
    %1614 = vmatpush1.msra.mxu0 %v1421
    %1615 = vmatprep.subr.mxu0 %v1434
    %1616 = vmatpush1.msra.mxu0 %v1433
    %1617 = vmatprep.subr.mxu0 %v1446
    %1618 = vmatpush1.msra.mxu0 %v1445
    %1619 = vmatprep.subr.mxu0 %v1458
    %1620 = vmatpush1.msra.mxu0 %v1457
    %1621 = vmatprep.subr.mxu0 %v1470
    %1622 = vmatpush1.msra.mxu0 %v1469
    %1623 = vmatprep.subr.mxu0 %v1482
    %1624 = vmatpush1.msra.mxu0 %v1481
    %1625 = vmatprep.subr.mxu0 %v1494
    %1626 = vmatpush1.msra.mxu0 %v1493
    %1627 = vmatprep.subr.mxu0 %v1506
    %1628 = vmatpush1.msra.mxu0 %v1505
    %1629 = vmatprep.subr.mxu0 %v1518
    %1630 = vmatpush1.msra.mxu0 %v1517
    %1631 = vmatprep.subr.mxu0 %v1530
    %1632 = vmatpush1.msra.mxu0 %v1529
    %1633 = vmatprep.subr.mxu0 %v1542
    %1634 = vmatpush1.msra.mxu0 %v1541
    %1635 = vmatprep.subr.mxu0 %v1554
    %1636 = vmatpush1.msra.mxu0 %v1553
    %1637 = vmatprep.subr.mxu0 %v1566
    %1638 = vmatpush1.msra.mxu0 %v1565
    %1639 = vmatprep.subr.mxu0 %v1578
    %1640 = vmatpush1.msra.mxu0 %v1577
    %1641 = vmatprep.subr.mxu0 %v1590
    %1642 = vmatpush1.msra.mxu0 %v1589
    %1643 = vmatprep.subr.mxu0 %v1602
    %1644 = vmatpush1.msra.mxu0 %v1601
    %1645 = vmatprep.subr.mxu0 0.0
    %1646 = vmatpush1.msra.mxu0 0.0
    %1647 = vmatprep.subr.mxu0 0.0
    %1648 = vmatpush1.msra.mxu0 0.0
    %1649 = vmatprep.subr.mxu0 0.0
    %1650 = vmatpush1.msra.mxu0 0.0
    %1651 = vmatprep.subr.mxu0 0.0
    %1652 = vmatpush1.msra.mxu0 0.0
    %1653 = vmatprep.subr.mxu0 0.0
    %1654 = vmatpush1.msra.mxu0 0.0
    %1655 = vmatprep.subr.mxu0 0.0
    %1656 = vmatpush1.msra.mxu0 0.0
    %1657 = vmatprep.subr.mxu0 0.0
    %1658 = vmatpush1.msra.mxu0 0.0
    %1659 = vmatprep.subr.mxu0 0.0
    %1660 = vmatpush1.msra.mxu0 0.0
    %1661 = vmatprep.subr.mxu0 0.0
    %1662 = vmatpush1.msra.mxu0 0.0
    %1663 = vmatprep.subr.mxu0 0.0
    %1664 = vmatpush1.msra.mxu0 0.0
    %1665 = vmatprep.subr.mxu0 0.0
    %1666 = vmatpush1.msra.mxu0 0.0
    %1667 = vmatprep.subr.mxu0 0.0
    %1668 = vmatpush1.msra.mxu0 0.0
    %1669 = vmatprep.subr.mxu0 0.0
    %1670 = vmatpush1.msra.mxu0 0.0
    %1671 = vmatprep.subr.mxu0 0.0
    %1672 = vmatpush1.msra.mxu0 0.0
    %1673 = vmatprep.subr.mxu0 0.0
    %1674 = vmatpush1.msra.mxu0 0.0
    %1675 = vmatprep.subr.mxu0 0.0
    %1676 = vmatpush1.msra.mxu0 0.0
    %1677 = vmatprep.mubr.f32.mxu0 0.0
    %1678 = vmatmul.mubr.f32.gmra.mrb[0].mxu0 %v1419
    %v1679 = vpop.f32.mrb[0].mxu0
    %v1680 = vadd.f32 0.0, %v1679
    %v1681 = vpop.f32.mrb[0].mxu0
    %v1682 = vadd.f32 0.0, %v1681
    %1683 = vmatprep.mubr.f32.mxu0 0.0
    %1684 = vmatmul.mubr.f32.gmra.mrb[0].mxu0 %v1420
    %v1685 = vpop.f32.mrb[0].mxu0
    %v1686 = vadd.f32 0.0, %v1685
    %v1687 = vpop.f32.mrb[0].mxu0
    %v1688 = vadd.f32 0.0, %v1687
    %1689 = vdwg.mxu0
    %1690 = vmatprep.subr.mxu0 %v1424
    %1691 = vmatpush1.msra.mxu0 %v1423
    %1692 = vmatprep.subr.mxu0 %v1436
    %1693 = vmatpush1.msra.mxu0 %v1435
    %1694 = vmatprep.subr.mxu0 %v1448
    %1695 = vmatpush1.msra.mxu0 %v1447
    %1696 = vmatprep.subr.mxu0 %v1460
    %1697 = vmatpush1.msra.mxu0 %v1459
    %1698 = vmatprep.subr.mxu0 %v1472
    %1699 = vmatpush1.msra.mxu0 %v1471
    %1700 = vmatprep.subr.mxu0 %v1484
    %1701 = vmatpush1.msra.mxu0 %v1483
    %1702 = vmatprep.subr.mxu0 %v1496
    %1703 = vmatpush1.msra.mxu0 %v1495
    %1704 = vmatprep.subr.mxu0 %v1508
    %1705 = vmatpush1.msra.mxu0 %v1507
    %1706 = vmatprep.subr.mxu0 %v1520
    %1707 = vmatpush1.msra.mxu0 %v1519
    %1708 = vmatprep.subr.mxu0 %v1532
    %1709 = vmatpush1.msra.mxu0 %v1531
    %1710 = vmatprep.subr.mxu0 %v1544
    %1711 = vmatpush1.msra.mxu0 %v1543
    %1712 = vmatprep.subr.mxu0 %v1556
    %1713 = vmatpush1.msra.mxu0 %v1555
    %1714 = vmatprep.subr.mxu0 %v1568
    %1715 = vmatpush1.msra.mxu0 %v1567
    %1716 = vmatprep.subr.mxu0 %v1580
    %1717 = vmatpush1.msra.mxu0 %v1579
    %1718 = vmatprep.subr.mxu0 %v1592
    %1719 = vmatpush1.msra.mxu0 %v1591
    %1720 = vmatprep.subr.mxu0 %v1604
    %1721 = vmatpush1.msra.mxu0 %v1603
    %1722 = vmatprep.subr.mxu0 0.0
    %1723 = vmatpush1.msra.mxu0 0.0
    %1724 = vmatprep.subr.mxu0 0.0
    %1725 = vmatpush1.msra.mxu0 0.0
    %1726 = vmatprep.subr.mxu0 0.0
    %1727 = vmatpush1.msra.mxu0 0.0
    %1728 = vmatprep.subr.mxu0 0.0
    %1729 = vmatpush1.msra.mxu0 0.0
    %1730 = vmatprep.subr.mxu0 0.0
    %1731 = vmatpush1.msra.mxu0 0.0
    %1732 = vmatprep.subr.mxu0 0.0
    %1733 = vmatpush1.msra.mxu0 0.0
    %1734 = vmatprep.subr.mxu0 0.0
    %1735 = vmatpush1.msra.mxu0 0.0
    %1736 = vmatprep.subr.mxu0 0.0
    %1737 = vmatpush1.msra.mxu0 0.0
    %1738 = vmatprep.subr.mxu0 0.0
    %1739 = vmatpush1.msra.mxu0 0.0
    %1740 = vmatprep.subr.mxu0 0.0
    %1741 = vmatpush1.msra.mxu0 0.0
    %1742 = vmatprep.subr.mxu0 0.0
    %1743 = vmatpush1.msra.mxu0 0.0
    %1744 = vmatprep.subr.mxu0 0.0
    %1745 = vmatpush1.msra.mxu0 0.0
    %1746 = vmatprep.subr.mxu0 0.0
    %1747 = vmatpush1.msra.mxu0 0.0
    %1748 = vmatprep.subr.mxu0 0.0
    %1749 = vmatpush1.msra.mxu0 0.0
    %1750 = vmatprep.subr.mxu0 0.0
    %1751 = vmatpush1.msra.mxu0 0.0
    %1752 = vmatprep.subr.mxu0 0.0
    %1753 = vmatpush1.msra.mxu0 0.0
    %1754 = vmatprep.mubr.f32.mxu0 0.0
    %1755 = vmatmul.mubr.f32.gmra.mrb[0].mxu0 %v1419
    %v1756 = vpop.f32.mrb[0].mxu0
    %v1757 = vadd.f32 0.0, %v1756
    %v1758 = vpop.f32.mrb[0].mxu0
    %v1759 = vadd.f32 0.0, %v1758
    %1760 = vmatprep.mubr.f32.mxu0 0.0
    %1761 = vmatmul.mubr.f32.gmra.mrb[0].mxu0 %v1420
    %v1762 = vpop.f32.mrb[0].mxu0
    %v1763 = vadd.f32 0.0, %v1762
    %v1764 = vpop.f32.mrb[0].mxu0
    %v1765 = vadd.f32 0.0, %v1764
    %1766 = vdwg.mxu0
    %1767 = vmatprep.subr.mxu0 %v1426
    %1768 = vmatpush1.msra.mxu0 %v1425
    %1769 = vmatprep.subr.mxu0 %v1438
    %1770 = vmatpush1.msra.mxu0 %v1437
    %1771 = vmatprep.subr.mxu0 %v1450
    %1772 = vmatpush1.msra.mxu0 %v1449
    %1773 = vmatprep.subr.mxu0 %v1462
    %1774 = vmatpush1.msra.mxu0 %v1461
    %1775 = vmatprep.subr.mxu0 %v1474
    %1776 = vmatpush1.msra.mxu0 %v1473
    %1777 = vmatprep.subr.mxu0 %v1486
    %1778 = vmatpush1.msra.mxu0 %v1485
    %1779 = vmatprep.subr.mxu0 %v1498
    %1780 = vmatpush1.msra.mxu0 %v1497
    %1781 = vmatprep.subr.mxu0 %v1510
    %1782 = vmatpush1.msra.mxu0 %v1509
    %1783 = vmatprep.subr.mxu0 %v1522
    %1784 = vmatpush1.msra.mxu0 %v1521
    %1785 = vmatprep.subr.mxu0 %v1534
    %1786 = vmatpush1.msra.mxu0 %v1533
    %1787 = vmatprep.subr.mxu0 %v1546
    %1788 = vmatpush1.msra.mxu0 %v1545
    %1789 = vmatprep.subr.mxu0 %v1558
    %1790 = vmatpush1.msra.mxu0 %v1557
    %1791 = vmatprep.subr.mxu0 %v1570
    %1792 = vmatpush1.msra.mxu0 %v1569
    %1793 = vmatprep.subr.mxu0 %v1582
    %1794 = vmatpush1.msra.mxu0 %v1581
    %1795 = vmatprep.subr.mxu0 %v1594
    %1796 = vmatpush1.msra.mxu0 %v1593
    %1797 = vmatprep.subr.mxu0 %v1606
    %1798 = vmatpush1.msra.mxu0 %v1605
    %1799 = vmatprep.subr.mxu0 0.0
    %1800 = vmatpush1.msra.mxu0 0.0
    %1801 = vmatprep.subr.mxu0 0.0
    %1802 = vmatpush1.msra.mxu0 0.0
    %1803 = vmatprep.subr.mxu0 0.0
    %1804 = vmatpush1.msra.mxu0 0.0
    %1805 = vmatprep.subr.mxu0 0.0
    %1806 = vmatpush1.msra.mxu0 0.0
    %1807 = vmatprep.subr.mxu0 0.0
    %1808 = vmatpush1.msra.mxu0 0.0
    %1809 = vmatprep.subr.mxu0 0.0
    %1810 = vmatpush1.msra.mxu0 0.0
    %1811 = vmatprep.subr.mxu0 0.0
    %1812 = vmatpush1.msra.mxu0 0.0
    %1813 = vmatprep.subr.mxu0 0.0
    %1814 = vmatpush1.msra.mxu0 0.0
    %1815 = vmatprep.subr.mxu0 0.0
    %1816 = vmatpush1.msra.mxu0 0.0
    %1817 = vmatprep.subr.mxu0 0.0
    %1818 = vmatpush1.msra.mxu0 0.0
    %1819 = vmatprep.subr.mxu0 0.0
    %1820 = vmatpush1.msra.mxu0 0.0
    %1821 = vmatprep.subr.mxu0 0.0
    %1822 = vmatpush1.msra.mxu0 0.0
    %1823 = vmatprep.subr.mxu0 0.0
    %1824 = vmatpush1.msra.mxu0 0.0
    %1825 = vmatprep.subr.mxu0 0.0
    %1826 = vmatpush1.msra.mxu0 0.0
    %1827 = vmatprep.subr.mxu0 0.0
    %1828 = vmatpush1.msra.mxu0 0.0
    %1829 = vmatprep.subr.mxu0 0.0
    %1830 = vmatpush1.msra.mxu0 0.0
    %1831 = vmatprep.mubr.f32.mxu0 0.0
    %1832 = vmatmul.mubr.f32.gmra.mrb[0].mxu0 %v1419
    %v1833 = vpop.f32.mrb[0].mxu0
    %v1834 = vadd.f32 0.0, %v1833
    %v1835 = vpop.f32.mrb[0].mxu0
    %v1836 = vadd.f32 0.0, %v1835
    %1837 = vmatprep.mubr.f32.mxu0 0.0
    %1838 = vmatmul.mubr.f32.gmra.mrb[0].mxu0 %v1420
    %v1839 = vpop.f32.mrb[0].mxu0
    %v1840 = vadd.f32 0.0, %v1839
    %v1841 = vpop.f32.mrb[0].mxu0
    %v1842 = vadd.f32 0.0, %v1841
    %1843 = vdwg.mxu0
    %1844 = vmatprep.subr.mxu0 %v1428
    %1845 = vmatpush1.msra.mxu0 %v1427
    %1846 = vmatprep.subr.mxu0 %v1440
    %1847 = vmatpush1.msra.mxu0 %v1439
    %1848 = vmatprep.subr.mxu0 %v1452
    %1849 = vmatpush1.msra.mxu0 %v1451
    %1850 = vmatprep.subr.mxu0 %v1464
    %1851 = vmatpush1.msra.mxu0 %v1463
    %1852 = vmatprep.subr.mxu0 %v1476
    %1853 = vmatpush1.msra.mxu0 %v1475
    %1854 = vmatprep.subr.mxu0 %v1488
    %1855 = vmatpush1.msra.mxu0 %v1487
    %1856 = vmatprep.subr.mxu0 %v1500
    %1857 = vmatpush1.msra.mxu0 %v1499
    %1858 = vmatprep.subr.mxu0 %v1512
    %1859 = vmatpush1.msra.mxu0 %v1511
    %1860 = vmatprep.subr.mxu0 %v1524
    %1861 = vmatpush1.msra.mxu0 %v1523
    %1862 = vmatprep.subr.mxu0 %v1536
    %1863 = vmatpush1.msra.mxu0 %v1535
    %1864 = vmatprep.subr.mxu0 %v1548
    %1865 = vmatpush1.msra.mxu0 %v1547
    %1866 = vmatprep.subr.mxu0 %v1560
    %1867 = vmatpush1.msra.mxu0 %v1559
    %1868 = vmatprep.subr.mxu0 %v1572
    %1869 = vmatpush1.msra.mxu0 %v1571
    %1870 = vmatprep.subr.mxu0 %v1584
    %1871 = vmatpush1.msra.mxu0 %v1583
    %1872 = vmatprep.subr.mxu0 %v1596
    %1873 = vmatpush1.msra.mxu0 %v1595
    %1874 = vmatprep.subr.mxu0 %v1608
    %1875 = vmatpush1.msra.mxu0 %v1607
    %1876 = vmatprep.subr.mxu0 0.0
    %1877 = vmatpush1.msra.mxu0 0.0
    %1878 = vmatprep.subr.mxu0 0.0
    %1879 = vmatpush1.msra.mxu0 0.0
    %1880 = vmatprep.subr.mxu0 0.0
    %1881 = vmatpush1.msra.mxu0 0.0
    %1882 = vmatprep.subr.mxu0 0.0
    %1883 = vmatpush1.msra.mxu0 0.0
    %1884 = vmatprep.subr.mxu0 0.0
    %1885 = vmatpush1.msra.mxu0 0.0
    %1886 = vmatprep.subr.mxu0 0.0
    %1887 = vmatpush1.msra.mxu0 0.0
    %1888 = vmatprep.subr.mxu0 0.0
    %1889 = vmatpush1.msra.mxu0 0.0
    %1890 = vmatprep.subr.mxu0 0.0
    %1891 = vmatpush1.msra.mxu0 0.0
    %1892 = vmatprep.subr.mxu0 0.0
    %1893 = vmatpush1.msra.mxu0 0.0
    %1894 = vmatprep.subr.mxu0 0.0
    %1895 = vmatpush1.msra.mxu0 0.0
    %1896 = vmatprep.subr.mxu0 0.0
    %1897 = vmatpush1.msra.mxu0 0.0
    %1898 = vmatprep.subr.mxu0 0.0
    %1899 = vmatpush1.msra.mxu0 0.0
    %1900 = vmatprep.subr.mxu0 0.0
    %1901 = vmatpush1.msra.mxu0 0.0
    %1902 = vmatprep.subr.mxu0 0.0
    %1903 = vmatpush1.msra.mxu0 0.0
    %1904 = vmatprep.subr.mxu0 0.0
    %1905 = vmatpush1.msra.mxu0 0.0
    %1906 = vmatprep.subr.mxu0 0.0
    %1907 = vmatpush1.msra.mxu0 0.0
    %1908 = vmatprep.mubr.f32.mxu0 0.0
    %1909 = vmatmul.mubr.f32.gmra.mrb[0].mxu0 %v1419
    %v1910 = vpop.f32.mrb[0].mxu0
    %v1911 = vadd.f32 0.0, %v1910
    %v1912 = vpop.f32.mrb[0].mxu0
    %v1913 = vadd.f32 0.0, %v1912
    %1914 = vmatprep.mubr.f32.mxu0 0.0
    %1915 = vmatmul.mubr.f32.gmra.mrb[0].mxu0 %v1420
    %v1916 = vpop.f32.mrb[0].mxu0
    %v1917 = vadd.f32 0.0, %v1916
    %v1918 = vpop.f32.mrb[0].mxu0
    %v1919 = vadd.f32 0.0, %v1918
    %1920 = vdwg.mxu0
    %1921 = vmatprep.subr.mxu0 %v1430
    %1922 = vmatpush1.msra.mxu0 %v1429
    %1923 = vmatprep.subr.mxu0 %v1442
    %1924 = vmatpush1.msra.mxu0 %v1441
    %1925 = vmatprep.subr.mxu0 %v1454
    %1926 = vmatpush1.msra.mxu0 %v1453
    %1927 = vmatprep.subr.mxu0 %v1466
    %1928 = vmatpush1.msra.mxu0 %v1465
    %1929 = vmatprep.subr.mxu0 %v1478
    %1930 = vmatpush1.msra.mxu0 %v1477
    %1931 = vmatprep.subr.mxu0 %v1490
    %1932 = vmatpush1.msra.mxu0 %v1489
    %1933 = vmatprep.subr.mxu0 %v1502
    %1934 = vmatpush1.msra.mxu0 %v1501
    %1935 = vmatprep.subr.mxu0 %v1514
    %1936 = vmatpush1.msra.mxu0 %v1513
    %1937 = vmatprep.subr.mxu0 %v1526
    %1938 = vmatpush1.msra.mxu0 %v1525
    %1939 = vmatprep.subr.mxu0 %v1538
    %1940 = vmatpush1.msra.mxu0 %v1537
    %1941 = vmatprep.subr.mxu0 %v1550
    %1942 = vmatpush1.msra.mxu0 %v1549
    %1943 = vmatprep.subr.mxu0 %v1562
    %1944 = vmatpush1.msra.mxu0 %v1561
    %1945 = vmatprep.subr.mxu0 %v1574
    %1946 = vmatpush1.msra.mxu0 %v1573
    %1947 = vmatprep.subr.mxu0 %v1586
    %1948 = vmatpush1.msra.mxu0 %v1585
    %1949 = vmatprep.subr.mxu0 %v1598
    %1950 = vmatpush1.msra.mxu0 %v1597
    %1951 = vmatprep.subr.mxu0 %v1610
    %1952 = vmatpush1.msra.mxu0 %v1609
    %1953 = vmatprep.subr.mxu0 0.0
    %1954 = vmatpush1.msra.mxu0 0.0
    %1955 = vmatprep.subr.mxu0 0.0
    %1956 = vmatpush1.msra.mxu0 0.0
    %1957 = vmatprep.subr.mxu0 0.0
    %1958 = vmatpush1.msra.mxu0 0.0
    %1959 = vmatprep.subr.mxu0 0.0
    %1960 = vmatpush1.msra.mxu0 0.0
    %1961 = vmatprep.subr.mxu0 0.0
    %1962 = vmatpush1.msra.mxu0 0.0
    %1963 = vmatprep.subr.mxu0 0.0
    %1964 = vmatpush1.msra.mxu0 0.0
    %1965 = vmatprep.subr.mxu0 0.0
    %1966 = vmatpush1.msra.mxu0 0.0
    %1967 = vmatprep.subr.mxu0 0.0
    %1968 = vmatpush1.msra.mxu0 0.0
    %1969 = vmatprep.subr.mxu0 0.0
    %1970 = vmatpush1.msra.mxu0 0.0
    %1971 = vmatprep.subr.mxu0 0.0
    %1972 = vmatpush1.msra.mxu0 0.0
    %1973 = vmatprep.subr.mxu0 0.0
    %1974 = vmatpush1.msra.mxu0 0.0
    %1975 = vmatprep.subr.mxu0 0.0
    %1976 = vmatpush1.msra.mxu0 0.0
    %1977 = vmatprep.subr.mxu0 0.0
    %1978 = vmatpush1.msra.mxu0 0.0
    %1979 = vmatprep.subr.mxu0 0.0
    %1980 = vmatpush1.msra.mxu0 0.0
    %1981 = vmatprep.subr.mxu0 0.0
    %1982 = vmatpush1.msra.mxu0 0.0
    %1983 = vmatprep.subr.mxu0 0.0
    %1984 = vmatpush1.msra.mxu0 0.0
    %1985 = vmatprep.mubr.f32.mxu0 0.0
    %1986 = vmatmul.mubr.f32.gmra.mrb[0].mxu0 %v1419
    %v1987 = vpop.f32.mrb[0].mxu0
    %v1988 = vadd.f32 0.0, %v1987
    %v1989 = vpop.f32.mrb[0].mxu0
    %v1990 = vadd.f32 0.0, %v1989
    %1991 = vmatprep.mubr.f32.mxu0 0.0
    %1992 = vmatmul.mubr.f32.gmra.mrb[0].mxu0 %v1420
    %v1993 = vpop.f32.mrb[0].mxu0
    %v1994 = vadd.f32 0.0, %v1993
    %v1995 = vpop.f32.mrb[0].mxu0
    %v1996 = vadd.f32 0.0, %v1995
    %1997 = vdwg.mxu0
    %1998 = vmatprep.subr.mxu0 %v1432
    %1999 = vmatpush1.msra.mxu0 %v1431
    %2000 = vmatprep.subr.mxu0 %v1444
    %2001 = vmatpush1.msra.mxu0 %v1443
    %2002 = vmatprep.subr.mxu0 %v1456
    %2003 = vmatpush1.msra.mxu0 %v1455
    %2004 = vmatprep.subr.mxu0 %v1468
    %2005 = vmatpush1.msra.mxu0 %v1467
    %2006 = vmatprep.subr.mxu0 %v1480
    %2007 = vmatpush1.msra.mxu0 %v1479
    %2008 = vmatprep.subr.mxu0 %v1492
    %2009 = vmatpush1.msra.mxu0 %v1491
    %2010 = vmatprep.subr.mxu0 %v1504
    %2011 = vmatpush1.msra.mxu0 %v1503
    %2012 = vmatprep.subr.mxu0 %v1516
    %2013 = vmatpush1.msra.mxu0 %v1515
    %2014 = vmatprep.subr.mxu0 %v1528
    %2015 = vmatpush1.msra.mxu0 %v1527
    %2016 = vmatprep.subr.mxu0 %v1540
    %2017 = vmatpush1.msra.mxu0 %v1539
    %2018 = vmatprep.subr.mxu0 %v1552
    %2019 = vmatpush1.msra.mxu0 %v1551
    %2020 = vmatprep.subr.mxu0 %v1564
    %2021 = vmatpush1.msra.mxu0 %v1563
    %2022 = vmatprep.subr.mxu0 %v1576
    %2023 = vmatpush1.msra.mxu0 %v1575
    %2024 = vmatprep.subr.mxu0 %v1588
    %2025 = vmatpush1.msra.mxu0 %v1587
    %2026 = vmatprep.subr.mxu0 %v1600
    %2027 = vmatpush1.msra.mxu0 %v1599
    %2028 = vmatprep.subr.mxu0 %v1612
    %2029 = vmatpush1.msra.mxu0 %v1611
    %2030 = vmatprep.subr.mxu0 0.0
    %2031 = vmatpush1.msra.mxu0 0.0
    %2032 = vmatprep.subr.mxu0 0.0
    %2033 = vmatpush1.msra.mxu0 0.0
    %2034 = vmatprep.subr.mxu0 0.0
    %2035 = vmatpush1.msra.mxu0 0.0
    %2036 = vmatprep.subr.mxu0 0.0
    %2037 = vmatpush1.msra.mxu0 0.0
    %2038 = vmatprep.subr.mxu0 0.0
    %2039 = vmatpush1.msra.mxu0 0.0
    %2040 = vmatprep.subr.mxu0 0.0
    %2041 = vmatpush1.msra.mxu0 0.0
    %2042 = vmatprep.subr.mxu0 0.0
    %2043 = vmatpush1.msra.mxu0 0.0
    %2044 = vmatprep.subr.mxu0 0.0
    %2045 = vmatpush1.msra.mxu0 0.0
    %2046 = vmatprep.subr.mxu0 0.0
    %2047 = vmatpush1.msra.mxu0 0.0
    %2048 = vmatprep.subr.mxu0 0.0
    %2049 = vmatpush1.msra.mxu0 0.0
    %2050 = vmatprep.subr.mxu0 0.0
    %2051 = vmatpush1.msra.mxu0 0.0
    %2052 = vmatprep.subr.mxu0 0.0
    %2053 = vmatpush1.msra.mxu0 0.0
    %2054 = vmatprep.subr.mxu0 0.0
    %2055 = vmatpush1.msra.mxu0 0.0
    %2056 = vmatprep.subr.mxu0 0.0
    %2057 = vmatpush1.msra.mxu0 0.0
    %2058 = vmatprep.subr.mxu0 0.0
    %2059 = vmatpush1.msra.mxu0 0.0
    %2060 = vmatprep.subr.mxu0 0.0
    %2061 = vmatpush1.msra.mxu0 0.0
    %2062 = vmatprep.mubr.f32.mxu0 0.0
    %2063 = vmatmul.mubr.f32.gmra.mrb[0].mxu0 %v1419
    %v2064 = vpop.f32.mrb[0].mxu0
    %v2065 = vadd.f32 0.0, %v2064
    %v2066 = vpop.f32.mrb[0].mxu0
    %v2067 = vadd.f32 0.0, %v2066
    %2068 = vmatprep.mubr.f32.mxu0 0.0
    %2069 = vmatmul.mubr.f32.gmra.mrb[0].mxu0 %v1420
    %v2070 = vpop.f32.mrb[0].mxu0
    %v2071 = vadd.f32 0.0, %v2070
    %v2072 = vpop.f32.mrb[0].mxu0
    %v2073 = vadd.f32 0.0, %v2072
    %2074 = vdwg.mxu0
    %v2075 = vmul.f32 %v1680, %v1834
    %v2076 = vmul.f32 %v1680, %v1836
    %v2077 = vmul.f32 %v1680, %v1911
    %v2078 = vmul.f32 %v1680, %v1913
    %v2079 = vmul.f32 %v1686, %v1840
    %v2080 = vmul.f32 %v1686, %v1842
    %v2081 = vmul.f32 %v1686, %v1917
    %v2082 = vmul.f32 %v1686, %v1919
    %v2083 = vld [vmem:[%s18] sm:$0xff]
    %v2084 = vld [vmem:[%s18 + $0x8] sm:$0xff]
    %v2085 = vld [vmem:[%s18 + $0x10] sm:$0xff]
    %v2086 = vld [vmem:[%s18 + $0x18] sm:$0xff]
    %v2087 = vld [vmem:[%s18 + $0x20] sm:$0xff]
    %v2088 = vld [vmem:[%s18 + $0x28] sm:$0xff]
    %v2089 = vld [vmem:[%s18 + $0x30] sm:$0xff]
    %v2090 = vld [vmem:[%s18 + $0x38] sm:$0xff]
    %v2091 = vld [vmem:[%s18 + $0x40] sm:$0xff]
    %v2092 = vld [vmem:[%s18 + $0x48] sm:$0xff]
    %v2093 = vld [vmem:[%s18 + $0x50] sm:$0xff]
    %v2094 = vld [vmem:[%s18 + $0x58] sm:$0xff]
    %v2095 = vld [vmem:[%s18 + $0x60] sm:$0xff]
    %v2096 = vld [vmem:[%s18 + $0x68] sm:$0xff]
    %v2097 = vld [vmem:[%s18 + $0x70] sm:$0xff]
    %v2098 = vld [vmem:[%s18 + $0x78] sm:$0xff]
    %v2099 = vld [vmem:[%s18 + $0x80] sm:$0xff]
    %v2100 = vld [vmem:[%s18 + $0x88] sm:$0xff]
    %v2101 = vld [vmem:[%s18 + $0x90] sm:$0xff]
    %v2102 = vld [vmem:[%s18 + $0x98] sm:$0xff]
    %v2103 = vld [vmem:[%s18 + $0xa0] sm:$0xff]
    %v2104 = vld [vmem:[%s18 + $0xa8] sm:$0xff]
    %v2105 = vld [vmem:[%s18 + $0xb0] sm:$0xff]
    %v2106 = vld [vmem:[%s18 + $0xb8] sm:$0xff]
    %v2107 = vld [vmem:[%s18 + $0xc0] sm:$0xff]
    %v2108 = vld [vmem:[%s18 + $0xc8] sm:$0xff]
    %v2109 = vld [vmem:[%s18 + $0xd0] sm:$0xff]
    %v2110 = vld [vmem:[%s18 + $0xd8] sm:$0xff]
    %v2111 = vld [vmem:[%s18 + $0xe0] sm:$0xff]
    %v2112 = vld [vmem:[%s18 + $0xe8] sm:$0xff]
    %v2113 = vld [vmem:[%s18 + $0xf0] sm:$0xff]
    %v2114 = vld [vmem:[%s18 + $0xf8] sm:$0xff]
    %v2115 = vld [vmem:[%s18 + $0x100] sm:$0xff]
    %v2116 = vld [vmem:[%s18 + $0x108] sm:$0xff]
    %v2117 = vld [vmem:[%s18 + $0x110] sm:$0xff]
    %v2118 = vld [vmem:[%s18 + $0x118] sm:$0xff]
    %v2119 = vld [vmem:[%s18 + $0x120] sm:$0xff]
    %v2120 = vld [vmem:[%s18 + $0x128] sm:$0xff]
    %v2121 = vld [vmem:[%s18 + $0x130] sm:$0xff]
    %v2122 = vld [vmem:[%s18 + $0x138] sm:$0xff]
    %v2123 = vld [vmem:[%s18 + $0x140] sm:$0xff]
    %v2124 = vld [vmem:[%s18 + $0x148] sm:$0xff]
    %v2125 = vld [vmem:[%s18 + $0x150] sm:$0xff]
    %v2126 = vld [vmem:[%s18 + $0x158] sm:$0xff]
    %v2127 = vld [vmem:[%s18 + $0x160] sm:$0xff]
    %v2128 = vld [vmem:[%s18 + $0x168] sm:$0xff]
    %v2129 = vld [vmem:[%s18 + $0x170] sm:$0xff]
    %v2130 = vld [vmem:[%s18 + $0x178] sm:$0xff]
    %v2131 = vld [vmem:[%s18 + $0x180] sm:$0xff]
    %v2132 = vld [vmem:[%s18 + $0x188] sm:$0xff]
    %v2133 = vld [vmem:[%s18 + $0x190] sm:$0xff]
    %v2134 = vld [vmem:[%s18 + $0x198] sm:$0xff]
    %v2135 = vld [vmem:[%s18 + $0x1a0] sm:$0xff]
    %v2136 = vld [vmem:[%s18 + $0x1a8] sm:$0xff]
    %v2137 = vld [vmem:[%s18 + $0x1b0] sm:$0xff]
    %v2138 = vld [vmem:[%s18 + $0x1b8] sm:$0xff]
    %v2139 = vld [vmem:[%s18 + $0x1c0] sm:$0xff]
    %v2140 = vld [vmem:[%s18 + $0x1c8] sm:$0xff]
    %v2141 = vld [vmem:[%s18 + $0x1d0] sm:$0xff]
    %v2142 = vld [vmem:[%s18 + $0x1d8] sm:$0xff]
    %v2143 = vld [vmem:[%s18 + $0x1e0] sm:$0xff]
    %v2144 = vld [vmem:[%s18 + $0x1e8] sm:$0xff]
    %v2145 = vld [vmem:[%s18 + $0x1f0] sm:$0xff]
    %v2146 = vld [vmem:[%s18 + $0x1f8] sm:$0xff]
    %2147 = vmatprep.subr.mxu0 0.0
    %2148 = vmatpush1.msra.mxu0 %v2083
    %2149 = vmatprep.subr.mxu0 0.0
    %2150 = vmatpush1.msra.mxu0 %v2084
    %2151 = vmatprep.subr.mxu0 0.0
    %2152 = vmatpush1.msra.mxu0 %v2085
    %2153 = vmatprep.subr.mxu0 0.0
    %2154 = vmatpush1.msra.mxu0 %v2086
    %2155 = vmatprep.subr.mxu0 0.0
    %2156 = vmatpush1.msra.mxu0 %v2087
    %2157 = vmatprep.subr.mxu0 0.0
    %2158 = vmatpush1.msra.mxu0 %v2088
    %2159 = vmatprep.subr.mxu0 0.0
    %2160 = vmatpush1.msra.mxu0 %v2089
    %2161 = vmatprep.subr.mxu0 0.0
    %2162 = vmatpush1.msra.mxu0 %v2090
    %2163 = vmatprep.subr.mxu0 0.0
    %2164 = vmatpush1.msra.mxu0 %v2091
    %2165 = vmatprep.subr.mxu0 0.0
    %2166 = vmatpush1.msra.mxu0 %v2092
    %2167 = vmatprep.subr.mxu0 0.0
    %2168 = vmatpush1.msra.mxu0 %v2093
    %2169 = vmatprep.subr.mxu0 0.0
    %2170 = vmatpush1.msra.mxu0 %v2094
    %2171 = vmatprep.subr.mxu0 0.0
    %2172 = vmatpush1.msra.mxu0 %v2095
    %2173 = vmatprep.subr.mxu0 0.0
    %2174 = vmatpush1.msra.mxu0 %v2096
    %2175 = vmatprep.subr.mxu0 0.0
    %2176 = vmatpush1.msra.mxu0 %v2097
    %2177 = vmatprep.subr.mxu0 0.0
    %2178 = vmatpush1.msra.mxu0 %v2098
    %2179 = vmatprep.subr.mxu0 0.0
    %2180 = vmatpush1.msra.mxu0 %v2099
    %2181 = vmatprep.subr.mxu0 0.0
    %2182 = vmatpush1.msra.mxu0 %v2100
    %2183 = vmatprep.subr.mxu0 0.0
    %2184 = vmatpush1.msra.mxu0 %v2101
    %2185 = vmatprep.subr.mxu0 0.0
    %2186 = vmatpush1.msra.mxu0 %v2102
    %2187 = vmatprep.subr.mxu0 0.0
    %2188 = vmatpush1.msra.mxu0 %v2103
    %2189 = vmatprep.subr.mxu0 0.0
    %2190 = vmatpush1.msra.mxu0 %v2104
    %2191 = vmatprep.subr.mxu0 0.0
    %2192 = vmatpush1.msra.mxu0 %v2105
    %2193 = vmatprep.subr.mxu0 0.0
    %2194 = vmatpush1.msra.mxu0 %v2106
    %2195 = vmatprep.subr.mxu0 0.0
    %2196 = vmatpush1.msra.mxu0 %v2107
    %2197 = vmatprep.subr.mxu0 0.0
    %2198 = vmatpush1.msra.mxu0 %v2108
    %2199 = vmatprep.subr.mxu0 0.0
    %2200 = vmatpush1.msra.mxu0 %v2109
    %2201 = vmatprep.subr.mxu0 0.0
    %2202 = vmatpush1.msra.mxu0 %v2110
    %2203 = vmatprep.subr.mxu0 0.0
    %2204 = vmatpush1.msra.mxu0 %v2111
    %2205 = vmatprep.subr.mxu0 0.0
    %2206 = vmatpush1.msra.mxu0 %v2112
    %2207 = vmatprep.subr.mxu0 0.0
    %2208 = vmatpush1.msra.mxu0 %v2113
    %2209 = vmatprep.subr.mxu0 0.0
    %2210 = vmatpush1.msra.mxu0 %v2114
    %2211 = vmatprep.mubr.f32.mxu0 %v2076
    %2212 = vmatmul.mubr.f32.gmra.mrb[0].mxu0 %v2075
    %v2213 = vpop.f32.mrb[0].mxu0
    %v2214 = vadd.f32 0.0, %v2213
    %v2215 = vpop.f32.mrb[0].mxu0
    %2216 = vmatprep.mubr.f32.mxu0 %v2080
    %2217 = vmatmul.mubr.f32.gmra.mrb[0].mxu0 %v2079
    %v2218 = vpop.f32.mrb[0].mxu0
    %v2219 = vadd.f32 0.0, %v2218
    %v2220 = vpop.f32.mrb[0].mxu0
    %2221 = vdwg.mxu0
    %2222 = vmatprep.subr.mxu0 0.0
    %2223 = vmatpush1.msra.mxu0 %v2115
    %2224 = vmatprep.subr.mxu0 0.0
    %2225 = vmatpush1.msra.mxu0 %v2116
    %2226 = vmatprep.subr.mxu0 0.0
    %2227 = vmatpush1.msra.mxu0 %v2117
    %2228 = vmatprep.subr.mxu0 0.0
    %2229 = vmatpush1.msra.mxu0 %v2118
    %2230 = vmatprep.subr.mxu0 0.0
    %2231 = vmatpush1.msra.mxu0 %v2119
    %2232 = vmatprep.subr.mxu0 0.0
    %2233 = vmatpush1.msra.mxu0 %v2120
    %2234 = vmatprep.subr.mxu0 0.0
    %2235 = vmatpush1.msra.mxu0 %v2121
    %2236 = vmatprep.subr.mxu0 0.0
    %2237 = vmatpush1.msra.mxu0 %v2122
    %2238 = vmatprep.subr.mxu0 0.0
    %2239 = vmatpush1.msra.mxu0 %v2123
    %2240 = vmatprep.subr.mxu0 0.0
    %2241 = vmatpush1.msra.mxu0 %v2124
    %2242 = vmatprep.subr.mxu0 0.0
    %2243 = vmatpush1.msra.mxu0 %v2125
    %2244 = vmatprep.subr.mxu0 0.0
    %2245 = vmatpush1.msra.mxu0 %v2126
    %2246 = vmatprep.subr.mxu0 0.0
    %2247 = vmatpush1.msra.mxu0 %v2127
    %2248 = vmatprep.subr.mxu0 0.0
    %2249 = vmatpush1.msra.mxu0 %v2128
    %2250 = vmatprep.subr.mxu0 0.0
    %2251 = vmatpush1.msra.mxu0 %v2129
    %2252 = vmatprep.subr.mxu0 0.0
    %2253 = vmatpush1.msra.mxu0 %v2130
    %2254 = vmatprep.subr.mxu0 0.0
    %2255 = vmatpush1.msra.mxu0 %v2131
    %2256 = vmatprep.subr.mxu0 0.0
    %2257 = vmatpush1.msra.mxu0 %v2132
    %2258 = vmatprep.subr.mxu0 0.0
    %2259 = vmatpush1.msra.mxu0 %v2133
    %2260 = vmatprep.subr.mxu0 0.0
    %2261 = vmatpush1.msra.mxu0 %v2134
    %2262 = vmatprep.subr.mxu0 0.0
    %2263 = vmatpush1.msra.mxu0 %v2135
    %2264 = vmatprep.subr.mxu0 0.0
    %2265 = vmatpush1.msra.mxu0 %v2136
    %2266 = vmatprep.subr.mxu0 0.0
    %2267 = vmatpush1.msra.mxu0 %v2137
    %2268 = vmatprep.subr.mxu0 0.0
    %2269 = vmatpush1.msra.mxu0 %v2138
    %2270 = vmatprep.subr.mxu0 0.0
    %2271 = vmatpush1.msra.mxu0 %v2139
    %2272 = vmatprep.subr.mxu0 0.0
    %2273 = vmatpush1.msra.mxu0 %v2140
    %2274 = vmatprep.subr.mxu0 0.0
    %2275 = vmatpush1.msra.mxu0 %v2141
    %2276 = vmatprep.subr.mxu0 0.0
    %2277 = vmatpush1.msra.mxu0 %v2142
    %2278 = vmatprep.subr.mxu0 0.0
    %2279 = vmatpush1.msra.mxu0 %v2143
    %2280 = vmatprep.subr.mxu0 0.0
    %2281 = vmatpush1.msra.mxu0 %v2144
    %2282 = vmatprep.subr.mxu0 0.0
    %2283 = vmatpush1.msra.mxu0 %v2145
    %2284 = vmatprep.subr.mxu0 0.0
    %2285 = vmatpush1.msra.mxu0 %v2146
    %2286 = vmatprep.mubr.f32.mxu0 %v2078
    %2287 = vmatmul.mubr.f32.gmra.mrb[0].mxu0 %v2077
    %v2288 = vpop.f32.mrb[0].mxu0
    %v2289 = vadd.f32 %v2214, %v2288
    %v2290 = vpop.f32.mrb[0].mxu0
    %2291 = vmatprep.mubr.f32.mxu0 %v2082
    %2292 = vmatmul.mubr.f32.gmra.mrb[0].mxu0 %v2081
    %v2293 = vpop.f32.mrb[0].mxu0
    %v2294 = vadd.f32 %v2219, %v2293
    %v2295 = vpop.f32.mrb[0].mxu0
    %2296 = vdwg.mxu0
    %v2297 = vmul.f32 %v2289, 0.17677669
    %v2298 = vmul.f32 %v2294, 0.17677669
    %v2299 = vsel %vm991, %v2297, -inf
    %2300 = vmax.xlane.f32.xlu0 %v2299
    %v2301 = vpop.xlane.xlu0 %2300
    %v2302 = vsel %vm991, %v2298, -inf
    %2303 = vmax.xlane.f32.xlu0 %v2302
    %v2304 = vpop.xlane.xlu0 %2303
    %v2305 = vsub.f32 %v2297, %v2301
    %v2306 = vsub.f32 %v2298, %v2304
    %v2307 = vmul.f32 %v2305, 1.442695
    %v2308 = vpow.pop %v2307
    %v2309 = vmul.f32 %v2306, 1.442695
    %v2310 = vpow.pop %v2309
    %v2311 = vld [vmem:[%s19] sm:$0xff]
    %v2312 = vld [vmem:[%s19 + $0x8] sm:$0xff]
    %v2313 = vld [vmem:[%s19 + $0x10] sm:$0xff]
    %v2314 = vld [vmem:[%s19 + $0x18] sm:$0xff]
    %v2315 = vld [vmem:[%s19 + $0x20] sm:$0xff]
    %v2316 = vld [vmem:[%s19 + $0x28] sm:$0xff]
    %v2317 = vld [vmem:[%s19 + $0x30] sm:$0xff]
    %v2318 = vld [vmem:[%s19 + $0x38] sm:$0xff]
    %v2320 = vsel %vm991, %v2308, 0
    %v2323 = vsel %vm991, %v2310, 0
    %2325 = vmatprep.subr.mxu0 %v2312
    %2326 = vmatpush1.msra.mxu0 %v2311
    %2327 = vmatprep.subr.mxu0 %v2316
    %2328 = vmatpush1.msra.mxu0 %v2315
    %2329 = vmatprep.subr.mxu0 0.0
    %2330 = vmatpush1.msra.mxu0 0.0
    %2331 = vmatprep.subr.mxu0 0.0
    %2332 = vmatpush1.msra.mxu0 0.0
    %2333 = vmatprep.subr.mxu0 0.0
    %2334 = vmatpush1.msra.mxu0 0.0
    %2335 = vmatprep.subr.mxu0 0.0
    %2336 = vmatpush1.msra.mxu0 0.0
    %2337 = vmatprep.subr.mxu0 0.0
    %2338 = vmatpush1.msra.mxu0 0.0
    %2339 = vmatprep.subr.mxu0 0.0
    %2340 = vmatpush1.msra.mxu0 0.0
    %2341 = vmatprep.subr.mxu0 0.0
    %2342 = vmatpush1.msra.mxu0 0.0
    %2343 = vmatprep.subr.mxu0 0.0
    %2344 = vmatpush1.msra.mxu0 0.0
    %2345 = vmatprep.subr.mxu0 0.0
    %2346 = vmatpush1.msra.mxu0 0.0
    %2347 = vmatprep.subr.mxu0 0.0
    %2348 = vmatpush1.msra.mxu0 0.0
    %2349 = vmatprep.subr.mxu0 0.0
    %2350 = vmatpush1.msra.mxu0 0.0
    %2351 = vmatprep.subr.mxu0 0.0
    %2352 = vmatpush1.msra.mxu0 0.0
    %2353 = vmatprep.subr.mxu0 0.0
    %2354 = vmatpush1.msra.mxu0 0.0
    %2355 = vmatprep.subr.mxu0 0.0
    %2356 = vmatpush1.msra.mxu0 0.0
    %2357 = vmatprep.subr.mxu0 0.0
    %2358 = vmatpush1.msra.mxu0 0.0
    %2359 = vmatprep.subr.mxu0 0.0
    %2360 = vmatpush1.msra.mxu0 0.0
    %2361 = vmatprep.subr.mxu0 0.0
    %2362 = vmatpush1.msra.mxu0 0.0
    %2363 = vmatprep.subr.mxu0 0.0
    %2364 = vmatpush1.msra.mxu0 0.0
    %2365 = vmatprep.subr.mxu0 0.0
    %2366 = vmatpush1.msra.mxu0 0.0
    %2367 = vmatprep.subr.mxu0 0.0
    %2368 = vmatpush1.msra.mxu0 0.0
    %2369 = vmatprep.subr.mxu0 0.0
    %2370 = vmatpush1.msra.mxu0 0.0
    %2371 = vmatprep.subr.mxu0 0.0
    %2372 = vmatpush1.msra.mxu0 0.0
    %2373 = vmatprep.subr.mxu0 0.0
    %2374 = vmatpush1.msra.mxu0 0.0
    %2375 = vmatprep.subr.mxu0 0.0
    %2376 = vmatpush1.msra.mxu0 0.0
    %2377 = vmatprep.subr.mxu0 0.0
    %2378 = vmatpush1.msra.mxu0 0.0
    %2379 = vmatprep.subr.mxu0 0.0
    %2380 = vmatpush1.msra.mxu0 0.0
    %2381 = vmatprep.subr.mxu0 0.0
    %2382 = vmatpush1.msra.mxu0 0.0
    %2383 = vmatprep.subr.mxu0 0.0
    %2384 = vmatpush1.msra.mxu0 0.0
    %2385 = vmatprep.subr.mxu0 0.0
    %2386 = vmatpush1.msra.mxu0 0.0
    %2387 = vmatprep.subr.mxu0 0.0
    %2388 = vmatpush1.msra.mxu0 0.0
    %2389 = vmatprep.mubr.f32.mxu0 0.0
    %2390 = vmatmul.mubr.f32.gmra.mrb[0].mxu0 %v2320
    %v2391 = vpop.f32.mrb[0].mxu0
    %v2392 = vadd.f32 0.0, %v2391
    %v2393 = vpop.f32.mrb[0].mxu0
    %v2394 = vadd.f32 0.0, %v2393
    %2395 = vmatprep.mubr.f32.mxu0 0.0
    %2396 = vmatmul.mubr.f32.gmra.mrb[0].mxu0 %v2323
    %v2397 = vpop.f32.mrb[0].mxu0
    %v2398 = vadd.f32 0.0, %v2397
    %v2399 = vpop.f32.mrb[0].mxu0
    %v2400 = vadd.f32 0.0, %v2399
    %2401 = vdwg.mxu0
    %2402 = vmatprep.subr.mxu0 %v2314
    %2403 = vmatpush1.msra.mxu0 %v2313
    %2404 = vmatprep.subr.mxu0 %v2318
    %2405 = vmatpush1.msra.mxu0 %v2317
    %2406 = vmatprep.subr.mxu0 0.0
    %2407 = vmatpush1.msra.mxu0 0.0
    %2408 = vmatprep.subr.mxu0 0.0
    %2409 = vmatpush1.msra.mxu0 0.0
    %2410 = vmatprep.subr.mxu0 0.0
    %2411 = vmatpush1.msra.mxu0 0.0
    %2412 = vmatprep.subr.mxu0 0.0
    %2413 = vmatpush1.msra.mxu0 0.0
    %2414 = vmatprep.subr.mxu0 0.0
    %2415 = vmatpush1.msra.mxu0 0.0
    %2416 = vmatprep.subr.mxu0 0.0
    %2417 = vmatpush1.msra.mxu0 0.0
    %2418 = vmatprep.subr.mxu0 0.0
    %2419 = vmatpush1.msra.mxu0 0.0
    %2420 = vmatprep.subr.mxu0 0.0
    %2421 = vmatpush1.msra.mxu0 0.0
    %2422 = vmatprep.subr.mxu0 0.0
    %2423 = vmatpush1.msra.mxu0 0.0
    %2424 = vmatprep.subr.mxu0 0.0
    %2425 = vmatpush1.msra.mxu0 0.0
    %2426 = vmatprep.subr.mxu0 0.0
    %2427 = vmatpush1.msra.mxu0 0.0
    %2428 = vmatprep.subr.mxu0 0.0
    %2429 = vmatpush1.msra.mxu0 0.0
    %2430 = vmatprep.subr.mxu0 0.0
    %2431 = vmatpush1.msra.mxu0 0.0
    %2432 = vmatprep.subr.mxu0 0.0
    %2433 = vmatpush1.msra.mxu0 0.0
    %2434 = vmatprep.subr.mxu0 0.0
    %2435 = vmatpush1.msra.mxu0 0.0
    %2436 = vmatprep.subr.mxu0 0.0
    %2437 = vmatpush1.msra.mxu0 0.0
    %2438 = vmatprep.subr.mxu0 0.0
    %2439 = vmatpush1.msra.mxu0 0.0
    %2440 = vmatprep.subr.mxu0 0.0
    %2441 = vmatpush1.msra.mxu0 0.0
    %2442 = vmatprep.subr.mxu0 0.0
    %2443 = vmatpush1.msra.mxu0 0.0
    %2444 = vmatprep.subr.mxu0 0.0
    %2445 = vmatpush1.msra.mxu0 0.0
    %2446 = vmatprep.subr.mxu0 0.0
    %2447 = vmatpush1.msra.mxu0 0.0
    %2448 = vmatprep.subr.mxu0 0.0
    %2449 = vmatpush1.msra.mxu0 0.0
    %2450 = vmatprep.subr.mxu0 0.0
    %2451 = vmatpush1.msra.mxu0 0.0
    %2452 = vmatprep.subr.mxu0 0.0
    %2453 = vmatpush1.msra.mxu0 0.0
    %2454 = vmatprep.subr.mxu0 0.0
    %2455 = vmatpush1.msra.mxu0 0.0
    %2456 = vmatprep.subr.mxu0 0.0
    %2457 = vmatpush1.msra.mxu0 0.0
    %2458 = vmatprep.subr.mxu0 0.0
    %2459 = vmatpush1.msra.mxu0 0.0
    %2460 = vmatprep.subr.mxu0 0.0
    %2461 = vmatpush1.msra.mxu0 0.0
    %2462 = vmatprep.subr.mxu0 0.0
    %2463 = vmatpush1.msra.mxu0 0.0
    %2464 = vmatprep.subr.mxu0 0.0
    %2465 = vmatpush1.msra.mxu0 0.0
    %2466 = vmatprep.mubr.f32.mxu0 0.0
    %2467 = vmatmul.mubr.f32.gmra.mrb[0].mxu0 %v2320
    %v2468 = vpop.f32.mrb[0].mxu0
    %v2469 = vadd.f32 0.0, %v2468
    %v2470 = vpop.f32.mrb[0].mxu0
    %v2471 = vadd.f32 0.0, %v2470
    %2472 = vmatprep.mubr.f32.mxu0 0.0
    %2473 = vmatmul.mubr.f32.gmra.mrb[0].mxu0 %v2323
    %v2474 = vpop.f32.mrb[0].mxu0
    %v2475 = vadd.f32 0.0, %v2474
    %v2476 = vpop.f32.mrb[0].mxu0
    %v2477 = vadd.f32 0.0, %v2476
    %2478 = vdwg.mxu0
    %v2479 = vmul.f32 %v2392, %v1988
    %v2480 = vmul.f32 %v2394, %v1990
    %v2481 = vmul.f32 %v2469, %v2065
    %v2482 = vmul.f32 %v2471, %v2067
    %v2483 = vmul.f32 %v2398, %v1994
    %v2484 = vmul.f32 %v2400, %v1996
    %v2485 = vmul.f32 %v2475, %v2071
    %v2486 = vmul.f32 %v2477, %v2073
    %v2487 = vadd.f32 %v2479, %v2480
    %v2488 = vadd.f32 %v2483, %v2484
    %v2489 = vadd.f32 %v2487, %v2481
    %v2490 = vadd.f32 %v2488, %v2485
    %v2491 = vadd.f32 %v2489, %v2482
    %v2492 = vadd.f32 %v2490, %v2486
    %v2493 = vld [vmem:[%s20] sm:$0xff]
    %v2494 = vld [vmem:[%s20 + $0x8] sm:$0xff]
    %2495 = vmatprep.subr.mxu0 0.0
    %2496 = vmatpush1.msra.mxu0 %v2493
    %2497 = vmatprep.subr.mxu0 0.0
    %2498 = vmatpush1.msra.mxu0 %v2494
    %2499 = vmatprep.subr.mxu0 0.0
    %2500 = vmatpush1.msra.mxu0 0.0
    %2501 = vmatprep.subr.mxu0 0.0
    %2502 = vmatpush1.msra.mxu0 0.0
    %2503 = vmatprep.subr.mxu0 0.0
    %2504 = vmatpush1.msra.mxu0 0.0
    %2505 = vmatprep.subr.mxu0 0.0
    %2506 = vmatpush1.msra.mxu0 0.0
    %2507 = vmatprep.subr.mxu0 0.0
    %2508 = vmatpush1.msra.mxu0 0.0
    %2509 = vmatprep.subr.mxu0 0.0
    %2510 = vmatpush1.msra.mxu0 0.0
    %2511 = vmatprep.subr.mxu0 0.0
    %2512 = vmatpush1.msra.mxu0 0.0
    %2513 = vmatprep.subr.mxu0 0.0
    %2514 = vmatpush1.msra.mxu0 0.0
    %2515 = vmatprep.subr.mxu0 0.0
    %2516 = vmatpush1.msra.mxu0 0.0
    %2517 = vmatprep.subr.mxu0 0.0
    %2518 = vmatpush1.msra.mxu0 0.0
    %2519 = vmatprep.subr.mxu0 0.0
    %2520 = vmatpush1.msra.mxu0 0.0
    %2521 = vmatprep.subr.mxu0 0.0
    %2522 = vmatpush1.msra.mxu0 0.0
    %2523 = vmatprep.subr.mxu0 0.0
    %2524 = vmatpush1.msra.mxu0 0.0
    %2525 = vmatprep.subr.mxu0 0.0
    %2526 = vmatpush1.msra.mxu0 0.0
    %2527 = vmatprep.subr.mxu0 0.0
    %2528 = vmatpush1.msra.mxu0 0.0
    %2529 = vmatprep.subr.mxu0 0.0
    %2530 = vmatpush1.msra.mxu0 0.0
    %2531 = vmatprep.subr.mxu0 0.0
    %2532 = vmatpush1.msra.mxu0 0.0
    %2533 = vmatprep.subr.mxu0 0.0
    %2534 = vmatpush1.msra.mxu0 0.0
    %2535 = vmatprep.subr.mxu0 0.0
    %2536 = vmatpush1.msra.mxu0 0.0
    %2537 = vmatprep.subr.mxu0 0.0
    %2538 = vmatpush1.msra.mxu0 0.0
    %2539 = vmatprep.subr.mxu0 0.0
    %2540 = vmatpush1.msra.mxu0 0.0
    %2541 = vmatprep.subr.mxu0 0.0
    %2542 = vmatpush1.msra.mxu0 0.0
    %2543 = vmatprep.subr.mxu0 0.0
    %2544 = vmatpush1.msra.mxu0 0.0
    %2545 = vmatprep.subr.mxu0 0.0
    %2546 = vmatpush1.msra.mxu0 0.0
    %2547 = vmatprep.subr.mxu0 0.0
    %2548 = vmatpush1.msra.mxu0 0.0
    %2549 = vmatprep.subr.mxu0 0.0
    %2550 = vmatpush1.msra.mxu0 0.0
    %2551 = vmatprep.subr.mxu0 0.0
    %2552 = vmatpush1.msra.mxu0 0.0
    %2553 = vmatprep.subr.mxu0 0.0
    %2554 = vmatpush1.msra.mxu0 0.0
    %2555 = vmatprep.subr.mxu0 0.0
    %2556 = vmatpush1.msra.mxu0 0.0
    %2557 = vmatprep.subr.mxu0 0.0
    %2558 = vmatpush1.msra.mxu0 0.0
    %2559 = vmatprep.mubr.f32.mxu0 0.0
    %2560 = vmatmul.mubr.f32.gmra.mrb[0].mxu0 %v2320
    %v2561 = vpop.f32.mrb[0].mxu0
    %v2562 = vadd.f32 0.0, %v2561
    %v2563 = vpop.f32.mrb[0].mxu0
    %2564 = vmatprep.mubr.f32.mxu0 0.0
    %2565 = vmatmul.mubr.f32.gmra.mrb[0].mxu0 %v2323
    %v2566 = vpop.f32.mrb[0].mxu0
    %v2567 = vadd.f32 0.0, %v2566
    %v2568 = vpop.f32.mrb[0].mxu0
    %2569 = vdwg.mxu0
    %v2570 = vrcp.pop %v2562
    %v2571 = vmul.f32 %v2491, %v2570
    %v2572 = vrcp.pop %v2567
    %v2573 = vmul.f32 %v2492, %v2572
    %v2574 = vmul.f32 %v1682, %v1834
    %v2575 = vmul.f32 %v1682, %v1836
    %v2576 = vmul.f32 %v1682, %v1911
    %v2577 = vmul.f32 %v1682, %v1913
    %v2578 = vmul.f32 %v1688, %v1840
    %v2579 = vmul.f32 %v1688, %v1842
    %v2580 = vmul.f32 %v1688, %v1917
    %v2581 = vmul.f32 %v1688, %v1919
    %2582 = vmatprep.subr.mxu0 0.0
    %2583 = vmatpush1.msra.mxu0 %v2083
    %2584 = vmatprep.subr.mxu0 0.0
    %2585 = vmatpush1.msra.mxu0 %v2084
    %2586 = vmatprep.subr.mxu0 0.0
    %2587 = vmatpush1.msra.mxu0 %v2085
    %2588 = vmatprep.subr.mxu0 0.0
    %2589 = vmatpush1.msra.mxu0 %v2086
    %2590 = vmatprep.subr.mxu0 0.0
    %2591 = vmatpush1.msra.mxu0 %v2087
    %2592 = vmatprep.subr.mxu0 0.0
    %2593 = vmatpush1.msra.mxu0 %v2088
    %2594 = vmatprep.subr.mxu0 0.0
    %2595 = vmatpush1.msra.mxu0 %v2089
    %2596 = vmatprep.subr.mxu0 0.0
    %2597 = vmatpush1.msra.mxu0 %v2090
    %2598 = vmatprep.subr.mxu0 0.0
    %2599 = vmatpush1.msra.mxu0 %v2091
    %2600 = vmatprep.subr.mxu0 0.0
    %2601 = vmatpush1.msra.mxu0 %v2092
    %2602 = vmatprep.subr.mxu0 0.0
    %2603 = vmatpush1.msra.mxu0 %v2093
    %2604 = vmatprep.subr.mxu0 0.0
    %2605 = vmatpush1.msra.mxu0 %v2094
    %2606 = vmatprep.subr.mxu0 0.0
    %2607 = vmatpush1.msra.mxu0 %v2095
    %2608 = vmatprep.subr.mxu0 0.0
    %2609 = vmatpush1.msra.mxu0 %v2096
    %2610 = vmatprep.subr.mxu0 0.0
    %2611 = vmatpush1.msra.mxu0 %v2097
    %2612 = vmatprep.subr.mxu0 0.0
    %2613 = vmatpush1.msra.mxu0 %v2098
    %2614 = vmatprep.subr.mxu0 0.0
    %2615 = vmatpush1.msra.mxu0 %v2099
    %2616 = vmatprep.subr.mxu0 0.0
    %2617 = vmatpush1.msra.mxu0 %v2100
    %2618 = vmatprep.subr.mxu0 0.0
    %2619 = vmatpush1.msra.mxu0 %v2101
    %2620 = vmatprep.subr.mxu0 0.0
    %2621 = vmatpush1.msra.mxu0 %v2102
    %2622 = vmatprep.subr.mxu0 0.0
    %2623 = vmatpush1.msra.mxu0 %v2103
    %2624 = vmatprep.subr.mxu0 0.0
    %2625 = vmatpush1.msra.mxu0 %v2104
    %2626 = vmatprep.subr.mxu0 0.0
    %2627 = vmatpush1.msra.mxu0 %v2105
    %2628 = vmatprep.subr.mxu0 0.0
    %2629 = vmatpush1.msra.mxu0 %v2106
    %2630 = vmatprep.subr.mxu0 0.0
    %2631 = vmatpush1.msra.mxu0 %v2107
    %2632 = vmatprep.subr.mxu0 0.0
    %2633 = vmatpush1.msra.mxu0 %v2108
    %2634 = vmatprep.subr.mxu0 0.0
    %2635 = vmatpush1.msra.mxu0 %v2109
    %2636 = vmatprep.subr.mxu0 0.0
    %2637 = vmatpush1.msra.mxu0 %v2110
    %2638 = vmatprep.subr.mxu0 0.0
    %2639 = vmatpush1.msra.mxu0 %v2111
    %2640 = vmatprep.subr.mxu0 0.0
    %2641 = vmatpush1.msra.mxu0 %v2112
    %2642 = vmatprep.subr.mxu0 0.0
    %2643 = vmatpush1.msra.mxu0 %v2113
    %2644 = vmatprep.subr.mxu0 0.0
    %2645 = vmatpush1.msra.mxu0 %v2114
    %2646 = vmatprep.mubr.f32.mxu0 %v2575
    %2647 = vmatmul.mubr.f32.gmra.mrb[0].mxu0 %v2574
    %v2648 = vpop.f32.mrb[0].mxu0
    %v2649 = vadd.f32 0.0, %v2648
    %v2650 = vpop.f32.mrb[0].mxu0
    %2651 = vmatprep.mubr.f32.mxu0 %v2579
    %2652 = vmatmul.mubr.f32.gmra.mrb[0].mxu0 %v2578
    %v2653 = vpop.f32.mrb[0].mxu0
    %v2654 = vadd.f32 0.0, %v2653
    %v2655 = vpop.f32.mrb[0].mxu0
    %2656 = vdwg.mxu0
    %2657 = vmatprep.subr.mxu0 0.0
    %2658 = vmatpush1.msra.mxu0 %v2115
    %2659 = vmatprep.subr.mxu0 0.0
    %2660 = vmatpush1.msra.mxu0 %v2116
    %2661 = vmatprep.subr.mxu0 0.0
    %2662 = vmatpush1.msra.mxu0 %v2117
    %2663 = vmatprep.subr.mxu0 0.0
    %2664 = vmatpush1.msra.mxu0 %v2118
    %2665 = vmatprep.subr.mxu0 0.0
    %2666 = vmatpush1.msra.mxu0 %v2119
    %2667 = vmatprep.subr.mxu0 0.0
    %2668 = vmatpush1.msra.mxu0 %v2120
    %2669 = vmatprep.subr.mxu0 0.0
    %2670 = vmatpush1.msra.mxu0 %v2121
    %2671 = vmatprep.subr.mxu0 0.0
    %2672 = vmatpush1.msra.mxu0 %v2122
    %2673 = vmatprep.subr.mxu0 0.0
    %2674 = vmatpush1.msra.mxu0 %v2123
    %2675 = vmatprep.subr.mxu0 0.0
    %2676 = vmatpush1.msra.mxu0 %v2124
    %2677 = vmatprep.subr.mxu0 0.0
    %2678 = vmatpush1.msra.mxu0 %v2125
    %2679 = vmatprep.subr.mxu0 0.0
    %2680 = vmatpush1.msra.mxu0 %v2126
    %2681 = vmatprep.subr.mxu0 0.0
    %2682 = vmatpush1.msra.mxu0 %v2127
    %2683 = vmatprep.subr.mxu0 0.0
    %2684 = vmatpush1.msra.mxu0 %v2128
    %2685 = vmatprep.subr.mxu0 0.0
    %2686 = vmatpush1.msra.mxu0 %v2129
    %2687 = vmatprep.subr.mxu0 0.0
    %2688 = vmatpush1.msra.mxu0 %v2130
    %2689 = vmatprep.subr.mxu0 0.0
    %2690 = vmatpush1.msra.mxu0 %v2131
    %2691 = vmatprep.subr.mxu0 0.0
    %2692 = vmatpush1.msra.mxu0 %v2132
    %2693 = vmatprep.subr.mxu0 0.0
    %2694 = vmatpush1.msra.mxu0 %v2133
    %2695 = vmatprep.subr.mxu0 0.0
    %2696 = vmatpush1.msra.mxu0 %v2134
    %2697 = vmatprep.subr.mxu0 0.0
    %2698 = vmatpush1.msra.mxu0 %v2135
    %2699 = vmatprep.subr.mxu0 0.0
    %2700 = vmatpush1.msra.mxu0 %v2136
    %2701 = vmatprep.subr.mxu0 0.0
    %2702 = vmatpush1.msra.mxu0 %v2137
    %2703 = vmatprep.subr.mxu0 0.0
    %2704 = vmatpush1.msra.mxu0 %v2138
    %2705 = vmatprep.subr.mxu0 0.0
    %2706 = vmatpush1.msra.mxu0 %v2139
    %2707 = vmatprep.subr.mxu0 0.0
    %2708 = vmatpush1.msra.mxu0 %v2140
    %2709 = vmatprep.subr.mxu0 0.0
    %2710 = vmatpush1.msra.mxu0 %v2141
    %2711 = vmatprep.subr.mxu0 0.0
    %2712 = vmatpush1.msra.mxu0 %v2142
    %2713 = vmatprep.subr.mxu0 0.0
    %2714 = vmatpush1.msra.mxu0 %v2143
    %2715 = vmatprep.subr.mxu0 0.0
    %2716 = vmatpush1.msra.mxu0 %v2144
    %2717 = vmatprep.subr.mxu0 0.0
    %2718 = vmatpush1.msra.mxu0 %v2145
    %2719 = vmatprep.subr.mxu0 0.0
    %2720 = vmatpush1.msra.mxu0 %v2146
    %2721 = vmatprep.mubr.f32.mxu0 %v2577
    %2722 = vmatmul.mubr.f32.gmra.mrb[0].mxu0 %v2576
    %v2723 = vpop.f32.mrb[0].mxu0
    %v2724 = vadd.f32 %v2649, %v2723
    %v2725 = vpop.f32.mrb[0].mxu0
    %2726 = vmatprep.mubr.f32.mxu0 %v2581
    %2727 = vmatmul.mubr.f32.gmra.mrb[0].mxu0 %v2580
    %v2728 = vpop.f32.mrb[0].mxu0
    %v2729 = vadd.f32 %v2654, %v2728
    %v2730 = vpop.f32.mrb[0].mxu0
    %2731 = vdwg.mxu0
    %v2732 = vmul.f32 %v2724, 0.17677669
    %v2733 = vmul.f32 %v2729, 0.17677669
    %v2734 = vsel %vm991, %v2732, -inf
    %2735 = vmax.xlane.f32.xlu0 %v2734
    %v2736 = vpop.xlane.xlu0 %2735
    %v2737 = vsel %vm991, %v2733, -inf
    %2738 = vmax.xlane.f32.xlu0 %v2737
    %v2739 = vpop.xlane.xlu0 %2738
    %v2740 = vsub.f32 %v2732, %v2736
    %v2741 = vsub.f32 %v2733, %v2739
    %v2742 = vmul.f32 %v2740, 1.442695
    %v2743 = vpow.pop %v2742
    %v2744 = vmul.f32 %v2741, 1.442695
    %v2745 = vpow.pop %v2744
    %v2747 = vsel %vm991, %v2743, 0
    %v2750 = vsel %vm991, %v2745, 0
    %2752 = vmatprep.subr.mxu0 %v2312
    %2753 = vmatpush1.msra.mxu0 %v2311
    %2754 = vmatprep.subr.mxu0 %v2316
    %2755 = vmatpush1.msra.mxu0 %v2315
    %2756 = vmatprep.subr.mxu0 0.0
    %2757 = vmatpush1.msra.mxu0 0.0
    %2758 = vmatprep.subr.mxu0 0.0
    %2759 = vmatpush1.msra.mxu0 0.0
    %2760 = vmatprep.subr.mxu0 0.0
    %2761 = vmatpush1.msra.mxu0 0.0
    %2762 = vmatprep.subr.mxu0 0.0
    %2763 = vmatpush1.msra.mxu0 0.0
    %2764 = vmatprep.subr.mxu0 0.0
    %2765 = vmatpush1.msra.mxu0 0.0
    %2766 = vmatprep.subr.mxu0 0.0
    %2767 = vmatpush1.msra.mxu0 0.0
    %2768 = vmatprep.subr.mxu0 0.0
    %2769 = vmatpush1.msra.mxu0 0.0
    %2770 = vmatprep.subr.mxu0 0.0
    %2771 = vmatpush1.msra.mxu0 0.0
    %2772 = vmatprep.subr.mxu0 0.0
    %2773 = vmatpush1.msra.mxu0 0.0
    %2774 = vmatprep.subr.mxu0 0.0
    %2775 = vmatpush1.msra.mxu0 0.0
    %2776 = vmatprep.subr.mxu0 0.0
    %2777 = vmatpush1.msra.mxu0 0.0
    %2778 = vmatprep.subr.mxu0 0.0
    %2779 = vmatpush1.msra.mxu0 0.0
    %2780 = vmatprep.subr.mxu0 0.0
    %2781 = vmatpush1.msra.mxu0 0.0
    %2782 = vmatprep.subr.mxu0 0.0
    %2783 = vmatpush1.msra.mxu0 0.0
    %2784 = vmatprep.subr.mxu0 0.0
    %2785 = vmatpush1.msra.mxu0 0.0
    %2786 = vmatprep.subr.mxu0 0.0
    %2787 = vmatpush1.msra.mxu0 0.0
    %2788 = vmatprep.subr.mxu0 0.0
    %2789 = vmatpush1.msra.mxu0 0.0
    %2790 = vmatprep.subr.mxu0 0.0
    %2791 = vmatpush1.msra.mxu0 0.0
    %2792 = vmatprep.subr.mxu0 0.0
    %2793 = vmatpush1.msra.mxu0 0.0
    %2794 = vmatprep.subr.mxu0 0.0
    %2795 = vmatpush1.msra.mxu0 0.0
    %2796 = vmatprep.subr.mxu0 0.0
    %2797 = vmatpush1.msra.mxu0 0.0
    %2798 = vmatprep.subr.mxu0 0.0
    %2799 = vmatpush1.msra.mxu0 0.0
    %2800 = vmatprep.subr.mxu0 0.0
    %2801 = vmatpush1.msra.mxu0 0.0
    %2802 = vmatprep.subr.mxu0 0.0
    %2803 = vmatpush1.msra.mxu0 0.0
    %2804 = vmatprep.subr.mxu0 0.0
    %2805 = vmatpush1.msra.mxu0 0.0
    %2806 = vmatprep.subr.mxu0 0.0
    %2807 = vmatpush1.msra.mxu0 0.0
    %2808 = vmatprep.subr.mxu0 0.0
    %2809 = vmatpush1.msra.mxu0 0.0
    %2810 = vmatprep.subr.mxu0 0.0
    %2811 = vmatpush1.msra.mxu0 0.0
    %2812 = vmatprep.subr.mxu0 0.0
    %2813 = vmatpush1.msra.mxu0 0.0
    %2814 = vmatprep.subr.mxu0 0.0
    %2815 = vmatpush1.msra.mxu0 0.0
    %2816 = vmatprep.mubr.f32.mxu0 0.0
    %2817 = vmatmul.mubr.f32.gmra.mrb[0].mxu0 %v2747
    %v2818 = vpop.f32.mrb[0].mxu0
    %v2819 = vadd.f32 0.0, %v2818
    %v2820 = vpop.f32.mrb[0].mxu0
    %v2821 = vadd.f32 0.0, %v2820
    %2822 = vmatprep.mubr.f32.mxu0 0.0
    %2823 = vmatmul.mubr.f32.gmra.mrb[0].mxu0 %v2750
    %v2824 = vpop.f32.mrb[0].mxu0
    %v2825 = vadd.f32 0.0, %v2824
    %v2826 = vpop.f32.mrb[0].mxu0
    %v2827 = vadd.f32 0.0, %v2826
    %2828 = vdwg.mxu0
    %2829 = vmatprep.subr.mxu0 %v2314
    %2830 = vmatpush1.msra.mxu0 %v2313
    %2831 = vmatprep.subr.mxu0 %v2318
    %2832 = vmatpush1.msra.mxu0 %v2317
    %2833 = vmatprep.subr.mxu0 0.0
    %2834 = vmatpush1.msra.mxu0 0.0
    %2835 = vmatprep.subr.mxu0 0.0
    %2836 = vmatpush1.msra.mxu0 0.0
    %2837 = vmatprep.subr.mxu0 0.0
    %2838 = vmatpush1.msra.mxu0 0.0
    %2839 = vmatprep.subr.mxu0 0.0
    %2840 = vmatpush1.msra.mxu0 0.0
    %2841 = vmatprep.subr.mxu0 0.0
    %2842 = vmatpush1.msra.mxu0 0.0
    %2843 = vmatprep.subr.mxu0 0.0
    %2844 = vmatpush1.msra.mxu0 0.0
    %2845 = vmatprep.subr.mxu0 0.0
    %2846 = vmatpush1.msra.mxu0 0.0
    %2847 = vmatprep.subr.mxu0 0.0
    %2848 = vmatpush1.msra.mxu0 0.0
    %2849 = vmatprep.subr.mxu0 0.0
    %2850 = vmatpush1.msra.mxu0 0.0
    %2851 = vmatprep.subr.mxu0 0.0
    %2852 = vmatpush1.msra.mxu0 0.0
    %2853 = vmatprep.subr.mxu0 0.0
    %2854 = vmatpush1.msra.mxu0 0.0
    %2855 = vmatprep.subr.mxu0 0.0
    %2856 = vmatpush1.msra.mxu0 0.0
    %2857 = vmatprep.subr.mxu0 0.0
    %2858 = vmatpush1.msra.mxu0 0.0
    %2859 = vmatprep.subr.mxu0 0.0
    %2860 = vmatpush1.msra.mxu0 0.0
    %2861 = vmatprep.subr.mxu0 0.0
    %2862 = vmatpush1.msra.mxu0 0.0
    %2863 = vmatprep.subr.mxu0 0.0
    %2864 = vmatpush1.msra.mxu0 0.0
    %2865 = vmatprep.subr.mxu0 0.0
    %2866 = vmatpush1.msra.mxu0 0.0
    %2867 = vmatprep.subr.mxu0 0.0
    %2868 = vmatpush1.msra.mxu0 0.0
    %2869 = vmatprep.subr.mxu0 0.0
    %2870 = vmatpush1.msra.mxu0 0.0
    %2871 = vmatprep.subr.mxu0 0.0
    %2872 = vmatpush1.msra.mxu0 0.0
    %2873 = vmatprep.subr.mxu0 0.0
    %2874 = vmatpush1.msra.mxu0 0.0
    %2875 = vmatprep.subr.mxu0 0.0
    %2876 = vmatpush1.msra.mxu0 0.0
    %2877 = vmatprep.subr.mxu0 0.0
    %2878 = vmatpush1.msra.mxu0 0.0
    %2879 = vmatprep.subr.mxu0 0.0
    %2880 = vmatpush1.msra.mxu0 0.0
    %2881 = vmatprep.subr.mxu0 0.0
    %2882 = vmatpush1.msra.mxu0 0.0
    %2883 = vmatprep.subr.mxu0 0.0
    %2884 = vmatpush1.msra.mxu0 0.0
    %2885 = vmatprep.subr.mxu0 0.0
    %2886 = vmatpush1.msra.mxu0 0.0
    %2887 = vmatprep.subr.mxu0 0.0
    %2888 = vmatpush1.msra.mxu0 0.0
    %2889 = vmatprep.subr.mxu0 0.0
    %2890 = vmatpush1.msra.mxu0 0.0
    %2891 = vmatprep.subr.mxu0 0.0
    %2892 = vmatpush1.msra.mxu0 0.0
    %2893 = vmatprep.mubr.f32.mxu0 0.0
    %2894 = vmatmul.mubr.f32.gmra.mrb[0].mxu0 %v2747
    %v2895 = vpop.f32.mrb[0].mxu0
    %v2896 = vadd.f32 0.0, %v2895
    %v2897 = vpop.f32.mrb[0].mxu0
    %v2898 = vadd.f32 0.0, %v2897
    %2899 = vmatprep.mubr.f32.mxu0 0.0
    %2900 = vmatmul.mubr.f32.gmra.mrb[0].mxu0 %v2750
    %v2901 = vpop.f32.mrb[0].mxu0
    %v2902 = vadd.f32 0.0, %v2901
    %v2903 = vpop.f32.mrb[0].mxu0
    %v2904 = vadd.f32 0.0, %v2903
    %2905 = vdwg.mxu0
    %v2906 = vmul.f32 %v2819, %v1988
    %v2907 = vmul.f32 %v2821, %v1990
    %v2908 = vmul.f32 %v2896, %v2065
    %v2909 = vmul.f32 %v2898, %v2067
    %v2910 = vmul.f32 %v2825, %v1994
    %v2911 = vmul.f32 %v2827, %v1996
    %v2912 = vmul.f32 %v2902, %v2071
    %v2913 = vmul.f32 %v2904, %v2073
    %v2914 = vadd.f32 %v2906, %v2907
    %v2915 = vadd.f32 %v2910, %v2911
    %v2916 = vadd.f32 %v2914, %v2908
    %v2917 = vadd.f32 %v2915, %v2912
    %v2918 = vadd.f32 %v2916, %v2909
    %v2919 = vadd.f32 %v2917, %v2913
    %2920 = vmatprep.subr.mxu0 0.0
    %2921 = vmatpush1.msra.mxu0 %v2493
    %2922 = vmatprep.subr.mxu0 0.0
    %2923 = vmatpush1.msra.mxu0 %v2494
    %2924 = vmatprep.subr.mxu0 0.0
    %2925 = vmatpush1.msra.mxu0 0.0
    %2926 = vmatprep.subr.mxu0 0.0
    %2927 = vmatpush1.msra.mxu0 0.0
    %2928 = vmatprep.subr.mxu0 0.0
    %2929 = vmatpush1.msra.mxu0 0.0
    %2930 = vmatprep.subr.mxu0 0.0
    %2931 = vmatpush1.msra.mxu0 0.0
    %2932 = vmatprep.subr.mxu0 0.0
    %2933 = vmatpush1.msra.mxu0 0.0
    %2934 = vmatprep.subr.mxu0 0.0
    %2935 = vmatpush1.msra.mxu0 0.0
    %2936 = vmatprep.subr.mxu0 0.0
    %2937 = vmatpush1.msra.mxu0 0.0
    %2938 = vmatprep.subr.mxu0 0.0
    %2939 = vmatpush1.msra.mxu0 0.0
    %2940 = vmatprep.subr.mxu0 0.0
    %2941 = vmatpush1.msra.mxu0 0.0
    %2942 = vmatprep.subr.mxu0 0.0
    %2943 = vmatpush1.msra.mxu0 0.0
    %2944 = vmatprep.subr.mxu0 0.0
    %2945 = vmatpush1.msra.mxu0 0.0
    %2946 = vmatprep.subr.mxu0 0.0
    %2947 = vmatpush1.msra.mxu0 0.0
    %2948 = vmatprep.subr.mxu0 0.0
    %2949 = vmatpush1.msra.mxu0 0.0
    %2950 = vmatprep.subr.mxu0 0.0
    %2951 = vmatpush1.msra.mxu0 0.0
    %2952 = vmatprep.subr.mxu0 0.0
    %2953 = vmatpush1.msra.mxu0 0.0
    %2954 = vmatprep.subr.mxu0 0.0
    %2955 = vmatpush1.msra.mxu0 0.0
    %2956 = vmatprep.subr.mxu0 0.0
    %2957 = vmatpush1.msra.mxu0 0.0
    %2958 = vmatprep.subr.mxu0 0.0
    %2959 = vmatpush1.msra.mxu0 0.0
    %2960 = vmatprep.subr.mxu0 0.0
    %2961 = vmatpush1.msra.mxu0 0.0
    %2962 = vmatprep.subr.mxu0 0.0
    %2963 = vmatpush1.msra.mxu0 0.0
    %2964 = vmatprep.subr.mxu0 0.0
    %2965 = vmatpush1.msra.mxu0 0.0
    %2966 = vmatprep.subr.mxu0 0.0
    %2967 = vmatpush1.msra.mxu0 0.0
    %2968 = vmatprep.subr.mxu0 0.0
    %2969 = vmatpush1.msra.mxu0 0.0
    %2970 = vmatprep.subr.mxu0 0.0
    %2971 = vmatpush1.msra.mxu0 0.0
    %2972 = vmatprep.subr.mxu0 0.0
    %2973 = vmatpush1.msra.mxu0 0.0
    %2974 = vmatprep.subr.mxu0 0.0
    %2975 = vmatpush1.msra.mxu0 0.0
    %2976 = vmatprep.subr.mxu0 0.0
    %2977 = vmatpush1.msra.mxu0 0.0
    %2978 = vmatprep.subr.mxu0 0.0
    %2979 = vmatpush1.msra.mxu0 0.0
    %2980 = vmatprep.subr.mxu0 0.0
    %2981 = vmatpush1.msra.mxu0 0.0
    %2982 = vmatprep.subr.mxu0 0.0
    %2983 = vmatpush1.msra.mxu0 0.0
    %2984 = vmatprep.mubr.f32.mxu0 0.0
    %2985 = vmatmul.mubr.f32.gmra.mrb[0].mxu0 %v2747
    %v2986 = vpop.f32.mrb[0].mxu0
    %v2987 = vadd.f32 0.0, %v2986
    %v2988 = vpop.f32.mrb[0].mxu0
    %2989 = vmatprep.mubr.f32.mxu0 0.0
    %2990 = vmatmul.mubr.f32.gmra.mrb[0].mxu0 %v2750
    %v2991 = vpop.f32.mrb[0].mxu0
    %v2992 = vadd.f32 0.0, %v2991
    %v2993 = vpop.f32.mrb[0].mxu0
    %2994 = vdwg.mxu0
    %v2995 = vrcp.pop %v2987
    %v2996 = vmul.f32 %v2918, %v2995
    %v2997 = vrcp.pop %v2992
    %v2998 = vmul.f32 %v2919, %v2997
    %v2999 = vmul.f32 %v1757, %v1834
    %v3000 = vmul.f32 %v1757, %v1836
    %v3001 = vmul.f32 %v1757, %v1911
    %v3002 = vmul.f32 %v1757, %v1913
    %v3003 = vmul.f32 %v1763, %v1840
    %v3004 = vmul.f32 %v1763, %v1842
    %v3005 = vmul.f32 %v1763, %v1917
    %v3006 = vmul.f32 %v1763, %v1919
    %3007 = vmatprep.subr.mxu0 0.0
    %3008 = vmatpush1.msra.mxu0 %v2083
    %3009 = vmatprep.subr.mxu0 0.0
    %3010 = vmatpush1.msra.mxu0 %v2084
    %3011 = vmatprep.subr.mxu0 0.0
    %3012 = vmatpush1.msra.mxu0 %v2085
    %3013 = vmatprep.subr.mxu0 0.0
    %3014 = vmatpush1.msra.mxu0 %v2086
    %3015 = vmatprep.subr.mxu0 0.0
    %3016 = vmatpush1.msra.mxu0 %v2087
    %3017 = vmatprep.subr.mxu0 0.0
    %3018 = vmatpush1.msra.mxu0 %v2088
    %3019 = vmatprep.subr.mxu0 0.0
    %3020 = vmatpush1.msra.mxu0 %v2089
    %3021 = vmatprep.subr.mxu0 0.0
    %3022 = vmatpush1.msra.mxu0 %v2090
    %3023 = vmatprep.subr.mxu0 0.0
    %3024 = vmatpush1.msra.mxu0 %v2091
    %3025 = vmatprep.subr.mxu0 0.0
    %3026 = vmatpush1.msra.mxu0 %v2092
    %3027 = vmatprep.subr.mxu0 0.0
    %3028 = vmatpush1.msra.mxu0 %v2093
    %3029 = vmatprep.subr.mxu0 0.0
    %3030 = vmatpush1.msra.mxu0 %v2094
    %3031 = vmatprep.subr.mxu0 0.0
    %3032 = vmatpush1.msra.mxu0 %v2095
    %3033 = vmatprep.subr.mxu0 0.0
    %3034 = vmatpush1.msra.mxu0 %v2096
    %3035 = vmatprep.subr.mxu0 0.0
    %3036 = vmatpush1.msra.mxu0 %v2097
    %3037 = vmatprep.subr.mxu0 0.0
    %3038 = vmatpush1.msra.mxu0 %v2098
    %3039 = vmatprep.subr.mxu0 0.0
    %3040 = vmatpush1.msra.mxu0 %v2099
    %3041 = vmatprep.subr.mxu0 0.0
    %3042 = vmatpush1.msra.mxu0 %v2100
    %3043 = vmatprep.subr.mxu0 0.0
    %3044 = vmatpush1.msra.mxu0 %v2101
    %3045 = vmatprep.subr.mxu0 0.0
    %3046 = vmatpush1.msra.mxu0 %v2102
    %3047 = vmatprep.subr.mxu0 0.0
    %3048 = vmatpush1.msra.mxu0 %v2103
    %3049 = vmatprep.subr.mxu0 0.0
    %3050 = vmatpush1.msra.mxu0 %v2104
    %3051 = vmatprep.subr.mxu0 0.0
    %3052 = vmatpush1.msra.mxu0 %v2105
    %3053 = vmatprep.subr.mxu0 0.0
    %3054 = vmatpush1.msra.mxu0 %v2106
    %3055 = vmatprep.subr.mxu0 0.0
    %3056 = vmatpush1.msra.mxu0 %v2107
    %3057 = vmatprep.subr.mxu0 0.0
    %3058 = vmatpush1.msra.mxu0 %v2108
    %3059 = vmatprep.subr.mxu0 0.0
    %3060 = vmatpush1.msra.mxu0 %v2109
    %3061 = vmatprep.subr.mxu0 0.0
    %3062 = vmatpush1.msra.mxu0 %v2110
    %3063 = vmatprep.subr.mxu0 0.0
    %3064 = vmatpush1.msra.mxu0 %v2111
    %3065 = vmatprep.subr.mxu0 0.0
    %3066 = vmatpush1.msra.mxu0 %v2112
    %3067 = vmatprep.subr.mxu0 0.0
    %3068 = vmatpush1.msra.mxu0 %v2113
    %3069 = vmatprep.subr.mxu0 0.0
    %3070 = vmatpush1.msra.mxu0 %v2114
    %3071 = vmatprep.mubr.f32.mxu0 %v3000
    %3072 = vmatmul.mubr.f32.gmra.mrb[0].mxu0 %v2999
    %v3073 = vpop.f32.mrb[0].mxu0
    %v3074 = vadd.f32 0.0, %v3073
    %v3075 = vpop.f32.mrb[0].mxu0
    %3076 = vmatprep.mubr.f32.mxu0 %v3004
    %3077 = vmatmul.mubr.f32.gmra.mrb[0].mxu0 %v3003
    %v3078 = vpop.f32.mrb[0].mxu0
    %v3079 = vadd.f32 0.0, %v3078
    %v3080 = vpop.f32.mrb[0].mxu0
    %3081 = vdwg.mxu0
    %3082 = vmatprep.subr.mxu0 0.0
    %3083 = vmatpush1.msra.mxu0 %v2115
    %3084 = vmatprep.subr.mxu0 0.0
    %3085 = vmatpush1.msra.mxu0 %v2116
    %3086 = vmatprep.subr.mxu0 0.0
    %3087 = vmatpush1.msra.mxu0 %v2117
    %3088 = vmatprep.subr.mxu0 0.0
    %3089 = vmatpush1.msra.mxu0 %v2118
    %3090 = vmatprep.subr.mxu0 0.0
    %3091 = vmatpush1.msra.mxu0 %v2119
    %3092 = vmatprep.subr.mxu0 0.0
    %3093 = vmatpush1.msra.mxu0 %v2120
    %3094 = vmatprep.subr.mxu0 0.0
    %3095 = vmatpush1.msra.mxu0 %v2121
    %3096 = vmatprep.subr.mxu0 0.0
    %3097 = vmatpush1.msra.mxu0 %v2122
    %3098 = vmatprep.subr.mxu0 0.0
    %3099 = vmatpush1.msra.mxu0 %v2123
    %3100 = vmatprep.subr.mxu0 0.0
    %3101 = vmatpush1.msra.mxu0 %v2124
    %3102 = vmatprep.subr.mxu0 0.0
    %3103 = vmatpush1.msra.mxu0 %v2125
    %3104 = vmatprep.subr.mxu0 0.0
    %3105 = vmatpush1.msra.mxu0 %v2126
    %3106 = vmatprep.subr.mxu0 0.0
    %3107 = vmatpush1.msra.mxu0 %v2127
    %3108 = vmatprep.subr.mxu0 0.0
    %3109 = vmatpush1.msra.mxu0 %v2128
    %3110 = vmatprep.subr.mxu0 0.0
    %3111 = vmatpush1.msra.mxu0 %v2129
    %3112 = vmatprep.subr.mxu0 0.0
    %3113 = vmatpush1.msra.mxu0 %v2130
    %3114 = vmatprep.subr.mxu0 0.0
    %3115 = vmatpush1.msra.mxu0 %v2131
    %3116 = vmatprep.subr.mxu0 0.0
    %3117 = vmatpush1.msra.mxu0 %v2132
    %3118 = vmatprep.subr.mxu0 0.0
    %3119 = vmatpush1.msra.mxu0 %v2133
    %3120 = vmatprep.subr.mxu0 0.0
    %3121 = vmatpush1.msra.mxu0 %v2134
    %3122 = vmatprep.subr.mxu0 0.0
    %3123 = vmatpush1.msra.mxu0 %v2135
    %3124 = vmatprep.subr.mxu0 0.0
    %3125 = vmatpush1.msra.mxu0 %v2136
    %3126 = vmatprep.subr.mxu0 0.0
    %3127 = vmatpush1.msra.mxu0 %v2137
    %3128 = vmatprep.subr.mxu0 0.0
    %3129 = vmatpush1.msra.mxu0 %v2138
    %3130 = vmatprep.subr.mxu0 0.0
    %3131 = vmatpush1.msra.mxu0 %v2139
    %3132 = vmatprep.subr.mxu0 0.0
    %3133 = vmatpush1.msra.mxu0 %v2140
    %3134 = vmatprep.subr.mxu0 0.0
    %3135 = vmatpush1.msra.mxu0 %v2141
    %3136 = vmatprep.subr.mxu0 0.0
    %3137 = vmatpush1.msra.mxu0 %v2142
    %3138 = vmatprep.subr.mxu0 0.0
    %3139 = vmatpush1.msra.mxu0 %v2143
    %3140 = vmatprep.subr.mxu0 0.0
    %3141 = vmatpush1.msra.mxu0 %v2144
    %3142 = vmatprep.subr.mxu0 0.0
    %3143 = vmatpush1.msra.mxu0 %v2145
    %3144 = vmatprep.subr.mxu0 0.0
    %3145 = vmatpush1.msra.mxu0 %v2146
    %3146 = vmatprep.mubr.f32.mxu0 %v3002
    %3147 = vmatmul.mubr.f32.gmra.mrb[0].mxu0 %v3001
    %v3148 = vpop.f32.mrb[0].mxu0
    %v3149 = vadd.f32 %v3074, %v3148
    %v3150 = vpop.f32.mrb[0].mxu0
    %3151 = vmatprep.mubr.f32.mxu0 %v3006
    %3152 = vmatmul.mubr.f32.gmra.mrb[0].mxu0 %v3005
    %v3153 = vpop.f32.mrb[0].mxu0
    %v3154 = vadd.f32 %v3079, %v3153
    %v3155 = vpop.f32.mrb[0].mxu0
    %3156 = vdwg.mxu0
    %v3157 = vmul.f32 %v3149, 0.17677669
    %v3158 = vmul.f32 %v3154, 0.17677669
    %v3159 = vsel %vm991, %v3157, -inf
    %3160 = vmax.xlane.f32.xlu0 %v3159
    %v3161 = vpop.xlane.xlu0 %3160
    %v3162 = vsel %vm991, %v3158, -inf
    %3163 = vmax.xlane.f32.xlu0 %v3162
    %v3164 = vpop.xlane.xlu0 %3163
    %v3165 = vsub.f32 %v3157, %v3161
    %v3166 = vsub.f32 %v3158, %v3164
    %v3167 = vmul.f32 %v3165, 1.442695
    %v3168 = vpow.pop %v3167
    %v3169 = vmul.f32 %v3166, 1.442695
    %v3170 = vpow.pop %v3169
    %v3172 = vsel %vm991, %v3168, 0
    %v3175 = vsel %vm991, %v3170, 0
    %3177 = vmatprep.subr.mxu0 %v2312
    %3178 = vmatpush1.msra.mxu0 %v2311
    %3179 = vmatprep.subr.mxu0 %v2316
    %3180 = vmatpush1.msra.mxu0 %v2315
    %3181 = vmatprep.subr.mxu0 0.0
    %3182 = vmatpush1.msra.mxu0 0.0
    %3183 = vmatprep.subr.mxu0 0.0
    %3184 = vmatpush1.msra.mxu0 0.0
    %3185 = vmatprep.subr.mxu0 0.0
    %3186 = vmatpush1.msra.mxu0 0.0
    %3187 = vmatprep.subr.mxu0 0.0
    %3188 = vmatpush1.msra.mxu0 0.0
    %3189 = vmatprep.subr.mxu0 0.0
    %3190 = vmatpush1.msra.mxu0 0.0
    %3191 = vmatprep.subr.mxu0 0.0
    %3192 = vmatpush1.msra.mxu0 0.0
    %3193 = vmatprep.subr.mxu0 0.0
    %3194 = vmatpush1.msra.mxu0 0.0
    %3195 = vmatprep.subr.mxu0 0.0
    %3196 = vmatpush1.msra.mxu0 0.0
    %3197 = vmatprep.subr.mxu0 0.0
    %3198 = vmatpush1.msra.mxu0 0.0
    %3199 = vmatprep.subr.mxu0 0.0
    %3200 = vmatpush1.msra.mxu0 0.0
    %3201 = vmatprep.subr.mxu0 0.0
    %3202 = vmatpush1.msra.mxu0 0.0
    %3203 = vmatprep.subr.mxu0 0.0
    %3204 = vmatpush1.msra.mxu0 0.0
    %3205 = vmatprep.subr.mxu0 0.0
    %3206 = vmatpush1.msra.mxu0 0.0
    %3207 = vmatprep.subr.mxu0 0.0
    %3208 = vmatpush1.msra.mxu0 0.0
    %3209 = vmatprep.subr.mxu0 0.0
    %3210 = vmatpush1.msra.mxu0 0.0
    %3211 = vmatprep.subr.mxu0 0.0
    %3212 = vmatpush1.msra.mxu0 0.0
    %3213 = vmatprep.subr.mxu0 0.0
    %3214 = vmatpush1.msra.mxu0 0.0
    %3215 = vmatprep.subr.mxu0 0.0
    %3216 = vmatpush1.msra.mxu0 0.0
    %3217 = vmatprep.subr.mxu0 0.0
    %3218 = vmatpush1.msra.mxu0 0.0
    %3219 = vmatprep.subr.mxu0 0.0
    %3220 = vmatpush1.msra.mxu0 0.0
    %3221 = vmatprep.subr.mxu0 0.0
    %3222 = vmatpush1.msra.mxu0 0.0
    %3223 = vmatprep.subr.mxu0 0.0
    %3224 = vmatpush1.msra.mxu0 0.0
    %3225 = vmatprep.subr.mxu0 0.0
    %3226 = vmatpush1.msra.mxu0 0.0
    %3227 = vmatprep.subr.mxu0 0.0
    %3228 = vmatpush1.msra.mxu0 0.0
    %3229 = vmatprep.subr.mxu0 0.0
    %3230 = vmatpush1.msra.mxu0 0.0
    %3231 = vmatprep.subr.mxu0 0.0
    %3232 = vmatpush1.msra.mxu0 0.0
    %3233 = vmatprep.subr.mxu0 0.0
    %3234 = vmatpush1.msra.mxu0 0.0
    %3235 = vmatprep.subr.mxu0 0.0
    %3236 = vmatpush1.msra.mxu0 0.0
    %3237 = vmatprep.subr.mxu0 0.0
    %3238 = vmatpush1.msra.mxu0 0.0
    %3239 = vmatprep.subr.mxu0 0.0
    %3240 = vmatpush1.msra.mxu0 0.0
    %3241 = vmatprep.mubr.f32.mxu0 0.0
    %3242 = vmatmul.mubr.f32.gmra.mrb[0].mxu0 %v3172
    %v3243 = vpop.f32.mrb[0].mxu0
    %v3244 = vadd.f32 0.0, %v3243
    %v3245 = vpop.f32.mrb[0].mxu0
    %v3246 = vadd.f32 0.0, %v3245
    %3247 = vmatprep.mubr.f32.mxu0 0.0
    %3248 = vmatmul.mubr.f32.gmra.mrb[0].mxu0 %v3175
    %v3249 = vpop.f32.mrb[0].mxu0
    %v3250 = vadd.f32 0.0, %v3249
    %v3251 = vpop.f32.mrb[0].mxu0
    %v3252 = vadd.f32 0.0, %v3251
    %3253 = vdwg.mxu0
    %3254 = vmatprep.subr.mxu0 %v2314
    %3255 = vmatpush1.msra.mxu0 %v2313
    %3256 = vmatprep.subr.mxu0 %v2318
    %3257 = vmatpush1.msra.mxu0 %v2317
    %3258 = vmatprep.subr.mxu0 0.0
    %3259 = vmatpush1.msra.mxu0 0.0
    %3260 = vmatprep.subr.mxu0 0.0
    %3261 = vmatpush1.msra.mxu0 0.0
    %3262 = vmatprep.subr.mxu0 0.0
    %3263 = vmatpush1.msra.mxu0 0.0
    %3264 = vmatprep.subr.mxu0 0.0
    %3265 = vmatpush1.msra.mxu0 0.0
    %3266 = vmatprep.subr.mxu0 0.0
    %3267 = vmatpush1.msra.mxu0 0.0
    %3268 = vmatprep.subr.mxu0 0.0
    %3269 = vmatpush1.msra.mxu0 0.0
    %3270 = vmatprep.subr.mxu0 0.0
    %3271 = vmatpush1.msra.mxu0 0.0
    %3272 = vmatprep.subr.mxu0 0.0
    %3273 = vmatpush1.msra.mxu0 0.0
    %3274 = vmatprep.subr.mxu0 0.0
    %3275 = vmatpush1.msra.mxu0 0.0
    %3276 = vmatprep.subr.mxu0 0.0
    %3277 = vmatpush1.msra.mxu0 0.0
    %3278 = vmatprep.subr.mxu0 0.0
    %3279 = vmatpush1.msra.mxu0 0.0
    %3280 = vmatprep.subr.mxu0 0.0
    %3281 = vmatpush1.msra.mxu0 0.0
    %3282 = vmatprep.subr.mxu0 0.0
    %3283 = vmatpush1.msra.mxu0 0.0
    %3284 = vmatprep.subr.mxu0 0.0
    %3285 = vmatpush1.msra.mxu0 0.0
    %3286 = vmatprep.subr.mxu0 0.0
    %3287 = vmatpush1.msra.mxu0 0.0
    %3288 = vmatprep.subr.mxu0 0.0
    %3289 = vmatpush1.msra.mxu0 0.0
    %3290 = vmatprep.subr.mxu0 0.0
    %3291 = vmatpush1.msra.mxu0 0.0
    %3292 = vmatprep.subr.mxu0 0.0
    %3293 = vmatpush1.msra.mxu0 0.0
    %3294 = vmatprep.subr.mxu0 0.0
    %3295 = vmatpush1.msra.mxu0 0.0
    %3296 = vmatprep.subr.mxu0 0.0
    %3297 = vmatpush1.msra.mxu0 0.0
    %3298 = vmatprep.subr.mxu0 0.0
    %3299 = vmatpush1.msra.mxu0 0.0
    %3300 = vmatprep.subr.mxu0 0.0
    %3301 = vmatpush1.msra.mxu0 0.0
    %3302 = vmatprep.subr.mxu0 0.0
    %3303 = vmatpush1.msra.mxu0 0.0
    %3304 = vmatprep.subr.mxu0 0.0
    %3305 = vmatpush1.msra.mxu0 0.0
    %3306 = vmatprep.subr.mxu0 0.0
    %3307 = vmatpush1.msra.mxu0 0.0
    %3308 = vmatprep.subr.mxu0 0.0
    %3309 = vmatpush1.msra.mxu0 0.0
    %3310 = vmatprep.subr.mxu0 0.0
    %3311 = vmatpush1.msra.mxu0 0.0
    %3312 = vmatprep.subr.mxu0 0.0
    %3313 = vmatpush1.msra.mxu0 0.0
    %3314 = vmatprep.subr.mxu0 0.0
    %3315 = vmatpush1.msra.mxu0 0.0
    %3316 = vmatprep.subr.mxu0 0.0
    %3317 = vmatpush1.msra.mxu0 0.0
    %3318 = vmatprep.mubr.f32.mxu0 0.0
    %3319 = vmatmul.mubr.f32.gmra.mrb[0].mxu0 %v3172
    %v3320 = vpop.f32.mrb[0].mxu0
    %v3321 = vadd.f32 0.0, %v3320
    %v3322 = vpop.f32.mrb[0].mxu0
    %v3323 = vadd.f32 0.0, %v3322
    %3324 = vmatprep.mubr.f32.mxu0 0.0
    %3325 = vmatmul.mubr.f32.gmra.mrb[0].mxu0 %v3175
    %v3326 = vpop.f32.mrb[0].mxu0
    %v3327 = vadd.f32 0.0, %v3326
    %v3328 = vpop.f32.mrb[0].mxu0
    %v3329 = vadd.f32 0.0, %v3328
    %3330 = vdwg.mxu0
    %v3331 = vmul.f32 %v3244, %v1988
    %v3332 = vmul.f32 %v3246, %v1990
    %v3333 = vmul.f32 %v3321, %v2065
    %v3334 = vmul.f32 %v3323, %v2067
    %v3335 = vmul.f32 %v3250, %v1994
    %v3336 = vmul.f32 %v3252, %v1996
    %v3337 = vmul.f32 %v3327, %v2071
    %v3338 = vmul.f32 %v3329, %v2073
    %v3339 = vadd.f32 %v3331, %v3332
    %v3340 = vadd.f32 %v3335, %v3336
    %v3341 = vadd.f32 %v3339, %v3333
    %v3342 = vadd.f32 %v3340, %v3337
    %v3343 = vadd.f32 %v3341, %v3334
    %v3344 = vadd.f32 %v3342, %v3338
    %3345 = vmatprep.subr.mxu0 0.0
    %3346 = vmatpush1.msra.mxu0 %v2493
    %3347 = vmatprep.subr.mxu0 0.0
    %3348 = vmatpush1.msra.mxu0 %v2494
    %3349 = vmatprep.subr.mxu0 0.0
    %3350 = vmatpush1.msra.mxu0 0.0
    %3351 = vmatprep.subr.mxu0 0.0
    %3352 = vmatpush1.msra.mxu0 0.0
    %3353 = vmatprep.subr.mxu0 0.0
    %3354 = vmatpush1.msra.mxu0 0.0
    %3355 = vmatprep.subr.mxu0 0.0
    %3356 = vmatpush1.msra.mxu0 0.0
    %3357 = vmatprep.subr.mxu0 0.0
    %3358 = vmatpush1.msra.mxu0 0.0
    %3359 = vmatprep.subr.mxu0 0.0
    %3360 = vmatpush1.msra.mxu0 0.0
    %3361 = vmatprep.subr.mxu0 0.0
    %3362 = vmatpush1.msra.mxu0 0.0
    %3363 = vmatprep.subr.mxu0 0.0
    %3364 = vmatpush1.msra.mxu0 0.0
    %3365 = vmatprep.subr.mxu0 0.0
    %3366 = vmatpush1.msra.mxu0 0.0
    %3367 = vmatprep.subr.mxu0 0.0
    %3368 = vmatpush1.msra.mxu0 0.0
    %3369 = vmatprep.subr.mxu0 0.0
    %3370 = vmatpush1.msra.mxu0 0.0
    %3371 = vmatprep.subr.mxu0 0.0
    %3372 = vmatpush1.msra.mxu0 0.0
    %3373 = vmatprep.subr.mxu0 0.0
    %3374 = vmatpush1.msra.mxu0 0.0
    %3375 = vmatprep.subr.mxu0 0.0
    %3376 = vmatpush1.msra.mxu0 0.0
    %3377 = vmatprep.subr.mxu0 0.0
    %3378 = vmatpush1.msra.mxu0 0.0
    %3379 = vmatprep.subr.mxu0 0.0
    %3380 = vmatpush1.msra.mxu0 0.0
    %3381 = vmatprep.subr.mxu0 0.0
    %3382 = vmatpush1.msra.mxu0 0.0
    %3383 = vmatprep.subr.mxu0 0.0
    %3384 = vmatpush1.msra.mxu0 0.0
    %3385 = vmatprep.subr.mxu0 0.0
    %3386 = vmatpush1.msra.mxu0 0.0
    %3387 = vmatprep.subr.mxu0 0.0
    %3388 = vmatpush1.msra.mxu0 0.0
    %3389 = vmatprep.subr.mxu0 0.0
    %3390 = vmatpush1.msra.mxu0 0.0
    %3391 = vmatprep.subr.mxu0 0.0
    %3392 = vmatpush1.msra.mxu0 0.0
    %3393 = vmatprep.subr.mxu0 0.0
    %3394 = vmatpush1.msra.mxu0 0.0
    %3395 = vmatprep.subr.mxu0 0.0
    %3396 = vmatpush1.msra.mxu0 0.0
    %3397 = vmatprep.subr.mxu0 0.0
    %3398 = vmatpush1.msra.mxu0 0.0
    %3399 = vmatprep.subr.mxu0 0.0
    %3400 = vmatpush1.msra.mxu0 0.0
    %3401 = vmatprep.subr.mxu0 0.0
    %3402 = vmatpush1.msra.mxu0 0.0
    %3403 = vmatprep.subr.mxu0 0.0
    %3404 = vmatpush1.msra.mxu0 0.0
    %3405 = vmatprep.subr.mxu0 0.0
    %3406 = vmatpush1.msra.mxu0 0.0
    %3407 = vmatprep.subr.mxu0 0.0
    %3408 = vmatpush1.msra.mxu0 0.0
    %3409 = vmatprep.mubr.f32.mxu0 0.0
    %3410 = vmatmul.mubr.f32.gmra.mrb[0].mxu0 %v3172
    %v3411 = vpop.f32.mrb[0].mxu0
    %v3412 = vadd.f32 0.0, %v3411
    %v3413 = vpop.f32.mrb[0].mxu0
    %3414 = vmatprep.mubr.f32.mxu0 0.0
    %3415 = vmatmul.mubr.f32.gmra.mrb[0].mxu0 %v3175
    %v3416 = vpop.f32.mrb[0].mxu0
    %v3417 = vadd.f32 0.0, %v3416
    %v3418 = vpop.f32.mrb[0].mxu0
    %3419 = vdwg.mxu0
    %v3420 = vrcp.pop %v3412
    %v3421 = vmul.f32 %v3343, %v3420
    %v3422 = vrcp.pop %v3417
    %v3423 = vmul.f32 %v3344, %v3422
    %v3424 = vmul.f32 %v1759, %v1834
    %v3425 = vmul.f32 %v1759, %v1836
    %v3426 = vmul.f32 %v1759, %v1911
    %v3427 = vmul.f32 %v1759, %v1913
    %v3428 = vmul.f32 %v1765, %v1840
    %v3429 = vmul.f32 %v1765, %v1842
    %v3430 = vmul.f32 %v1765, %v1917
    %v3431 = vmul.f32 %v1765, %v1919
    %3432 = vmatprep.subr.mxu0 0.0
    %3433 = vmatpush1.msra.mxu0 %v2083
    %3434 = vmatprep.subr.mxu0 0.0
    %3435 = vmatpush1.msra.mxu0 %v2084
    %3436 = vmatprep.subr.mxu0 0.0
    %3437 = vmatpush1.msra.mxu0 %v2085
    %3438 = vmatprep.subr.mxu0 0.0
    %3439 = vmatpush1.msra.mxu0 %v2086
    %3440 = vmatprep.subr.mxu0 0.0
    %3441 = vmatpush1.msra.mxu0 %v2087
    %3442 = vmatprep.subr.mxu0 0.0
    %3443 = vmatpush1.msra.mxu0 %v2088
    %3444 = vmatprep.subr.mxu0 0.0
    %3445 = vmatpush1.msra.mxu0 %v2089
    %3446 = vmatprep.subr.mxu0 0.0
    %3447 = vmatpush1.msra.mxu0 %v2090
    %3448 = vmatprep.subr.mxu0 0.0
    %3449 = vmatpush1.msra.mxu0 %v2091
    %3450 = vmatprep.subr.mxu0 0.0
    %3451 = vmatpush1.msra.mxu0 %v2092
    %3452 = vmatprep.subr.mxu0 0.0
    %3453 = vmatpush1.msra.mxu0 %v2093
    %3454 = vmatprep.subr.mxu0 0.0
    %3455 = vmatpush1.msra.mxu0 %v2094
    %3456 = vmatprep.subr.mxu0 0.0
    %3457 = vmatpush1.msra.mxu0 %v2095
    %3458 = vmatprep.subr.mxu0 0.0
    %3459 = vmatpush1.msra.mxu0 %v2096
    %3460 = vmatprep.subr.mxu0 0.0
    %3461 = vmatpush1.msra.mxu0 %v2097
    %3462 = vmatprep.subr.mxu0 0.0
    %3463 = vmatpush1.msra.mxu0 %v2098
    %3464 = vmatprep.subr.mxu0 0.0
    %3465 = vmatpush1.msra.mxu0 %v2099
    %3466 = vmatprep.subr.mxu0 0.0
    %3467 = vmatpush1.msra.mxu0 %v2100
    %3468 = vmatprep.subr.mxu0 0.0
    %3469 = vmatpush1.msra.mxu0 %v2101
    %3470 = vmatprep.subr.mxu0 0.0
    %3471 = vmatpush1.msra.mxu0 %v2102
    %3472 = vmatprep.subr.mxu0 0.0
    %3473 = vmatpush1.msra.mxu0 %v2103
    %3474 = vmatprep.subr.mxu0 0.0
    %3475 = vmatpush1.msra.mxu0 %v2104
    %3476 = vmatprep.subr.mxu0 0.0
    %3477 = vmatpush1.msra.mxu0 %v2105
    %3478 = vmatprep.subr.mxu0 0.0
    %3479 = vmatpush1.msra.mxu0 %v2106
    %3480 = vmatprep.subr.mxu0 0.0
    %3481 = vmatpush1.msra.mxu0 %v2107
    %3482 = vmatprep.subr.mxu0 0.0
    %3483 = vmatpush1.msra.mxu0 %v2108
    %3484 = vmatprep.subr.mxu0 0.0
    %3485 = vmatpush1.msra.mxu0 %v2109
    %3486 = vmatprep.subr.mxu0 0.0
    %3487 = vmatpush1.msra.mxu0 %v2110
    %3488 = vmatprep.subr.mxu0 0.0
    %3489 = vmatpush1.msra.mxu0 %v2111
    %3490 = vmatprep.subr.mxu0 0.0
    %3491 = vmatpush1.msra.mxu0 %v2112
    %3492 = vmatprep.subr.mxu0 0.0
    %3493 = vmatpush1.msra.mxu0 %v2113
    %3494 = vmatprep.subr.mxu0 0.0
    %3495 = vmatpush1.msra.mxu0 %v2114
    %3496 = vmatprep.mubr.f32.mxu0 %v3425
    %3497 = vmatmul.mubr.f32.gmra.mrb[0].mxu0 %v3424
    %v3498 = vpop.f32.mrb[0].mxu0
    %v3499 = vadd.f32 0.0, %v3498
    %v3500 = vpop.f32.mrb[0].mxu0
    %3501 = vmatprep.mubr.f32.mxu0 %v3429
    %3502 = vmatmul.mubr.f32.gmra.mrb[0].mxu0 %v3428
    %v3503 = vpop.f32.mrb[0].mxu0
    %v3504 = vadd.f32 0.0, %v3503
    %v3505 = vpop.f32.mrb[0].mxu0
    %3506 = vdwg.mxu0
    %3507 = vmatprep.subr.mxu0 0.0
    %3508 = vmatpush1.msra.mxu0 %v2115
    %3509 = vmatprep.subr.mxu0 0.0
    %3510 = vmatpush1.msra.mxu0 %v2116
    %3511 = vmatprep.subr.mxu0 0.0
    %3512 = vmatpush1.msra.mxu0 %v2117
    %3513 = vmatprep.subr.mxu0 0.0
    %3514 = vmatpush1.msra.mxu0 %v2118
    %3515 = vmatprep.subr.mxu0 0.0
    %3516 = vmatpush1.msra.mxu0 %v2119
    %3517 = vmatprep.subr.mxu0 0.0
    %3518 = vmatpush1.msra.mxu0 %v2120
    %3519 = vmatprep.subr.mxu0 0.0
    %3520 = vmatpush1.msra.mxu0 %v2121
    %3521 = vmatprep.subr.mxu0 0.0
    %3522 = vmatpush1.msra.mxu0 %v2122
    %3523 = vmatprep.subr.mxu0 0.0
    %3524 = vmatpush1.msra.mxu0 %v2123
    %3525 = vmatprep.subr.mxu0 0.0
    %3526 = vmatpush1.msra.mxu0 %v2124
    %3527 = vmatprep.subr.mxu0 0.0
    %3528 = vmatpush1.msra.mxu0 %v2125
    %3529 = vmatprep.subr.mxu0 0.0
    %3530 = vmatpush1.msra.mxu0 %v2126
    %3531 = vmatprep.subr.mxu0 0.0
    %3532 = vmatpush1.msra.mxu0 %v2127
    %3533 = vmatprep.subr.mxu0 0.0
    %3534 = vmatpush1.msra.mxu0 %v2128
    %3535 = vmatprep.subr.mxu0 0.0
    %3536 = vmatpush1.msra.mxu0 %v2129
    %3537 = vmatprep.subr.mxu0 0.0
    %3538 = vmatpush1.msra.mxu0 %v2130
    %3539 = vmatprep.subr.mxu0 0.0
    %3540 = vmatpush1.msra.mxu0 %v2131
    %3541 = vmatprep.subr.mxu0 0.0
    %3542 = vmatpush1.msra.mxu0 %v2132
    %3543 = vmatprep.subr.mxu0 0.0
    %3544 = vmatpush1.msra.mxu0 %v2133
    %3545 = vmatprep.subr.mxu0 0.0
    %3546 = vmatpush1.msra.mxu0 %v2134
    %3547 = vmatprep.subr.mxu0 0.0
    %3548 = vmatpush1.msra.mxu0 %v2135
    %3549 = vmatprep.subr.mxu0 0.0
    %3550 = vmatpush1.msra.mxu0 %v2136
    %3551 = vmatprep.subr.mxu0 0.0
    %3552 = vmatpush1.msra.mxu0 %v2137
    %3553 = vmatprep.subr.mxu0 0.0
    %3554 = vmatpush1.msra.mxu0 %v2138
    %3555 = vmatprep.subr.mxu0 0.0
    %3556 = vmatpush1.msra.mxu0 %v2139
    %3557 = vmatprep.subr.mxu0 0.0
    %3558 = vmatpush1.msra.mxu0 %v2140
    %3559 = vmatprep.subr.mxu0 0.0
    %3560 = vmatpush1.msra.mxu0 %v2141
    %3561 = vmatprep.subr.mxu0 0.0
    %3562 = vmatpush1.msra.mxu0 %v2142
    %3563 = vmatprep.subr.mxu0 0.0
    %3564 = vmatpush1.msra.mxu0 %v2143
    %3565 = vmatprep.subr.mxu0 0.0
    %3566 = vmatpush1.msra.mxu0 %v2144
    %3567 = vmatprep.subr.mxu0 0.0
    %3568 = vmatpush1.msra.mxu0 %v2145
    %3569 = vmatprep.subr.mxu0 0.0
    %3570 = vmatpush1.msra.mxu0 %v2146
    %3571 = vmatprep.mubr.f32.mxu0 %v3427
    %3572 = vmatmul.mubr.f32.gmra.mrb[0].mxu0 %v3426
    %v3573 = vpop.f32.mrb[0].mxu0
    %v3574 = vadd.f32 %v3499, %v3573
    %v3575 = vpop.f32.mrb[0].mxu0
    %3576 = vmatprep.mubr.f32.mxu0 %v3431
    %3577 = vmatmul.mubr.f32.gmra.mrb[0].mxu0 %v3430
    %v3578 = vpop.f32.mrb[0].mxu0
    %v3579 = vadd.f32 %v3504, %v3578
    %v3580 = vpop.f32.mrb[0].mxu0
    %3581 = vdwg.mxu0
    %v3582 = vmul.f32 %v3574, 0.17677669
    %v3583 = vmul.f32 %v3579, 0.17677669
    %v3584 = vsel %vm991, %v3582, -inf
    %3585 = vmax.xlane.f32.xlu0 %v3584
    %v3586 = vpop.xlane.xlu0 %3585
    %v3587 = vsel %vm991, %v3583, -inf
    %3588 = vmax.xlane.f32.xlu0 %v3587
    %v3589 = vpop.xlane.xlu0 %3588
    %v3590 = vsub.f32 %v3582, %v3586
    %v3591 = vsub.f32 %v3583, %v3589
    %v3592 = vmul.f32 %v3590, 1.442695
    %v3593 = vpow.pop %v3592
    %v3594 = vmul.f32 %v3591, 1.442695
    %v3595 = vpow.pop %v3594
    %v3597 = vsel %vm991, %v3593, 0
    %v3600 = vsel %vm991, %v3595, 0
    %3602 = vmatprep.subr.mxu0 %v2312
    %3603 = vmatpush1.msra.mxu0 %v2311
    %3604 = vmatprep.subr.mxu0 %v2316
    %3605 = vmatpush1.msra.mxu0 %v2315
    %3606 = vmatprep.subr.mxu0 0.0
    %3607 = vmatpush1.msra.mxu0 0.0
    %3608 = vmatprep.subr.mxu0 0.0
    %3609 = vmatpush1.msra.mxu0 0.0
    %3610 = vmatprep.subr.mxu0 0.0
    %3611 = vmatpush1.msra.mxu0 0.0
    %3612 = vmatprep.subr.mxu0 0.0
    %3613 = vmatpush1.msra.mxu0 0.0
    %3614 = vmatprep.subr.mxu0 0.0
    %3615 = vmatpush1.msra.mxu0 0.0
    %3616 = vmatprep.subr.mxu0 0.0
    %3617 = vmatpush1.msra.mxu0 0.0
    %3618 = vmatprep.subr.mxu0 0.0
    %3619 = vmatpush1.msra.mxu0 0.0
    %3620 = vmatprep.subr.mxu0 0.0
    %3621 = vmatpush1.msra.mxu0 0.0
    %3622 = vmatprep.subr.mxu0 0.0
    %3623 = vmatpush1.msra.mxu0 0.0
    %3624 = vmatprep.subr.mxu0 0.0
    %3625 = vmatpush1.msra.mxu0 0.0
    %3626 = vmatprep.subr.mxu0 0.0
    %3627 = vmatpush1.msra.mxu0 0.0
    %3628 = vmatprep.subr.mxu0 0.0
    %3629 = vmatpush1.msra.mxu0 0.0
    %3630 = vmatprep.subr.mxu0 0.0
    %3631 = vmatpush1.msra.mxu0 0.0
    %3632 = vmatprep.subr.mxu0 0.0
    %3633 = vmatpush1.msra.mxu0 0.0
    %3634 = vmatprep.subr.mxu0 0.0
    %3635 = vmatpush1.msra.mxu0 0.0
    %3636 = vmatprep.subr.mxu0 0.0
    %3637 = vmatpush1.msra.mxu0 0.0
    %3638 = vmatprep.subr.mxu0 0.0
    %3639 = vmatpush1.msra.mxu0 0.0
    %3640 = vmatprep.subr.mxu0 0.0
    %3641 = vmatpush1.msra.mxu0 0.0
    %3642 = vmatprep.subr.mxu0 0.0
    %3643 = vmatpush1.msra.mxu0 0.0
    %3644 = vmatprep.subr.mxu0 0.0
    %3645 = vmatpush1.msra.mxu0 0.0
    %3646 = vmatprep.subr.mxu0 0.0
    %3647 = vmatpush1.msra.mxu0 0.0
    %3648 = vmatprep.subr.mxu0 0.0
    %3649 = vmatpush1.msra.mxu0 0.0
    %3650 = vmatprep.subr.mxu0 0.0
    %3651 = vmatpush1.msra.mxu0 0.0
    %3652 = vmatprep.subr.mxu0 0.0
    %3653 = vmatpush1.msra.mxu0 0.0
    %3654 = vmatprep.subr.mxu0 0.0
    %3655 = vmatpush1.msra.mxu0 0.0
    %3656 = vmatprep.subr.mxu0 0.0
    %3657 = vmatpush1.msra.mxu0 0.0
    %3658 = vmatprep.subr.mxu0 0.0
    %3659 = vmatpush1.msra.mxu0 0.0
    %3660 = vmatprep.subr.mxu0 0.0
    %3661 = vmatpush1.msra.mxu0 0.0
    %3662 = vmatprep.subr.mxu0 0.0
    %3663 = vmatpush1.msra.mxu0 0.0
    %3664 = vmatprep.subr.mxu0 0.0
    %3665 = vmatpush1.msra.mxu0 0.0
    %3666 = vmatprep.mubr.f32.mxu0 0.0
    %3667 = vmatmul.mubr.f32.gmra.mrb[0].mxu0 %v3597
    %v3668 = vpop.f32.mrb[0].mxu0
    %v3669 = vadd.f32 0.0, %v3668
    %v3670 = vpop.f32.mrb[0].mxu0
    %v3671 = vadd.f32 0.0, %v3670
    %3672 = vmatprep.mubr.f32.mxu0 0.0
    %3673 = vmatmul.mubr.f32.gmra.mrb[0].mxu0 %v3600
    %v3674 = vpop.f32.mrb[0].mxu0
    %v3675 = vadd.f32 0.0, %v3674
    %v3676 = vpop.f32.mrb[0].mxu0
    %v3677 = vadd.f32 0.0, %v3676
    %3678 = vdwg.mxu0
    %3679 = vmatprep.subr.mxu0 %v2314
    %3680 = vmatpush1.msra.mxu0 %v2313
    %3681 = vmatprep.subr.mxu0 %v2318
    %3682 = vmatpush1.msra.mxu0 %v2317
    %3683 = vmatprep.subr.mxu0 0.0
    %3684 = vmatpush1.msra.mxu0 0.0
    %3685 = vmatprep.subr.mxu0 0.0
    %3686 = vmatpush1.msra.mxu0 0.0
    %3687 = vmatprep.subr.mxu0 0.0
    %3688 = vmatpush1.msra.mxu0 0.0
    %3689 = vmatprep.subr.mxu0 0.0
    %3690 = vmatpush1.msra.mxu0 0.0
    %3691 = vmatprep.subr.mxu0 0.0
    %3692 = vmatpush1.msra.mxu0 0.0
    %3693 = vmatprep.subr.mxu0 0.0
    %3694 = vmatpush1.msra.mxu0 0.0
    %3695 = vmatprep.subr.mxu0 0.0
    %3696 = vmatpush1.msra.mxu0 0.0
    %3697 = vmatprep.subr.mxu0 0.0
    %3698 = vmatpush1.msra.mxu0 0.0
    %3699 = vmatprep.subr.mxu0 0.0
    %3700 = vmatpush1.msra.mxu0 0.0
    %3701 = vmatprep.subr.mxu0 0.0
    %3702 = vmatpush1.msra.mxu0 0.0
    %3703 = vmatprep.subr.mxu0 0.0
    %3704 = vmatpush1.msra.mxu0 0.0
    %3705 = vmatprep.subr.mxu0 0.0
    %3706 = vmatpush1.msra.mxu0 0.0
    %3707 = vmatprep.subr.mxu0 0.0
    %3708 = vmatpush1.msra.mxu0 0.0
    %3709 = vmatprep.subr.mxu0 0.0
    %3710 = vmatpush1.msra.mxu0 0.0
    %3711 = vmatprep.subr.mxu0 0.0
    %3712 = vmatpush1.msra.mxu0 0.0
    %3713 = vmatprep.subr.mxu0 0.0
    %3714 = vmatpush1.msra.mxu0 0.0
    %3715 = vmatprep.subr.mxu0 0.0
    %3716 = vmatpush1.msra.mxu0 0.0
    %3717 = vmatprep.subr.mxu0 0.0
    %3718 = vmatpush1.msra.mxu0 0.0
    %3719 = vmatprep.subr.mxu0 0.0
    %3720 = vmatpush1.msra.mxu0 0.0
    %3721 = vmatprep.subr.mxu0 0.0
    %3722 = vmatpush1.msra.mxu0 0.0
    %3723 = vmatprep.subr.mxu0 0.0
    %3724 = vmatpush1.msra.mxu0 0.0
    %3725 = vmatprep.subr.mxu0 0.0
    %3726 = vmatpush1.msra.mxu0 0.0
    %3727 = vmatprep.subr.mxu0 0.0
    %3728 = vmatpush1.msra.mxu0 0.0
    %3729 = vmatprep.subr.mxu0 0.0
    %3730 = vmatpush1.msra.mxu0 0.0
    %3731 = vmatprep.subr.mxu0 0.0
    %3732 = vmatpush1.msra.mxu0 0.0
    %3733 = vmatprep.subr.mxu0 0.0
    %3734 = vmatpush1.msra.mxu0 0.0
    %3735 = vmatprep.subr.mxu0 0.0
    %3736 = vmatpush1.msra.mxu0 0.0
    %3737 = vmatprep.subr.mxu0 0.0
    %3738 = vmatpush1.msra.mxu0 0.0
    %3739 = vmatprep.subr.mxu0 0.0
    %3740 = vmatpush1.msra.mxu0 0.0
    %3741 = vmatprep.subr.mxu0 0.0
    %3742 = vmatpush1.msra.mxu0 0.0
    %3743 = vmatprep.mubr.f32.mxu0 0.0
    %3744 = vmatmul.mubr.f32.gmra.mrb[0].mxu0 %v3597
    %v3745 = vpop.f32.mrb[0].mxu0
    %v3746 = vadd.f32 0.0, %v3745
    %v3747 = vpop.f32.mrb[0].mxu0
    %v3748 = vadd.f32 0.0, %v3747
    %3749 = vmatprep.mubr.f32.mxu0 0.0
    %3750 = vmatmul.mubr.f32.gmra.mrb[0].mxu0 %v3600
    %v3751 = vpop.f32.mrb[0].mxu0
    %v3752 = vadd.f32 0.0, %v3751
    %v3753 = vpop.f32.mrb[0].mxu0
    %v3754 = vadd.f32 0.0, %v3753
    %3755 = vdwg.mxu0
    %v3756 = vmul.f32 %v3669, %v1988
    %v3757 = vmul.f32 %v3671, %v1990
    %v3758 = vmul.f32 %v3746, %v2065
    %v3759 = vmul.f32 %v3748, %v2067
    %v3760 = vmul.f32 %v3675, %v1994
    %v3761 = vmul.f32 %v3677, %v1996
    %v3762 = vmul.f32 %v3752, %v2071
    %v3763 = vmul.f32 %v3754, %v2073
    %v3764 = vadd.f32 %v3756, %v3757
    %v3765 = vadd.f32 %v3760, %v3761
    %v3766 = vadd.f32 %v3764, %v3758
    %v3767 = vadd.f32 %v3765, %v3762
    %v3768 = vadd.f32 %v3766, %v3759
    %v3769 = vadd.f32 %v3767, %v3763
    %3770 = vmatprep.subr.mxu0 0.0
    %3771 = vmatpush1.msra.mxu0 %v2493
    %3772 = vmatprep.subr.mxu0 0.0
    %3773 = vmatpush1.msra.mxu0 %v2494
    %3774 = vmatprep.subr.mxu0 0.0
    %3775 = vmatpush1.msra.mxu0 0.0
    %3776 = vmatprep.subr.mxu0 0.0
    %3777 = vmatpush1.msra.mxu0 0.0
    %3778 = vmatprep.subr.mxu0 0.0
    %3779 = vmatpush1.msra.mxu0 0.0
    %3780 = vmatprep.subr.mxu0 0.0
    %3781 = vmatpush1.msra.mxu0 0.0
    %3782 = vmatprep.subr.mxu0 0.0
    %3783 = vmatpush1.msra.mxu0 0.0
    %3784 = vmatprep.subr.mxu0 0.0
    %3785 = vmatpush1.msra.mxu0 0.0
    %3786 = vmatprep.subr.mxu0 0.0
    %3787 = vmatpush1.msra.mxu0 0.0
    %3788 = vmatprep.subr.mxu0 0.0
    %3789 = vmatpush1.msra.mxu0 0.0
    %3790 = vmatprep.subr.mxu0 0.0
    %3791 = vmatpush1.msra.mxu0 0.0
    %3792 = vmatprep.subr.mxu0 0.0
    %3793 = vmatpush1.msra.mxu0 0.0
    %3794 = vmatprep.subr.mxu0 0.0
    %3795 = vmatpush1.msra.mxu0 0.0
    %3796 = vmatprep.subr.mxu0 0.0
    %3797 = vmatpush1.msra.mxu0 0.0
    %3798 = vmatprep.subr.mxu0 0.0
    %3799 = vmatpush1.msra.mxu0 0.0
    %3800 = vmatprep.subr.mxu0 0.0
    %3801 = vmatpush1.msra.mxu0 0.0
    %3802 = vmatprep.subr.mxu0 0.0
    %3803 = vmatpush1.msra.mxu0 0.0
    %3804 = vmatprep.subr.mxu0 0.0
    %3805 = vmatpush1.msra.mxu0 0.0
    %3806 = vmatprep.subr.mxu0 0.0
    %3807 = vmatpush1.msra.mxu0 0.0
    %3808 = vmatprep.subr.mxu0 0.0
    %3809 = vmatpush1.msra.mxu0 0.0
    %3810 = vmatprep.subr.mxu0 0.0
    %3811 = vmatpush1.msra.mxu0 0.0
    %3812 = vmatprep.subr.mxu0 0.0
    %3813 = vmatpush1.msra.mxu0 0.0
    %3814 = vmatprep.subr.mxu0 0.0
    %3815 = vmatpush1.msra.mxu0 0.0
    %3816 = vmatprep.subr.mxu0 0.0
    %3817 = vmatpush1.msra.mxu0 0.0
    %3818 = vmatprep.subr.mxu0 0.0
    %3819 = vmatpush1.msra.mxu0 0.0
    %3820 = vmatprep.subr.mxu0 0.0
    %3821 = vmatpush1.msra.mxu0 0.0
    %3822 = vmatprep.subr.mxu0 0.0
    %3823 = vmatpush1.msra.mxu0 0.0
    %3824 = vmatprep.subr.mxu0 0.0
    %3825 = vmatpush1.msra.mxu0 0.0
    %3826 = vmatprep.subr.mxu0 0.0
    %3827 = vmatpush1.msra.mxu0 0.0
    %3828 = vmatprep.subr.mxu0 0.0
    %3829 = vmatpush1.msra.mxu0 0.0
    %3830 = vmatprep.subr.mxu0 0.0
    %3831 = vmatpush1.msra.mxu0 0.0
    %3832 = vmatprep.subr.mxu0 0.0
    %3833 = vmatpush1.msra.mxu0 0.0
    %3834 = vmatprep.mubr.f32.mxu0 0.0
    %3835 = vmatmul.mubr.f32.gmra.mrb[0].mxu0 %v3597
    %v3836 = vpop.f32.mrb[0].mxu0
    %v3837 = vadd.f32 0.0, %v3836
    %v3838 = vpop.f32.mrb[0].mxu0
    %3839 = vmatprep.mubr.f32.mxu0 0.0
    %3840 = vmatmul.mubr.f32.gmra.mrb[0].mxu0 %v3600
    %v3841 = vpop.f32.mrb[0].mxu0
    %v3842 = vadd.f32 0.0, %v3841
    %v3843 = vpop.f32.mrb[0].mxu0
    %3844 = vdwg.mxu0
    %v3845 = vrcp.pop %v3837
    %v3846 = vmul.f32 %v3768, %v3845
    %v3847 = vrcp.pop %v3842
    %v3848 = vmul.f32 %v3769, %v3847
    %v3849 = vld [vmem:[#allocation7] sm:$0xff]
    %v3850 = vld [vmem:[#allocation7 + $0x8] sm:$0xff]
    %v3851 = vld [vmem:[#allocation7 + $0x10] sm:$0xff]
    %v3852 = vld [vmem:[#allocation7 + $0x18] sm:$0xff]
    %v3853 = vld [vmem:[#allocation7 + $0x20] sm:$0xff]
    %v3854 = vld [vmem:[#allocation7 + $0x28] sm:$0xff]
    %v3855 = vld [vmem:[#allocation7 + $0x30] sm:$0xff]
    %v3856 = vld [vmem:[#allocation7 + $0x38] sm:$0xff]
    %v3857 = vld [vmem:[#allocation7 + $0x40] sm:$0xff]
    %v3858 = vld [vmem:[#allocation7 + $0x48] sm:$0xff]
    %v3859 = vld [vmem:[#allocation7 + $0x50] sm:$0xff]
    %v3860 = vld [vmem:[#allocation7 + $0x58] sm:$0xff]
    %v3861 = vld [vmem:[#allocation7 + $0x60] sm:$0xff]
    %v3862 = vld [vmem:[#allocation7 + $0x68] sm:$0xff]
    %v3863 = vld [vmem:[#allocation7 + $0x70] sm:$0xff]
    %v3864 = vld [vmem:[#allocation7 + $0x78] sm:$0xff]
    %v3865 = vld [vmem:[#allocation7 + $0x80] sm:$0xff]
    %v3866 = vld [vmem:[#allocation7 + $0x88] sm:$0xff]
    %v3867 = vld [vmem:[#allocation7 + $0x90] sm:$0xff]
    %v3868 = vld [vmem:[#allocation7 + $0x98] sm:$0xff]
    %v3869 = vld [vmem:[#allocation7 + $0xa0] sm:$0xff]
    %v3870 = vld [vmem:[#allocation7 + $0xa8] sm:$0xff]
    %v3871 = vld [vmem:[#allocation7 + $0xb0] sm:$0xff]
    %v3872 = vld [vmem:[#allocation7 + $0xb8] sm:$0xff]
    %v3873 = vld [vmem:[#allocation7 + $0xc0] sm:$0xff]
    %v3874 = vld [vmem:[#allocation7 + $0xc8] sm:$0xff]
    %v3875 = vld [vmem:[#allocation7 + $0xd0] sm:$0xff]
    %v3876 = vld [vmem:[#allocation7 + $0xd8] sm:$0xff]
    %v3877 = vld [vmem:[#allocation7 + $0xe0] sm:$0xff]
    %v3878 = vld [vmem:[#allocation7 + $0xe8] sm:$0xff]
    %v3879 = vld [vmem:[#allocation7 + $0xf0] sm:$0xff]
    %v3880 = vld [vmem:[#allocation7 + $0xf8] sm:$0xff]
    %v3881 = vld [vmem:[#allocation7 + $0x100] sm:$0xff]
    %v3882 = vld [vmem:[#allocation7 + $0x108] sm:$0xff]
    %v3883 = vld [vmem:[#allocation7 + $0x110] sm:$0xff]
    %v3884 = vld [vmem:[#allocation7 + $0x118] sm:$0xff]
    %v3885 = vld [vmem:[#allocation7 + $0x120] sm:$0xff]
    %v3886 = vld [vmem:[#allocation7 + $0x128] sm:$0xff]
    %v3887 = vld [vmem:[#allocation7 + $0x130] sm:$0xff]
    %v3888 = vld [vmem:[#allocation7 + $0x138] sm:$0xff]
    %v3889 = vld [vmem:[#allocation7 + $0x140] sm:$0xff]
    %v3890 = vld [vmem:[#allocation7 + $0x148] sm:$0xff]
    %v3891 = vld [vmem:[#allocation7 + $0x150] sm:$0xff]
    %v3892 = vld [vmem:[#allocation7 + $0x158] sm:$0xff]
    %v3893 = vld [vmem:[#allocation7 + $0x160] sm:$0xff]
    %v3894 = vld [vmem:[#allocation7 + $0x168] sm:$0xff]
    %v3895 = vld [vmem:[#allocation7 + $0x170] sm:$0xff]
    %v3896 = vld [vmem:[#allocation7 + $0x178] sm:$0xff]
    %v3897 = vld [vmem:[#allocation7 + $0x180] sm:$0xff]
    %v3898 = vld [vmem:[#allocation7 + $0x188] sm:$0xff]
    %v3899 = vld [vmem:[#allocation7 + $0x190] sm:$0xff]
    %v3900 = vld [vmem:[#allocation7 + $0x198] sm:$0xff]
    %v3901 = vld [vmem:[#allocation7 + $0x1a0] sm:$0xff]
    %v3902 = vld [vmem:[#allocation7 + $0x1a8] sm:$0xff]
    %v3903 = vld [vmem:[#allocation7 + $0x1b0] sm:$0xff]
    %v3904 = vld [vmem:[#allocation7 + $0x1b8] sm:$0xff]
    %v3905 = vld [vmem:[#allocation7 + $0x1c0] sm:$0xff]
    %v3906 = vld [vmem:[#allocation7 + $0x1c8] sm:$0xff]
    %v3907 = vld [vmem:[#allocation7 + $0x1d0] sm:$0xff]
    %v3908 = vld [vmem:[#allocation7 + $0x1d8] sm:$0xff]
    %v3909 = vld [vmem:[#allocation7 + $0x1e0] sm:$0xff]
    %v3910 = vld [vmem:[#allocation7 + $0x1e8] sm:$0xff]
    %v3911 = vld [vmem:[#allocation7 + $0x1f0] sm:$0xff]
    %v3912 = vld [vmem:[#allocation7 + $0x1f8] sm:$0xff]
    %v3913 = vld [vmem:[#allocation7 + $0x200] sm:$0xff]
    %v3914 = vld [vmem:[#allocation7 + $0x208] sm:$0xff]
    %v3915 = vld [vmem:[#allocation7 + $0x210] sm:$0xff]
    %v3916 = vld [vmem:[#allocation7 + $0x218] sm:$0xff]
    %v3917 = vld [vmem:[#allocation7 + $0x220] sm:$0xff]
    %v3918 = vld [vmem:[#allocation7 + $0x228] sm:$0xff]
    %v3919 = vld [vmem:[#allocation7 + $0x230] sm:$0xff]
    %v3920 = vld [vmem:[#allocation7 + $0x238] sm:$0xff]
    %v3921 = vld [vmem:[#allocation7 + $0x240] sm:$0xff]
    %v3922 = vld [vmem:[#allocation7 + $0x248] sm:$0xff]
    %v3923 = vld [vmem:[#allocation7 + $0x250] sm:$0xff]
    %v3924 = vld [vmem:[#allocation7 + $0x258] sm:$0xff]
    %v3925 = vld [vmem:[#allocation7 + $0x260] sm:$0xff]
    %v3926 = vld [vmem:[#allocation7 + $0x268] sm:$0xff]
    %v3927 = vld [vmem:[#allocation7 + $0x270] sm:$0xff]
    %v3928 = vld [vmem:[#allocation7 + $0x278] sm:$0xff]
    %v3929 = vld [vmem:[#allocation7 + $0x280] sm:$0xff]
    %v3930 = vld [vmem:[#allocation7 + $0x288] sm:$0xff]
    %v3931 = vld [vmem:[#allocation7 + $0x290] sm:$0xff]
    %v3932 = vld [vmem:[#allocation7 + $0x298] sm:$0xff]
    %v3933 = vld [vmem:[#allocation7 + $0x2a0] sm:$0xff]
    %v3934 = vld [vmem:[#allocation7 + $0x2a8] sm:$0xff]
    %v3935 = vld [vmem:[#allocation7 + $0x2b0] sm:$0xff]
    %v3936 = vld [vmem:[#allocation7 + $0x2b8] sm:$0xff]
    %v3937 = vld [vmem:[#allocation7 + $0x2c0] sm:$0xff]
    %v3938 = vld [vmem:[#allocation7 + $0x2c8] sm:$0xff]
    %v3939 = vld [vmem:[#allocation7 + $0x2d0] sm:$0xff]
    %v3940 = vld [vmem:[#allocation7 + $0x2d8] sm:$0xff]
    %v3941 = vld [vmem:[#allocation7 + $0x2e0] sm:$0xff]
    %v3942 = vld [vmem:[#allocation7 + $0x2e8] sm:$0xff]
    %v3943 = vld [vmem:[#allocation7 + $0x2f0] sm:$0xff]
    %v3944 = vld [vmem:[#allocation7 + $0x2f8] sm:$0xff]
    %v3945 = vld [vmem:[#allocation7 + $0x300] sm:$0xff]
    %v3946 = vld [vmem:[#allocation7 + $0x308] sm:$0xff]
    %v3947 = vld [vmem:[#allocation7 + $0x310] sm:$0xff]
    %v3948 = vld [vmem:[#allocation7 + $0x318] sm:$0xff]
    %v3949 = vld [vmem:[#allocation7 + $0x320] sm:$0xff]
    %v3950 = vld [vmem:[#allocation7 + $0x328] sm:$0xff]
    %v3951 = vld [vmem:[#allocation7 + $0x330] sm:$0xff]
    %v3952 = vld [vmem:[#allocation7 + $0x338] sm:$0xff]
    %v3953 = vld [vmem:[#allocation7 + $0x340] sm:$0xff]
    %v3954 = vld [vmem:[#allocation7 + $0x348] sm:$0xff]
    %v3955 = vld [vmem:[#allocation7 + $0x350] sm:$0xff]
    %v3956 = vld [vmem:[#allocation7 + $0x358] sm:$0xff]
    %v3957 = vld [vmem:[#allocation7 + $0x360] sm:$0xff]
    %v3958 = vld [vmem:[#allocation7 + $0x368] sm:$0xff]
    %v3959 = vld [vmem:[#allocation7 + $0x370] sm:$0xff]
    %v3960 = vld [vmem:[#allocation7 + $0x378] sm:$0xff]
    %v3961 = vld [vmem:[#allocation7 + $0x380] sm:$0xff]
    %v3962 = vld [vmem:[#allocation7 + $0x388] sm:$0xff]
    %v3963 = vld [vmem:[#allocation7 + $0x390] sm:$0xff]
    %v3964 = vld [vmem:[#allocation7 + $0x398] sm:$0xff]
    %v3965 = vld [vmem:[#allocation7 + $0x3a0] sm:$0xff]
    %v3966 = vld [vmem:[#allocation7 + $0x3a8] sm:$0xff]
    %v3967 = vld [vmem:[#allocation7 + $0x3b0] sm:$0xff]
    %v3968 = vld [vmem:[#allocation7 + $0x3b8] sm:$0xff]
    %v3969 = vld [vmem:[#allocation7 + $0x3c0] sm:$0xff]
    %v3970 = vld [vmem:[#allocation7 + $0x3c8] sm:$0xff]
    %v3971 = vld [vmem:[#allocation7 + $0x3d0] sm:$0xff]
    %v3972 = vld [vmem:[#allocation7 + $0x3d8] sm:$0xff]
    %v3973 = vld [vmem:[#allocation7 + $0x3e0] sm:$0xff]
    %v3974 = vld [vmem:[#allocation7 + $0x3e8] sm:$0xff]
    %v3975 = vld [vmem:[#allocation7 + $0x3f0] sm:$0xff]
    %v3976 = vld [vmem:[#allocation7 + $0x3f8] sm:$0xff]
    %v3977 = vld [vmem:[%s22] sm:$0x3]
    %v3979 = vlaneseq
    %v3980 = vshrl.u32 %v3979, 7
    %v3981 = vsub.s32 0, %v3980
    %v3982 = vrot.slane %v3977, %v3981
    %v3983 = vlaneseq
    %v3984 = vshrl.u32 %v3983, 7
    %v3985 = vsub.s32 1, %v3984
    %v3986 = vrot.slane %v3977, %v3985
    %3989 = vmatprep.subr.mxu0 %v3850
    %3990 = vmatpush1.msra.mxu0 %v3849
    %3991 = vmatprep.subr.mxu0 %v3852
    %3992 = vmatpush1.msra.mxu0 %v3851
    %3993 = vmatprep.subr.mxu0 %v3854
    %3994 = vmatpush1.msra.mxu0 %v3853
    %3995 = vmatprep.subr.mxu0 %v3856
    %3996 = vmatpush1.msra.mxu0 %v3855
    %3997 = vmatprep.subr.mxu0 %v3858
    %3998 = vmatpush1.msra.mxu0 %v3857
    %3999 = vmatprep.subr.mxu0 %v3860
    %4000 = vmatpush1.msra.mxu0 %v3859
    %4001 = vmatprep.subr.mxu0 %v3862
    %4002 = vmatpush1.msra.mxu0 %v3861
    %4003 = vmatprep.subr.mxu0 %v3864
    %4004 = vmatpush1.msra.mxu0 %v3863
    %4005 = vmatprep.subr.mxu0 %v3866
    %4006 = vmatpush1.msra.mxu0 %v3865
    %4007 = vmatprep.subr.mxu0 %v3868
    %4008 = vmatpush1.msra.mxu0 %v3867
    %4009 = vmatprep.subr.mxu0 %v3870
    %4010 = vmatpush1.msra.mxu0 %v3869
    %4011 = vmatprep.subr.mxu0 %v3872
    %4012 = vmatpush1.msra.mxu0 %v3871
    %4013 = vmatprep.subr.mxu0 %v3874
    %4014 = vmatpush1.msra.mxu0 %v3873
    %4015 = vmatprep.subr.mxu0 %v3876
    %4016 = vmatpush1.msra.mxu0 %v3875
    %4017 = vmatprep.subr.mxu0 %v3878
    %4018 = vmatpush1.msra.mxu0 %v3877
    %4019 = vmatprep.subr.mxu0 %v3880
    %4020 = vmatpush1.msra.mxu0 %v3879
    %4021 = vmatprep.subr.mxu0 %v3882
    %4022 = vmatpush1.msra.mxu0 %v3881
    %4023 = vmatprep.subr.mxu0 %v3884
    %4024 = vmatpush1.msra.mxu0 %v3883
    %4025 = vmatprep.subr.mxu0 %v3886
    %4026 = vmatpush1.msra.mxu0 %v3885
    %4027 = vmatprep.subr.mxu0 %v3888
    %4028 = vmatpush1.msra.mxu0 %v3887
    %4029 = vmatprep.subr.mxu0 %v3890
    %4030 = vmatpush1.msra.mxu0 %v3889
    %4031 = vmatprep.subr.mxu0 %v3892
    %4032 = vmatpush1.msra.mxu0 %v3891
    %4033 = vmatprep.subr.mxu0 %v3894
    %4034 = vmatpush1.msra.mxu0 %v3893
    %4035 = vmatprep.subr.mxu0 %v3896
    %4036 = vmatpush1.msra.mxu0 %v3895
    %4037 = vmatprep.subr.mxu0 %v3898
    %4038 = vmatpush1.msra.mxu0 %v3897
    %4039 = vmatprep.subr.mxu0 %v3900
    %4040 = vmatpush1.msra.mxu0 %v3899
    %4041 = vmatprep.subr.mxu0 %v3902
    %4042 = vmatpush1.msra.mxu0 %v3901
    %4043 = vmatprep.subr.mxu0 %v3904
    %4044 = vmatpush1.msra.mxu0 %v3903
    %4045 = vmatprep.subr.mxu0 %v3906
    %4046 = vmatpush1.msra.mxu0 %v3905
    %4047 = vmatprep.subr.mxu0 %v3908
    %4048 = vmatpush1.msra.mxu0 %v3907
    %4049 = vmatprep.subr.mxu0 %v3910
    %4050 = vmatpush1.msra.mxu0 %v3909
    %4051 = vmatprep.subr.mxu0 %v3912
    %4052 = vmatpush1.msra.mxu0 %v3911
    %4053 = vmatprep.mubr.f32.mxu0 %v2996
    %4054 = vmatmul.mubr.f32.gmra.mrb[0].mxu0 %v2571
    %v4055 = vpop.f32.mrb[0].mxu0
    %v4056 = vadd.f32 %v3982, %v4055
    %v4057 = vpop.f32.mrb[0].mxu0
    %v4058 = vadd.f32 %v3986, %v4057
    %4059 = vmatprep.mubr.f32.mxu0 %v2998
    %4060 = vmatmul.mubr.f32.gmra.mrb[0].mxu0 %v2573
    %v4061 = vpop.f32.mrb[0].mxu0
    %v4062 = vadd.f32 %v3982, %v4061
    %v4063 = vpop.f32.mrb[0].mxu0
    %v4064 = vadd.f32 %v3986, %v4063
    %4065 = vdwg.mxu0
    %4066 = vmatprep.subr.mxu0 %v3914
    %4067 = vmatpush1.msra.mxu0 %v3913
    %4068 = vmatprep.subr.mxu0 %v3916
    %4069 = vmatpush1.msra.mxu0 %v3915
    %4070 = vmatprep.subr.mxu0 %v3918
    %4071 = vmatpush1.msra.mxu0 %v3917
    %4072 = vmatprep.subr.mxu0 %v3920
    %4073 = vmatpush1.msra.mxu0 %v3919
    %4074 = vmatprep.subr.mxu0 %v3922
    %4075 = vmatpush1.msra.mxu0 %v3921
    %4076 = vmatprep.subr.mxu0 %v3924
    %4077 = vmatpush1.msra.mxu0 %v3923
    %4078 = vmatprep.subr.mxu0 %v3926
    %4079 = vmatpush1.msra.mxu0 %v3925
    %4080 = vmatprep.subr.mxu0 %v3928
    %4081 = vmatpush1.msra.mxu0 %v3927
    %4082 = vmatprep.subr.mxu0 %v3930
    %4083 = vmatpush1.msra.mxu0 %v3929
    %4084 = vmatprep.subr.mxu0 %v3932
    %4085 = vmatpush1.msra.mxu0 %v3931
    %4086 = vmatprep.subr.mxu0 %v3934
    %4087 = vmatpush1.msra.mxu0 %v3933
    %4088 = vmatprep.subr.mxu0 %v3936
    %4089 = vmatpush1.msra.mxu0 %v3935
    %4090 = vmatprep.subr.mxu0 %v3938
    %4091 = vmatpush1.msra.mxu0 %v3937
    %4092 = vmatprep.subr.mxu0 %v3940
    %4093 = vmatpush1.msra.mxu0 %v3939
    %4094 = vmatprep.subr.mxu0 %v3942
    %4095 = vmatpush1.msra.mxu0 %v3941
    %4096 = vmatprep.subr.mxu0 %v3944
    %4097 = vmatpush1.msra.mxu0 %v3943
    %4098 = vmatprep.subr.mxu0 %v3946
    %4099 = vmatpush1.msra.mxu0 %v3945
    %4100 = vmatprep.subr.mxu0 %v3948
    %4101 = vmatpush1.msra.mxu0 %v3947
    %4102 = vmatprep.subr.mxu0 %v3950
    %4103 = vmatpush1.msra.mxu0 %v3949
    %4104 = vmatprep.subr.mxu0 %v3952
    %4105 = vmatpush1.msra.mxu0 %v3951
    %4106 = vmatprep.subr.mxu0 %v3954
    %4107 = vmatpush1.msra.mxu0 %v3953
    %4108 = vmatprep.subr.mxu0 %v3956
    %4109 = vmatpush1.msra.mxu0 %v3955
    %4110 = vmatprep.subr.mxu0 %v3958
    %4111 = vmatpush1.msra.mxu0 %v3957
    %4112 = vmatprep.subr.mxu0 %v3960
    %4113 = vmatpush1.msra.mxu0 %v3959
    %4114 = vmatprep.subr.mxu0 %v3962
    %4115 = vmatpush1.msra.mxu0 %v3961
    %4116 = vmatprep.subr.mxu0 %v3964
    %4117 = vmatpush1.msra.mxu0 %v3963
    %4118 = vmatprep.subr.mxu0 %v3966
    %4119 = vmatpush1.msra.mxu0 %v3965
    %4120 = vmatprep.subr.mxu0 %v3968
    %4121 = vmatpush1.msra.mxu0 %v3967
    %4122 = vmatprep.subr.mxu0 %v3970
    %4123 = vmatpush1.msra.mxu0 %v3969
    %4124 = vmatprep.subr.mxu0 %v3972
    %4125 = vmatpush1.msra.mxu0 %v3971
    %4126 = vmatprep.subr.mxu0 %v3974
    %4127 = vmatpush1.msra.mxu0 %v3973
    %4128 = vmatprep.subr.mxu0 %v3976
    %4129 = vmatpush1.msra.mxu0 %v3975
    %4130 = vmatprep.mubr.f32.mxu0 %v3846
    %4131 = vmatmul.mubr.f32.gmra.mrb[0].mxu0 %v3421
    %v4132 = vpop.f32.mrb[0].mxu0
    %v4133 = vadd.f32 %v4056, %v4132
    %v4134 = vpop.f32.mrb[0].mxu0
    %v4135 = vadd.f32 %v4058, %v4134
    %4136 = vmatprep.mubr.f32.mxu0 %v3848
    %4137 = vmatmul.mubr.f32.gmra.mrb[0].mxu0 %v3423
    %v4138 = vpop.f32.mrb[0].mxu0
    %v4139 = vadd.f32 %v4062, %v4138
    %v4140 = vpop.f32.mrb[0].mxu0
    %v4141 = vadd.f32 %v4064, %v4140
    %4142 = vdwg.mxu0
    %v4143 = vxor.u32 %v4135, 2147483648
    %v4144 = vxor.u32 %v4141, 2147483648
    %v4145 = vmul.f32 %v4143, 1.442695
    %v4146 = vpow.pop %v4145
    %v4147 = vmul.f32 %v4144, 1.442695
    %v4148 = vpow.pop %v4147
    %v4149 = vadd.f32 %v4146, 1.0
    %v4150 = vadd.f32 %v4148, 1.0
    %v4151 = vrcp.pop %v4149
    %v4152 = vmul.f32 1.0, %v4151
    %v4153 = vrcp.pop %v4150
    %v4154 = vmul.f32 1.0, %v4153
    %v4155 = vtanh.pop %v4133
    %v4156 = vtanh.pop %v4139
    %v4157 = vmul.f32 %v4152, %v4155
    %v4158 = vmul.f32 %v4154, %v4156
    %v4159 = vadd.f32 %v1419, %v4157
    %v4160 = vadd.f32 %v1420, %v4158
    %v4161 = vmul.f32 %v1077, %v4159
    %v4162 = vmul.f32 %v1078, %v4160
    %v4163 = vsub.f32 1.0, %v1077
    %v4164 = vsub.f32 1.0, %v1078
    %v4165 = vmul.f32 %v4163, %v122
    %v4166 = vmul.f32 %v4164, %v123
    %v4167 = vadd.f32 %v4161, %v4165
    %v4168 = vadd.f32 %v4162, %v4166
    %4169 = vst [vmem:[#allocation8] sm:$0xff] %v4167
    %4170 = vst [vmem:[#allocation8 + $0x8] sm:$0xff] %v4168
    %v4171 = vmul.f32 %v1077, %v1419
    %v4172 = vmul.f32 %v1078, %v1420
    %v4173 = vmul.f32 %v4163, %v124
    %v4174 = vmul.f32 %v4164, %v125
    %v4175 = vadd.f32 %v4171, %v4173
    %v4176 = vadd.f32 %v4172, %v4174
    %4177 = vst [vmem:[#allocation9] sm:$0xff] %v4175
    %4178 = vst [vmem:[#allocation9 + $0x8] sm:$0xff] %v4176
    %4179 = vst [vmem:[#allocation11] sm:$0xff] %v1077
    %4180 = vst [vmem:[#allocation11 + $0x8] sm:$0xff] %v1078
    // Predicated region
    $region106: #{blocks_core_forward.1} parent=1 // pred_check
      _
    $region107: #{blocks_core_forward.1} parent=1 // pred_check_branch
      %4182 = sbr.rel (0) target = $region109
    $region108: #{blocks_core_forward.1} parent=1 // pred_region
      %s4184 = ssub.s32 256, 256
      %4185 = vsyncadd [#allocation4], %s4184
      %s4186 = sshll.u32 [#allocation8], 4
      %s4187 = int_to_ptr.vmem [resolvable:$true] %s4186
      %4192 = dma.vmem_to_hbm [thread:$0]  %s4187, 256, %s23, [#allocation4], 128, 128, 8
    $region109: #{blocks_core_forward.1} parent=1 // pred_fallthru
      _
    // Predicated region
    $region110: #{blocks_core_forward.1} parent=1 // pred_check
      _
    $region111: #{blocks_core_forward.1} parent=1 // pred_check_branch
      %4194 = sbr.rel (0) target = $region113
    $region112: #{blocks_core_forward.1} parent=1 // pred_region
      %s4196 = ssub.s32 256, 256
      %4197 = vsyncadd [#allocation10], %s4196
      %s4198 = sshll.u32 [#allocation9], 4
      %s4199 = int_to_ptr.vmem [resolvable:$true] %s4198
      %4204 = dma.vmem_to_hbm [thread:$0]  %s4199, 256, %s24, [#allocation10], 128, 128, 8
    $region113: #{blocks_core_forward.1} parent=1 // pred_fallthru
      _
    // Predicated region
    $region114: #{blocks_core_forward.1} parent=1 // pred_check
      _
    $region115: #{blocks_core_forward.1} parent=1 // pred_check_branch
      %4206 = sbr.rel (0) target = $region117
    $region116: #{blocks_core_forward.1} parent=1 // pred_region
      %s4208 = ssub.s32 256, 256
      %4209 = vsyncadd [#allocation10], %s4208
      %s4210 = sshll.u32 [#allocation11], 4
      %s4211 = int_to_ptr.vmem [resolvable:$true] %s4210
      %4216 = dma.vmem_to_hbm [thread:$0]  %s4211, 256, %s25, [#allocation10], 128, 128, 8
    $region117: #{blocks_core_forward.1} parent=1 // pred_fallthru
      _
    // Predicated region
    $region118: #{blocks_core_forward.1} parent=1 // pred_check
      _
    $region119: #{blocks_core_forward.1} parent=1 // pred_check_branch
      %4218 = sbr.rel (0) target = $region121
    $region120: #{blocks_core_forward.1} parent=1 // pred_region
      %4219 = dma.done [#allocation4], 256
    $region121: #{blocks_core_forward.1} parent=1 // pred_fallthru
      _
    // Predicated region
    $region122: #{blocks_core_forward.1} parent=1 // pred_check
      _
    $region123: #{blocks_core_forward.1} parent=1 // pred_check_branch
      %4221 = sbr.rel (0) target = $region125
    $region124: #{blocks_core_forward.1} parent=1 // pred_region
      %4222 = dma.done [#allocation10], 256
    $region125: #{blocks_core_forward.1} parent=1 // pred_fallthru
      _
    // Predicated region
    $region126: #{blocks_core_forward.1} parent=1 // pred_check
      _
    $region127: #{blocks_core_forward.1} parent=1 // pred_check_branch
      %4224 = sbr.rel (0) target = $region129
    $region128: #{blocks_core_forward.1} parent=1 // pred_region
      %4225 = dma.done [#allocation10], 256
    $region129: #{blocks_core_forward.1} parent=1 // pred_fallthru
      _
    %4226 = vsyncpa [#allocation3], 1
    %4227 = vsyncpa [#allocation6], 1
    %4228 = vsyncpa [#allocation4], 1
    %4229 = vsyncpa [#allocation10], 1

</llo_original>
